<compile_context>
chip_gen: v6e
topology: v6e:2x2x1
jax: 0.10.0
libtpu: 0.0.40
codegen_flags: <defaults>
</compile_context>

<pallas_src>
import functools
import math

import jax
import jax.numpy as jnp
from jax.experimental import pallas as pl
from jax.experimental.pallas import tpu as pltpu  # noqa: F401  (TPU backend)

# --------------------- toy "roberta-base" config ---------------------------
VOCAB = 100
HIDDEN = 32
N_LAYERS = 2
N_HEADS = 4
HEAD_DIM = HIDDEN // N_HEADS
INTERMEDIATE = 64
MAX_POS = 64
PAD_IDX = 1                      # RoBERTa padding_idx
LN_EPS = 1e-5
NEG_INF = float(jnp.finfo(jnp.float32).min)
ATTN_SCALE = 1.0 / math.sqrt(HEAD_DIM)
LEAKY_SLOPE = 0.2


# --------------------------- Pallas kernels --------------------------------
def _layer_norm(h, g, b):
    mu = jnp.mean(h, axis=-1, keepdims=True)
    var = jnp.mean(jnp.square(h - mu), axis=-1, keepdims=True)
    return (h - mu) * jax.lax.rsqrt(var + LN_EPS) * g + b


def ln_kernel(x_ref, g_ref, b_ref, o_ref):
    # LayerNorm over the last axis (embedding LN, no residual input).
    o_ref[...] = _layer_norm(x_ref[...], g_ref[...], b_ref[...])


def encoder_layer_kernel(
    x_ref, mask_ref,
    wqkv_ref, bqkv_ref, wo_ref, bo_ref, ln1_g_ref, ln1_b_ref,
    w1_ref, b1_ref, w2_ref, b2_ref, ln2_g_ref, ln2_b_ref,
    o_ref, *feat_refs, batch, seq,
):
    """One fused RoBERTa encoder layer, entirely in VMEM.

    x: [B*S, H] f32, mask: [B, S] f32 (1.0 = valid).
    If feat_refs is non-empty (last layer), also writes LeakyReLU(CLS) -> [B, H].
    """
    H, D, NH = HIDDEN, HEAD_DIM, N_HEADS
    x = x_ref[...]                                             # [M, H] f32
    xb = x.astype(jnp.bfloat16)

    # ---- fused QKV projection: one MXU pass over x ----
    qkv = (
        jnp.dot(xb, wqkv_ref[...], preferred_element_type=jnp.float32)
        + bqkv_ref[...]
    )                                                          # [M, 3H] f32
    q = qkv[:, 0 * H:1 * H] * ATTN_SCALE                       # scale folded into q
    k = qkv[:, 1 * H:2 * H]
    v = qkv[:, 2 * H:3 * H]

    # additive mask built in-kernel from the raw [B, S] attention mask
    bias = ((1.0 - mask_ref[...]) * NEG_INF)[:, None, :]       # [B, 1, S]

    # ---- per-head attention + output projection (heads split in VMEM) ----
    wo = wo_ref[...]                                           # [H, H] f32
    attn_out = jnp.zeros((batch * seq, H), jnp.float32)
    for h in range(NH):
        sl = slice(h * D, (h + 1) * D)
        qh = q[:, sl].reshape(batch, seq, D).astype(jnp.bfloat16)
        kh = k[:, sl].reshape(batch, seq, D).astype(jnp.bfloat16)
        vh = v[:, sl].reshape(batch, seq, D).astype(jnp.bfloat16)

        s = jnp.einsum("bqd,bkd->bqk", qh, kh,
                       preferred_element_type=jnp.float32) + bias
        m = jnp.max(s, axis=-1, keepdims=True)
        e = jnp.exp(s - m)
        p = e * pl.reciprocal(jnp.sum(e, axis=-1, keepdims=True), approx=True)

        ctx = jnp.einsum("bqk,bkd->bqd", p.astype(jnp.bfloat16), vh,
                         preferred_element_type=jnp.float32)   # [B, S, D]
        ctx2 = ctx.reshape(batch * seq, D).astype(jnp.bfloat16)
        # ctx @ wo == sum_h ctx_h @ wo[hD:(h+1)D, :]  (avoids a lane-dim concat)
        attn_out = attn_out + jnp.dot(
            ctx2, wo[sl, :].astype(jnp.bfloat16),
            preferred_element_type=jnp.float32,
        )
    attn_out = attn_out + bo_ref[...]

    # ---- residual + LayerNorm 1 ----
    x1 = _layer_norm(attn_out + x, ln1_g_ref[...], ln1_b_ref[...])

    # ---- FFN ----
    hh = (
        jnp.dot(x1.astype(jnp.bfloat16), w1_ref[...],
                preferred_element_type=jnp.float32)
        + b1_ref[...]
    )
    # TODO(synk): HF RoBERTa uses exact erf-GELU; tanh-approx GELU used here.
    hh = jax.nn.gelu(hh, approximate=True)
    ffn = (
        jnp.dot(hh.astype(jnp.bfloat16), w2_ref[...],
                preferred_element_type=jnp.float32)
        + b2_ref[...]
    )

    # ---- residual + LayerNorm 2 ----
    out = _layer_norm(ffn + x1, ln2_g_ref[...], ln2_b_ref[...])
    o_ref[...] = out

    # ---- last-layer epilogue: CLS rows + LeakyReLU(0.2), fused in-kernel ----
    if feat_refs:
        (feat_ref,) = feat_refs
        for b in range(batch):
            row = out[b * seq:b * seq + 1, :]                  # [1, H]
            feat_ref[b:b + 1, :] = jnp.where(row >= 0.0, row, LEAKY_SLOPE * row)


# ----------------------- pallas_call plumbing ------------------------------
def _vmem_spec(shape):
    # Whole-array block resident in VMEM; index_map takes no grid args (grid=()).
    n = len(shape)
    return pl.BlockSpec(shape, lambda _n=n: (0,) * _n)


def run_kernel(kernel, out_shape, *arrays):
    return pl.pallas_call(
        kernel,
        out_shape=jax.ShapeDtypeStruct(out_shape, jnp.float32),
        in_specs=[_vmem_spec(a.shape) for a in arrays],
        out_specs=_vmem_spec(out_shape),
    )(*arrays)


def run_encoder_layer(p, x, mask_f, batch, seq, *, with_cls_feat):
    kern = functools.partial(encoder_layer_kernel, batch=batch, seq=seq)
    inputs = (
        x, mask_f,
        p["wqkv"], p["bqkv"], p["wo"], p["bo"], p["ln1_g"], p["ln1_b"],
        p["w1"], p["b1"], p["w2"], p["b2"], p["ln2_g"], p["ln2_b"],
    )
    in_specs = [_vmem_spec(a.shape) for a in inputs]
    x_shape = (batch * seq, HIDDEN)
    if with_cls_feat:
        out_shape = (
            jax.ShapeDtypeStruct(x_shape, jnp.float32),
            jax.ShapeDtypeStruct((batch, HIDDEN), jnp.float32),
        )
        out_specs = (_vmem_spec(x_shape), _vmem_spec((batch, HIDDEN)))
    else:
        out_shape = jax.ShapeDtypeStruct(x_shape, jnp.float32)
        out_specs = _vmem_spec(x_shape)
    return pl.pallas_call(
        kern, out_shape=out_shape, in_specs=in_specs, out_specs=out_specs,
    )(*inputs)


# ----------------------------- parameters ----------------------------------
def init_params(key):
    def dense(k, fan_in, fan_out):
        kw, kb = jax.random.split(k)
        w = jax.random.normal(kw, (fan_in, fan_out), jnp.float32) * 0.02
        b = jax.random.normal(kb, (1, fan_out), jnp.float32) * 0.02
        return w, b

    k_emb, k_layers = jax.random.split(key)
    ke = jax.random.split(k_emb, 3)
    params = {
        "word_emb": jax.random.normal(ke[0], (VOCAB, HIDDEN), jnp.float32) * 0.02,
        "pos_emb": jax.random.normal(ke[1], (MAX_POS, HIDDEN), jnp.float32) * 0.02,
        "type_emb": jax.random.normal(ke[2], (1, HIDDEN), jnp.float32) * 0.02,
        "emb_ln_g": jnp.ones((1, HIDDEN), jnp.float32),
        "emb_ln_b": jnp.zeros((1, HIDDEN), jnp.float32),
        "layers": [],
    }
    for lk in jax.random.split(k_layers, N_LAYERS):
        ks = jax.random.split(lk, 6)
        wq, bq = dense(ks[0], HIDDEN, HIDDEN)
        wk, bk = dense(ks[1], HIDDEN, HIDDEN)
        wv, bv = dense(ks[2], HIDDEN, HIDDEN)
        wo, bo = dense(ks[3], HIDDEN, HIDDEN)
        w1, b1 = dense(ks[4], HIDDEN, INTERMEDIATE)
        w2, b2 = dense(ks[5], INTERMEDIATE, HIDDEN)
        params["layers"].append(
            dict(
                # MXU weights stored in bf16 (f32 accumulation in-kernel).
                # wo stays f32: it is sliced per-head in-kernel on tile-aligned
                # rows and cast to bf16 at the MXU.
                wqkv=jnp.concatenate([wq, wk, wv], axis=1).astype(jnp.bfloat16),
                bqkv=jnp.concatenate([bq, bk, bv], axis=1),
                wo=wo, bo=bo,
                w1=w1.astype(jnp.bfloat16), b1=b1,
                w2=w2.astype(jnp.bfloat16), b2=b2,
                ln1_g=jnp.ones((1, HIDDEN), jnp.float32),
                ln1_b=jnp.zeros((1, HIDDEN), jnp.float32),
                ln2_g=jnp.ones((1, HIDDEN), jnp.float32),
                ln2_b=jnp.zeros((1, HIDDEN), jnp.float32),
            )
        )
    return params


# ------------------------------ forward ------------------------------------
@jax.jit
def roberta_forward(params, input_ids, attention_mask):
    B, S = input_ids.shape
    mask_f = attention_mask.astype(jnp.float32)

    # RoBERTa position ids: cumsum over non-pad tokens, offset by padding_idx.
    position_ids = (
        jnp.cumsum(attention_mask, axis=1) * attention_mask + PAD_IDX
    ).astype(jnp.int32)

    # Embedding gathers are plain-JAX glue (fused by XLA under jit).
    emb = (
        jnp.take(params["word_emb"], input_ids, axis=0)
        + jnp.take(params["pos_emb"], position_ids, axis=0)
        + params["type_emb"][0][None, None, :]
    ).astype(jnp.float32)

    x = emb.reshape(B * S, HIDDEN)
    x = run_kernel(ln_kernel, (B * S, HIDDEN), x,
                   params["emb_ln_g"], params["emb_ln_b"])

    n_layers = len(params["layers"])
    feat = None
    for li, layer in enumerate(params["layers"]):
        last = li == n_layers - 1
        out = run_encoder_layer(layer, x, mask_f, B, S, with_cls_feat=last)
        if last:
            x, feat = out
        else:
            x = out
    return feat                                                # [B, H], LeakyReLU'd CLS


# -------------------------------- main --------------------------------------
if __name__ == "__main__":
    key = jax.random.PRNGKey(0)
    pkey, ikey = jax.random.split(key)
    params = init_params(pkey)

    B, S = 2, 8
    input_ids = jax.random.randint(ikey, (B, S), 0, VOCAB, dtype=jnp.int32)
    attention_mask = jnp.array(
        [[1] * S, [1] * (S - 2) + [0, 0]], dtype=jnp.int32
    )
    # pad positions carry the pad token id, as a tokenizer would emit.
    input_ids = jnp.where(attention_mask == 1, input_ids, PAD_IDX)

    feat = roberta_forward(params, input_ids, attention_mask)
    feat = jax.block_until_ready(feat)

    assert feat.shape == (B, HIDDEN)
    assert bool(jnp.all(jnp.isfinite(feat)))
    print("KERNEL_OK")
</pallas_src>

<mosaic_0001>
module attributes {stable_mosaic.version = 11 : i64} {
  func.func @ln_kernel(%arg0: memref<16x32xf32, #tpu.memory_space<vmem>>, %arg1: memref<1x32xf32, #tpu.memory_space<vmem>>, %arg2: memref<1x32xf32, #tpu.memory_space<vmem>>, %arg3: memref<16x32xf32, #tpu.memory_space<vmem>>) attributes {dimension_semantics = [], scalar_prefetch = 0 : i64, scratch_operands = 0 : i64, tpu.core_type = #tpu.core_type<tc>} {
    %c0 = arith.constant 0 : index
    %c0_0 = arith.constant 0 : index
    %0 = vector.load %arg0[%c0, %c0_0] : memref<16x32xf32, #tpu.memory_space<vmem>>, vector<16x32xf32>
    %c0_1 = arith.constant 0 : index
    %c0_2 = arith.constant 0 : index
    %1 = vector.load %arg1[%c0_1, %c0_2] : memref<1x32xf32, #tpu.memory_space<vmem>>, vector<1x32xf32>
    %c0_3 = arith.constant 0 : index
    %c0_4 = arith.constant 0 : index
    %2 = vector.load %arg2[%c0_3, %c0_4] : memref<1x32xf32, #tpu.memory_space<vmem>>, vector<1x32xf32>
    %cst = arith.constant dense<0.000000e+00> : vector<16xf32>
    %3 = vector.multi_reduction <add>, %0, %cst [1] : vector<16x32xf32> to vector<16xf32>
    %4 = vector.shape_cast %3 : vector<16xf32> to vector<16x1xf32>
    %cst_5 = arith.constant 3.200000e+01 : f32
    %5 = vector.broadcast %cst_5 : f32 to vector<16x1xf32>
    %6 = arith.divf %4, %5 : vector<16x1xf32>
    %7 = vector.broadcast %6 : vector<16x1xf32> to vector<16x32xf32>
    %8 = arith.subf %0, %7 : vector<16x32xf32>
    %9 = arith.mulf %8, %8 : vector<16x32xf32>
    %cst_6 = arith.constant dense<0.000000e+00> : vector<16xf32>
    %10 = vector.multi_reduction <add>, %9, %cst_6 [1] : vector<16x32xf32> to vector<16xf32>
    %11 = vector.shape_cast %10 : vector<16xf32> to vector<16x1xf32>
    %cst_7 = arith.constant 3.200000e+01 : f32
    %12 = vector.broadcast %cst_7 : f32 to vector<16x1xf32>
    %13 = arith.divf %11, %12 : vector<16x1xf32>
    %14 = vector.broadcast %6 : vector<16x1xf32> to vector<16x32xf32>
    %15 = arith.subf %0, %14 : vector<16x32xf32>
    %cst_8 = arith.constant 9.99999974E-6 : f32
    %16 = vector.broadcast %cst_8 : f32 to vector<16x1xf32>
    %17 = arith.addf %13, %16 : vector<16x1xf32>
    %18 = math.rsqrt %17 : vector<16x1xf32>
    %19 = vector.broadcast %18 : vector<16x1xf32> to vector<16x32xf32>
    %20 = arith.mulf %15, %19 : vector<16x32xf32>
    %21 = vector.broadcast %1 : vector<1x32xf32> to vector<16x32xf32>
    %22 = arith.mulf %20, %21 : vector<16x32xf32>
    %23 = vector.broadcast %2 : vector<1x32xf32> to vector<16x32xf32>
    %24 = arith.addf %22, %23 : vector<16x32xf32>
    %c0_9 = arith.constant 0 : index
    %c0_10 = arith.constant 0 : index
    %25 = vector.load %arg3[%c0_9, %c0_10] : memref<16x32xf32, #tpu.memory_space<vmem>>, vector<16x32xf32>
    tpu.vector_store %arg3[%c0_9, %c0_10], %24 {strides = array<i32>} : memref<16x32xf32, #tpu.memory_space<vmem>>, vector<16x32xf32>,
    return
  }
}

module attributes {stable_mosaic.version = 11 : i64} {
  func.func @encoder_layer_kernel(%arg0: memref<16x32xf32, #tpu.memory_space<vmem>>, %arg1: memref<2x8xf32, #tpu.memory_space<vmem>>, %arg2: memref<32x96xbf16, #tpu.memory_space<vmem>>, %arg3: memref<1x96xf32, #tpu.memory_space<vmem>>, %arg4: memref<32x32xf32, #tpu.memory_space<vmem>>, %arg5: memref<1x32xf32, #tpu.memory_space<vmem>>, %arg6: memref<1x32xf32, #tpu.memory_space<vmem>>, %arg7: memref<1x32xf32, #tpu.memory_space<vmem>>, %arg8: memref<32x64xbf16, #tpu.memory_space<vmem>>, %arg9: memref<1x64xf32, #tpu.memory_space<vmem>>, %arg10: memref<64x32xbf16, #tpu.memory_space<vmem>>, %arg11: memref<1x32xf32, #tpu.memory_space<vmem>>, %arg12: memref<1x32xf32, #tpu.memory_space<vmem>>, %arg13: memref<1x32xf32, #tpu.memory_space<vmem>>, %arg14: memref<16x32xf32, #tpu.memory_space<vmem>>) attributes {dimension_semantics = [], scalar_prefetch = 0 : i64, scratch_operands = 0 : i64, tpu.core_type = #tpu.core_type<tc>} {
    %c0 = arith.constant 0 : index
    %c0_0 = arith.constant 0 : index
    %0 = vector.load %arg0[%c0, %c0_0] : memref<16x32xf32, #tpu.memory_space<vmem>>, vector<16x32xf32>
    %1 = arith.truncf %0 : vector<16x32xf32> to vector<16x32xbf16>
    %c0_1 = arith.constant 0 : index
    %c0_2 = arith.constant 0 : index
    %2 = vector.load %arg2[%c0_1, %c0_2] : memref<32x96xbf16, #tpu.memory_space<vmem>>, vector<32x96xbf16>
    %cst = arith.constant dense<0.000000e+00> : vector<16x96xf32>
    %3 = tpu.matmul %1, %2, %cst {dimension_numbers = #tpu.dot_dimension_numbers<[1], [0], [0], [1], [0, 0, 1, 1], [], []>} : vector<16x32xbf16>, vector<32x96xbf16>, vector<16x96xf32> -> vector<16x96xf32>
    %c0_3 = arith.constant 0 : index
    %c0_4 = arith.constant 0 : index
    %4 = vector.load %arg3[%c0_3, %c0_4] : memref<1x96xf32, #tpu.memory_space<vmem>>, vector<1x96xf32>
    %5 = vector.broadcast %4 : vector<1x96xf32> to vector<16x96xf32>
    %6 = arith.addf %3, %5 : vector<16x96xf32>
    %7 = vector.extract_strided_slice %6 {offsets = [0, 0], sizes = [16, 32], strides = [1, 1]} : vector<16x96xf32> to vector<16x32xf32>
    %cst_5 = arith.constant 0.353553385 : f32
    %8 = vector.broadcast %cst_5 : f32 to vector<16x32xf32>
    %9 = arith.mulf %7, %8 : vector<16x32xf32>
    %10 = vector.extract_strided_slice %6 {offsets = [0, 32], sizes = [16, 32], strides = [1, 1]} : vector<16x96xf32> to vector<16x32xf32>
    %11 = vector.extract_strided_slice %6 {offsets = [0, 64], sizes = [16, 32], strides = [1, 1]} : vector<16x96xf32> to vector<16x32xf32>
    %c0_6 = arith.constant 0 : index
    %c0_7 = arith.constant 0 : index
    %12 = vector.load %arg1[%c0_6, %c0_7] : memref<2x8xf32, #tpu.memory_space<vmem>>, vector<2x8xf32>
    %cst_8 = arith.constant 1.000000e+00 : f32
    %13 = vector.broadcast %cst_8 : f32 to vector<2x8xf32>
    %14 = arith.subf %13, %12 : vector<2x8xf32>
    %cst_9 = arith.constant -3.40282347E+38 : f32
    %15 = vector.broadcast %cst_9 : f32 to vector<2x8xf32>
    %16 = arith.mulf %14, %15 : vector<2x8xf32>
    %17 = vector.shape_cast %16 : vector<2x8xf32> to vector<2x1x8xf32>
    %c0_10 = arith.constant 0 : index
    %c0_11 = arith.constant 0 : index
    %18 = vector.load %arg4[%c0_10, %c0_11] : memref<32x32xf32, #tpu.memory_space<vmem>>, vector<32x32xf32>
    %cst_12 = arith.constant 0.000000e+00 : f32
    %19 = vector.broadcast %cst_12 : f32 to vector<16x32xf32>
    %20 = vector.extract_strided_slice %9 {offsets = [0, 0], sizes = [16, 8], strides = [1, 1]} : vector<16x32xf32> to vector<16x8xf32>
    %21 = vector.shape_cast %20 : vector<16x8xf32> to vector<2x8x8xf32>
    %22 = arith.truncf %21 : vector<2x8x8xf32> to vector<2x8x8xbf16>
    %23 = vector.extract_strided_slice %10 {offsets = [0, 0], sizes = [16, 8], strides = [1, 1]} : vector<16x32xf32> to vector<16x8xf32>
    %24 = vector.shape_cast %23 : vector<16x8xf32> to vector<2x8x8xf32>
    %25 = arith.truncf %24 : vector<2x8x8xf32> to vector<2x8x8xbf16>
    %26 = vector.extract_strided_slice %11 {offsets = [0, 0], sizes = [16, 8], strides = [1, 1]} : vector<16x32xf32> to vector<16x8xf32>
    %27 = vector.shape_cast %26 : vector<16x8xf32> to vector<2x8x8xf32>
    %28 = arith.truncf %27 : vector<2x8x8xf32> to vector<2x8x8xbf16>
    "tpu.trace_start"() <{level = 10 : i32, message = "bqd,bkd->bqk"}> : () -> ()
    %cst_13 = arith.constant dense<0.000000e+00> : vector<2x8x8xf32>
    %29 = tpu.matmul %22, %25, %cst_13 {dimension_numbers = #tpu.dot_dimension_numbers<[2], [2], [1], [1], [0, 0, 0, 1, 1, 1], [0], [0]>} : vector<2x8x8xbf16>, vector<2x8x8xbf16>, vector<2x8x8xf32> -> vector<2x8x8xf32>
    "tpu.trace_stop"() : () -> ()
    %30 = vector.broadcast %17 : vector<2x1x8xf32> to vector<2x8x8xf32>
    %31 = arith.addf %29, %30 : vector<2x8x8xf32>
    %cst_14 = arith.constant dense<0xFF800000> : vector<2x8xf32>
    %32 = vector.multi_reduction <maximumf>, %31, %cst_14 [2] : vector<2x8x8xf32> to vector<2x8xf32>
    %33 = vector.shape_cast %32 : vector<2x8xf32> to vector<2x8x1xf32>
    %34 = vector.broadcast %33 : vector<2x8x1xf32> to vector<2x8x8xf32>
    %35 = arith.subf %31, %34 : vector<2x8x8xf32>
    %36 = math.exp %35 : vector<2x8x8xf32>
    %cst_15 = arith.constant dense<0.000000e+00> : vector<2x8xf32>
    %37 = vector.multi_reduction <add>, %36, %cst_15 [2] : vector<2x8x8xf32> to vector<2x8xf32>
    %38 = vector.shape_cast %37 : vector<2x8xf32> to vector<2x8x1xf32>
    %39 = tpu.reciprocal %38 {approx = true} : vector<2x8x1xf32> -> vector<2x8x1xf32>
    %40 = vector.broadcast %39 : vector<2x8x1xf32> to vector<2x8x8xf32>
    %41 = arith.mulf %36, %40 : vector<2x8x8xf32>
    %42 = arith.truncf %41 : vector<2x8x8xf32> to vector<2x8x8xbf16>
    "tpu.trace_start"() <{level = 10 : i32, message = "bqk,bkd->bqd"}> : () -> ()
    %cst_16 = arith.constant dense<0.000000e+00> : vector<2x8x8xf32>
    %43 = tpu.matmul %42, %28, %cst_16 {dimension_numbers = #tpu.dot_dimension_numbers<[2], [1], [1], [2], [0, 0, 0, 1, 1, 2], [0], [0]>} : vector<2x8x8xbf16>, vector<2x8x8xbf16>, vector<2x8x8xf32> -> vector<2x8x8xf32>
    "tpu.trace_stop"() : () -> ()
    %44 = vector.shape_cast %43 : vector<2x8x8xf32> to vector<16x8xf32>
    %45 = arith.truncf %44 : vector<16x8xf32> to vector<16x8xbf16>
    %46 = vector.extract_strided_slice %18 {offsets = [0, 0], sizes = [8, 32], strides = [1, 1]} : vector<32x32xf32> to vector<8x32xf32>
    %47 = arith.truncf %46 : vector<8x32xf32> to vector<8x32xbf16>
    %cst_17 = arith.constant dense<0.000000e+00> : vector<16x32xf32>
    %48 = tpu.matmul %45, %47, %cst_17 {dimension_numbers = #tpu.dot_dimension_numbers<[1], [0], [0], [1], [0, 0, 1, 1], [], []>} : vector<16x8xbf16>, vector<8x32xbf16>, vector<16x32xf32> -> vector<16x32xf32>
    %49 = arith.addf %19, %48 : vector<16x32xf32>
    %50 = vector.extract_strided_slice %9 {offsets = [0, 8], sizes = [16, 8], strides = [1, 1]} : vector<16x32xf32> to vector<16x8xf32>
    %51 = vector.shape_cast %50 : vector<16x8xf32> to vector<2x8x8xf32>
    %52 = arith.truncf %51 : vector<2x8x8xf32> to vector<2x8x8xbf16>
    %53 = vector.extract_strided_slice %10 {offsets = [0, 8], sizes = [16, 8], strides = [1, 1]} : vector<16x32xf32> to vector<16x8xf32>
    %54 = vector.shape_cast %53 : vector<16x8xf32> to vector<2x8x8xf32>
    %55 = arith.truncf %54 : vector<2x8x8xf32> to vector<2x8x8xbf16>
    %56 = vector.extract_strided_slice %11 {offsets = [0, 8], sizes = [16, 8], strides = [1, 1]} : vector<16x32xf32> to vector<16x8xf32>
    %57 = vector.shape_cast %56 : vector<16x8xf32> to vector<2x8x8xf32>
    %58 = arith.truncf %57 : vector<2x8x8xf32> to vector<2x8x8xbf16>
    "tpu.trace_start"() <{level = 10 : i32, message = "bqd,bkd->bqk"}> : () -> ()
    %cst_18 = arith.constant dense<0.000000e+00> : vector<2x8x8xf32>
    %59 = tpu.matmul %52, %55, %cst_18 {dimension_numbers = #tpu.dot_dimension_numbers<[2], [2], [1], [1], [0, 0, 0, 1, 1, 1], [0], [0]>} : vector<2x8x8xbf16>, vector<2x8x8xbf16>, vector<2x8x8xf32> -> vector<2x8x8xf32>
    "tpu.trace_stop"() : () -> ()
    %60 = vector.broadcast %17 : vector<2x1x8xf32> to vector<2x8x8xf32>
    %61 = arith.addf %59, %60 : vector<2x8x8xf32>
    %cst_19 = arith.constant dense<0xFF800000> : vector<2x8xf32>
    %62 = vector.multi_reduction <maximumf>, %61, %cst_19 [2] : vector<2x8x8xf32> to vector<2x8xf32>
    %63 = vector.shape_cast %62 : vector<2x8xf32> to vector<2x8x1xf32>
    %64 = vector.broadcast %63 : vector<2x8x1xf32> to vector<2x8x8xf32>
    %65 = arith.subf %61, %64 : vector<2x8x8xf32>
    %66 = math.exp %65 : vector<2x8x8xf32>
    %cst_20 = arith.constant dense<0.000000e+00> : vector<2x8xf32>
    %67 = vector.multi_reduction <add>, %66, %cst_20 [2] : vector<2x8x8xf32> to vector<2x8xf32>
    %68 = vector.shape_cast %67 : vector<2x8xf32> to vector<2x8x1xf32>
    %69 = tpu.reciprocal %68 {approx = true} : vector<2x8x1xf32> -> vector<2x8x1xf32>
    %70 = vector.broadcast %69 : vector<2x8x1xf32> to vector<2x8x8xf32>
    %71 = arith.mulf %66, %70 : vector<2x8x8xf32>
    %72 = arith.truncf %71 : vector<2x8x8xf32> to vector<2x8x8xbf16>
    "tpu.trace_start"() <{level = 10 : i32, message = "bqk,bkd->bqd"}> : () -> ()
    %cst_21 = arith.constant dense<0.000000e+00> : vector<2x8x8xf32>
    %73 = tpu.matmul %72, %58, %cst_21 {dimension_numbers = #tpu.dot_dimension_numbers<[2], [1], [1], [2], [0, 0, 0, 1, 1, 2], [0], [0]>} : vector<2x8x8xbf16>, vector<2x8x8xbf16>, vector<2x8x8xf32> -> vector<2x8x8xf32>
    "tpu.trace_stop"() : () -> ()
    %74 = vector.shape_cast %73 : vector<2x8x8xf32> to vector<16x8xf32>
    %75 = arith.truncf %74 : vector<16x8xf32> to vector<16x8xbf16>
    %76 = vector.extract_strided_slice %18 {offsets = [8, 0], sizes = [8, 32], strides = [1, 1]} : vector<32x32xf32> to vector<8x32xf32>
    %77 = arith.truncf %76 : vector<8x32xf32> to vector<8x32xbf16>
    %cst_22 = arith.constant dense<0.000000e+00> : vector<16x32xf32>
    %78 = tpu.matmul %75, %77, %cst_22 {dimension_numbers = #tpu.dot_dimension_numbers<[1], [0], [0], [1], [0, 0, 1, 1], [], []>} : vector<16x8xbf16>, vector<8x32xbf16>, vector<16x32xf32> -> vector<16x32xf32>
    %79 = arith.addf %49, %78 : vector<16x32xf32>
    %80 = vector.extract_strided_slice %9 {offsets = [0, 16], sizes = [16, 8], strides = [1, 1]} : vector<16x32xf32> to vector<16x8xf32>
    %81 = vector.shape_cast %80 : vector<16x8xf32> to vector<2x8x8xf32>
    %82 = arith.truncf %81 : vector<2x8x8xf32> to vector<2x8x8xbf16>
    %83 = vector.extract_strided_slice %10 {offsets = [0, 16], sizes = [16, 8], strides = [1, 1]} : vector<16x32xf32> to vector<16x8xf32>
    %84 = vector.shape_cast %83 : vector<16x8xf32> to vector<2x8x8xf32>
    %85 = arith.truncf %84 : vector<2x8x8xf32> to vector<2x8x8xbf16>
    %86 = vector.extract_strided_slice %11 {offsets = [0, 16], sizes = [16, 8], strides = [1, 1]} : vector<16x32xf32> to vector<16x8xf32>
    %87 = vector.shape_cast %86 : vector<16x8xf32> to vector<2x8x8xf32>
    %88 = arith.truncf %87 : vector<2x8x8xf32> to vector<2x8x8xbf16>
    "tpu.trace_start"() <{level = 10 : i32, message = "bqd,bkd->bqk"}> : () -> ()
    %cst_23 = arith.constant dense<0.000000e+00> : vector<2x8x8xf32>
    %89 = tpu.matmul %82, %85, %cst_23 {dimension_numbers = #tpu.dot_dimension_numbers<[2], [2], [1], [1], [0, 0, 0, 1, 1, 1], [0], [0]>} : vector<2x8x8xbf16>, vector<2x8x8xbf16>, vector<2x8x8xf32> -> vector<2x8x8xf32>
    "tpu.trace_stop"() : () -> ()
    %90 = vector.broadcast %17 : vector<2x1x8xf32> to vector<2x8x8xf32>
    %91 = arith.addf %89, %90 : vector<2x8x8xf32>
    %cst_24 = arith.constant dense<0xFF800000> : vector<2x8xf32>
    %92 = vector.multi_reduction <maximumf>, %91, %cst_24 [2] : vector<2x8x8xf32> to vector<2x8xf32>
    %93 = vector.shape_cast %92 : vector<2x8xf32> to vector<2x8x1xf32>
    %94 = vector.broadcast %93 : vector<2x8x1xf32> to vector<2x8x8xf32>
    %95 = arith.subf %91, %94 : vector<2x8x8xf32>
    %96 = math.exp %95 : vector<2x8x8xf32>
    %cst_25 = arith.constant dense<0.000000e+00> : vector<2x8xf32>
    %97 = vector.multi_reduction <add>, %96, %cst_25 [2] : vector<2x8x8xf32> to vector<2x8xf32>
    %98 = vector.shape_cast %97 : vector<2x8xf32> to vector<2x8x1xf32>
    %99 = tpu.reciprocal %98 {approx = true} : vector<2x8x1xf32> -> vector<2x8x1xf32>
    %100 = vector.broadcast %99 : vector<2x8x1xf32> to vector<2x8x8xf32>
    %101 = arith.mulf %96, %100 : vector<2x8x8xf32>
    %102 = arith.truncf %101 : vector<2x8x8xf32> to vector<2x8x8xbf16>
    "tpu.trace_start"() <{level = 10 : i32, message = "bqk,bkd->bqd"}> : () -> ()
    %cst_26 = arith.constant dense<0.000000e+00> : vector<2x8x8xf32>
    %103 = tpu.matmul %102, %88, %cst_26 {dimension_numbers = #tpu.dot_dimension_numbers<[2], [1], [1], [2], [0, 0, 0, 1, 1, 2], [0], [0]>} : vector<2x8x8xbf16>, vector<2x8x8xbf16>, vector<2x8x8xf32> -> vector<2x8x8xf32>
    "tpu.trace_stop"() : () -> ()
    %104 = vector.shape_cast %103 : vector<2x8x8xf32> to vector<16x8xf32>
    %105 = arith.truncf %104 : vector<16x8xf32> to vector<16x8xbf16>
    %106 = vector.extract_strided_slice %18 {offsets = [16, 0], sizes = [8, 32], strides = [1, 1]} : vector<32x32xf32> to vector<8x32xf32>
    %107 = arith.truncf %106 : vector<8x32xf32> to vector<8x32xbf16>
    %cst_27 = arith.constant dense<0.000000e+00> : vector<16x32xf32>
    %108 = tpu.matmul %105, %107, %cst_27 {dimension_numbers = #tpu.dot_dimension_numbers<[1], [0], [0], [1], [0, 0, 1, 1], [], []>} : vector<16x8xbf16>, vector<8x32xbf16>, vector<16x32xf32> -> vector<16x32xf32>
    %109 = arith.addf %79, %108 : vector<16x32xf32>
    %110 = vector.extract_strided_slice %9 {offsets = [0, 24], sizes = [16, 8], strides = [1, 1]} : vector<16x32xf32> to vector<16x8xf32>
    %111 = vector.shape_cast %110 : vector<16x8xf32> to vector<2x8x8xf32>
    %112 = arith.truncf %111 : vector<2x8x8xf32> to vector<2x8x8xbf16>
    %113 = vector.extract_strided_slice %10 {offsets = [0, 24], sizes = [16, 8], strides = [1, 1]} : vector<16x32xf32> to vector<16x8xf32>
    %114 = vector.shape_cast %113 : vector<16x8xf32> to vector<2x8x8xf32>
    %115 = arith.truncf %114 : vector<2x8x8xf32> to vector<2x8x8xbf16>
    %116 = vector.extract_strided_slice %11 {offsets = [0, 24], sizes = [16, 8], strides = [1, 1]} : vector<16x32xf32> to vector<16x8xf32>
    %117 = vector.shape_cast %116 : vector<16x8xf32> to vector<2x8x8xf32>
    %118 = arith.truncf %117 : vector<2x8x8xf32> to vector<2x8x8xbf16>
    "tpu.trace_start"() <{level = 10 : i32, message = "bqd,bkd->bqk"}> : () -> ()
    %cst_28 = arith.constant dense<0.000000e+00> : vector<2x8x8xf32>
    %119 = tpu.matmul %112, %115, %cst_28 {dimension_numbers = #tpu.dot_dimension_numbers<[2], [2], [1], [1], [0, 0, 0, 1, 1, 1], [0], [0]>} : vector<2x8x8xbf16>, vector<2x8x8xbf16>, vector<2x8x8xf32> -> vector<2x8x8xf32>
    "tpu.trace_stop"() : () -> ()
    %120 = vector.broadcast %17 : vector<2x1x8xf32> to vector<2x8x8xf32>
    %121 = arith.addf %119, %120 : vector<2x8x8xf32>
    %cst_29 = arith.constant dense<0xFF800000> : vector<2x8xf32>
    %122 = vector.multi_reduction <maximumf>, %121, %cst_29 [2] : vector<2x8x8xf32> to vector<2x8xf32>
    %123 = vector.shape_cast %122 : vector<2x8xf32> to vector<2x8x1xf32>
    %124 = vector.broadcast %123 : vector<2x8x1xf32> to vector<2x8x8xf32>
    %125 = arith.subf %121, %124 : vector<2x8x8xf32>
    %126 = math.exp %125 : vector<2x8x8xf32>
    %cst_30 = arith.constant dense<0.000000e+00> : vector<2x8xf32>
    %127 = vector.multi_reduction <add>, %126, %cst_30 [2] : vector<2x8x8xf32> to vector<2x8xf32>
    %128 = vector.shape_cast %127 : vector<2x8xf32> to vector<2x8x1xf32>
    %129 = tpu.reciprocal %128 {approx = true} : vector<2x8x1xf32> -> vector<2x8x1xf32>
    %130 = vector.broadcast %129 : vector<2x8x1xf32> to vector<2x8x8xf32>
    %131 = arith.mulf %126, %130 : vector<2x8x8xf32>
    %132 = arith.truncf %131 : vector<2x8x8xf32> to vector<2x8x8xbf16>
    "tpu.trace_start"() <{level = 10 : i32, message = "bqk,bkd->bqd"}> : () -> ()
    %cst_31 = arith.constant dense<0.000000e+00> : vector<2x8x8xf32>
    %133 = tpu.matmul %132, %118, %cst_31 {dimension_numbers = #tpu.dot_dimension_numbers<[2], [1], [1], [2], [0, 0, 0, 1, 1, 2], [0], [0]>} : vector<2x8x8xbf16>, vector<2x8x8xbf16>, vector<2x8x8xf32> -> vector<2x8x8xf32>
    "tpu.trace_stop"() : () -> ()
    %134 = vector.shape_cast %133 : vector<2x8x8xf32> to vector<16x8xf32>
    %135 = arith.truncf %134 : vector<16x8xf32> to vector<16x8xbf16>
    %136 = vector.extract_strided_slice %18 {offsets = [24, 0], sizes = [8, 32], strides = [1, 1]} : vector<32x32xf32> to vector<8x32xf32>
    %137 = arith.truncf %136 : vector<8x32xf32> to vector<8x32xbf16>
    %cst_32 = arith.constant dense<0.000000e+00> : vector<16x32xf32>
    %138 = tpu.matmul %135, %137, %cst_32 {dimension_numbers = #tpu.dot_dimension_numbers<[1], [0], [0], [1], [0, 0, 1, 1], [], []>} : vector<16x8xbf16>, vector<8x32xbf16>, vector<16x32xf32> -> vector<16x32xf32>
    %139 = arith.addf %109, %138 : vector<16x32xf32>
    %c0_33 = arith.constant 0 : index
    %c0_34 = arith.constant 0 : index
    %140 = vector.load %arg5[%c0_33, %c0_34] : memref<1x32xf32, #tpu.memory_space<vmem>>, vector<1x32xf32>
    %141 = vector.broadcast %140 : vector<1x32xf32> to vector<16x32xf32>
    %142 = arith.addf %139, %141 : vector<16x32xf32>
    %143 = arith.addf %142, %0 : vector<16x32xf32>
    %c0_35 = arith.constant 0 : index
    %c0_36 = arith.constant 0 : index
    %144 = vector.load %arg6[%c0_35, %c0_36] : memref<1x32xf32, #tpu.memory_space<vmem>>, vector<1x32xf32>
    %c0_37 = arith.constant 0 : index
    %c0_38 = arith.constant 0 : index
    %145 = vector.load %arg7[%c0_37, %c0_38] : memref<1x32xf32, #tpu.memory_space<vmem>>, vector<1x32xf32>
    %cst_39 = arith.constant dense<0.000000e+00> : vector<16xf32>
    %146 = vector.multi_reduction <add>, %143, %cst_39 [1] : vector<16x32xf32> to vector<16xf32>
    %147 = vector.shape_cast %146 : vector<16xf32> to vector<16x1xf32>
    %cst_40 = arith.constant 3.200000e+01 : f32
    %148 = vector.broadcast %cst_40 : f32 to vector<16x1xf32>
    %149 = arith.divf %147, %148 : vector<16x1xf32>
    %150 = vector.broadcast %149 : vector<16x1xf32> to vector<16x32xf32>
    %151 = arith.subf %143, %150 : vector<16x32xf32>
    %152 = arith.mulf %151, %151 : vector<16x32xf32>
    %cst_41 = arith.constant dense<0.000000e+00> : vector<16xf32>
    %153 = vector.multi_reduction <add>, %152, %cst_41 [1] : vector<16x32xf32> to vector<16xf32>
    %154 = vector.shape_cast %153 : vector<16xf32> to vector<16x1xf32>
    %cst_42 = arith.constant 3.200000e+01 : f32
    %155 = vector.broadcast %cst_42 : f32 to vector<16x1xf32>
    %156 = arith.divf %154, %155 : vector<16x1xf32>
    %157 = vector.broadcast %149 : vector<16x1xf32> to vector<16x32xf32>
    %158 = arith.subf %143, %157 : vector<16x32xf32>
    %cst_43 = arith.constant 9.99999974E-6 : f32
    %159 = vector.broadcast %cst_43 : f32 to vector<16x1xf32>
    %160 = arith.addf %156, %159 : vector<16x1xf32>
    %161 = math.rsqrt %160 : vector<16x1xf32>
    %162 = vector.broadcast %161 : vector<16x1xf32> to vector<16x32xf32>
    %163 = arith.mulf %158, %162 : vector<16x32xf32>
    %164 = vector.broadcast %144 : vector<1x32xf32> to vector<16x32xf32>
    %165 = arith.mulf %163, %164 : vector<16x32xf32>
    %166 = vector.broadcast %145 : vector<1x32xf32> to vector<16x32xf32>
    %167 = arith.addf %165, %166 : vector<16x32xf32>
    %168 = arith.truncf %167 : vector<16x32xf32> to vector<16x32xbf16>
    %c0_44 = arith.constant 0 : index
    %c0_45 = arith.constant 0 : index
    %169 = vector.load %arg8[%c0_44, %c0_45] : memref<32x64xbf16, #tpu.memory_space<vmem>>, vector<32x64xbf16>
    %cst_46 = arith.constant dense<0.000000e+00> : vector<16x64xf32>
    %170 = tpu.matmul %168, %169, %cst_46 {dimension_numbers = #tpu.dot_dimension_numbers<[1], [0], [0], [1], [0, 0, 1, 1], [], []>} : vector<16x32xbf16>, vector<32x64xbf16>, vector<16x64xf32> -> vector<16x64xf32>
    %c0_47 = arith.constant 0 : index
    %c0_48 = arith.constant 0 : index
    %171 = vector.load %arg9[%c0_47, %c0_48] : memref<1x64xf32, #tpu.memory_space<vmem>>, vector<1x64xf32>
    %172 = vector.broadcast %171 : vector<1x64xf32> to vector<16x64xf32>
    %173 = arith.addf %170, %172 : vector<16x64xf32>
    %174 = arith.mulf %173, %173 : vector<16x64xf32>
    %175 = arith.mulf %173, %174 : vector<16x64xf32>
    %cst_49 = arith.constant 4.471500e-02 : f32
    %176 = vector.broadcast %cst_49 : f32 to vector<16x64xf32>
    %177 = arith.mulf %176, %175 : vector<16x64xf32>
    %178 = arith.addf %173, %177 : vector<16x64xf32>
    %cst_50 = arith.constant 0.797884583 : f32
    %179 = vector.broadcast %cst_50 : f32 to vector<16x64xf32>
    %180 = arith.mulf %179, %178 : vector<16x64xf32>
    %181 = math.tanh %180 : vector<16x64xf32>
    %cst_51 = arith.constant 1.000000e+00 : f32
    %182 = vector.broadcast %cst_51 : f32 to vector<16x64xf32>
    %183 = arith.addf %182, %181 : vector<16x64xf32>
    %cst_52 = arith.constant 5.000000e-01 : f32
    %184 = vector.broadcast %cst_52 : f32 to vector<16x64xf32>
    %185 = arith.mulf %184, %183 : vector<16x64xf32>
    %186 = arith.mulf %173, %185 : vector<16x64xf32>
    %187 = arith.truncf %186 : vector<16x64xf32> to vector<16x64xbf16>
    %c0_53 = arith.constant 0 : index
    %c0_54 = arith.constant 0 : index
    %188 = vector.load %arg10[%c0_53, %c0_54] : memref<64x32xbf16, #tpu.memory_space<vmem>>, vector<64x32xbf16>
    %cst_55 = arith.constant dense<0.000000e+00> : vector<16x32xf32>
    %189 = tpu.matmul %187, %188, %cst_55 {dimension_numbers = #tpu.dot_dimension_numbers<[1], [0], [0], [1], [0, 0, 1, 1], [], []>} : vector<16x64xbf16>, vector<64x32xbf16>, vector<16x32xf32> -> vector<16x32xf32>
    %c0_56 = arith.constant 0 : index
    %c0_57 = arith.constant 0 : index
    %190 = vector.load %arg11[%c0_56, %c0_57] : memref<1x32xf32, #tpu.memory_space<vmem>>, vector<1x32xf32>
    %191 = vector.broadcast %190 : vector<1x32xf32> to vector<16x32xf32>
    %192 = arith.addf %189, %191 : vector<16x32xf32>
    %193 = arith.addf %192, %167 : vector<16x32xf32>
    %c0_58 = arith.constant 0 : index
    %c0_59 = arith.constant 0 : index
    %194 = vector.load %arg12[%c0_58, %c0_59] : memref<1x32xf32, #tpu.memory_space<vmem>>, vector<1x32xf32>
    %c0_60 = arith.constant 0 : index
    %c0_61 = arith.constant 0 : index
    %195 = vector.load %arg13[%c0_60, %c0_61] : memref<1x32xf32, #tpu.memory_space<vmem>>, vector<1x32xf32>
    %cst_62 = arith.constant dense<0.000000e+00> : vector<16xf32>
    %196 = vector.multi_reduction <add>, %193, %cst_62 [1] : vector<16x32xf32> to vector<16xf32>
    %197 = vector.shape_cast %196 : vector<16xf32> to vector<16x1xf32>
    %cst_63 = arith.constant 3.200000e+01 : f32
    %198 = vector.broadcast %cst_63 : f32 to vector<16x1xf32>
    %199 = arith.divf %197, %198 : vector<16x1xf32>
    %200 = vector.broadcast %199 : vector<16x1xf32> to vector<16x32xf32>
    %201 = arith.subf %193, %200 : vector<16x32xf32>
    %202 = arith.mulf %201, %201 : vector<16x32xf32>
    %cst_64 = arith.constant dense<0.000000e+00> : vector<16xf32>
    %203 = vector.multi_reduction <add>, %202, %cst_64 [1] : vector<16x32xf32> to vector<16xf32>
    %204 = vector.shape_cast %203 : vector<16xf32> to vector<16x1xf32>
    %cst_65 = arith.constant 3.200000e+01 : f32
    %205 = vector.broadcast %cst_65 : f32 to vector<16x1xf32>
    %206 = arith.divf %204, %205 : vector<16x1xf32>
    %207 = vector.broadcast %199 : vector<16x1xf32> to vector<16x32xf32>
    %208 = arith.subf %193, %207 : vector<16x32xf32>
    %cst_66 = arith.constant 9.99999974E-6 : f32
    %209 = vector.broadcast %cst_66 : f32 to vector<16x1xf32>
    %210 = arith.addf %206, %209 : vector<16x1xf32>
    %211 = math.rsqrt %210 : vector<16x1xf32>
    %212 = vector.broadcast %211 : vector<16x1xf32> to vector<16x32xf32>
    %213 = arith.mulf %208, %212 : vector<16x32xf32>
    %214 = vector.broadcast %194 : vector<1x32xf32> to vector<16x32xf32>
    %215 = arith.mulf %213, %214 : vector<16x32xf32>
    %216 = vector.broadcast %195 : vector<1x32xf32> to vector<16x32xf32>
    %217 = arith.addf %215, %216 : vector<16x32xf32>
    %c0_67 = arith.constant 0 : index
    %c0_68 = arith.constant 0 : index
    %218 = vector.load %arg14[%c0_67, %c0_68] : memref<16x32xf32, #tpu.memory_space<vmem>>, vector<16x32xf32>
    tpu.vector_store %arg14[%c0_67, %c0_68], %217 {strides = array<i32>} : memref<16x32xf32, #tpu.memory_space<vmem>>, vector<16x32xf32>,
    return
  }
}

module attributes {stable_mosaic.version = 11 : i64} {
  func.func @encoder_layer_kernel(%arg0: memref<16x32xf32, #tpu.memory_space<vmem>>, %arg1: memref<2x8xf32, #tpu.memory_space<vmem>>, %arg2: memref<32x96xbf16, #tpu.memory_space<vmem>>, %arg3: memref<1x96xf32, #tpu.memory_space<vmem>>, %arg4: memref<32x32xf32, #tpu.memory_space<vmem>>, %arg5: memref<1x32xf32, #tpu.memory_space<vmem>>, %arg6: memref<1x32xf32, #tpu.memory_space<vmem>>, %arg7: memref<1x32xf32, #tpu.memory_space<vmem>>, %arg8: memref<32x64xbf16, #tpu.memory_space<vmem>>, %arg9: memref<1x64xf32, #tpu.memory_space<vmem>>, %arg10: memref<64x32xbf16, #tpu.memory_space<vmem>>, %arg11: memref<1x32xf32, #tpu.memory_space<vmem>>, %arg12: memref<1x32xf32, #tpu.memory_space<vmem>>, %arg13: memref<1x32xf32, #tpu.memory_space<vmem>>, %arg14: memref<16x32xf32, #tpu.memory_space<vmem>>, %arg15: memref<2x32xf32, #tpu.memory_space<vmem>>) attributes {dimension_semantics = [], scalar_prefetch = 0 : i64, scratch_operands = 0 : i64, tpu.core_type = #tpu.core_type<tc>} {
    %c0 = arith.constant 0 : index
    %c0_0 = arith.constant 0 : index
    %0 = vector.load %arg0[%c0, %c0_0] : memref<16x32xf32, #tpu.memory_space<vmem>>, vector<16x32xf32>
    %1 = arith.truncf %0 : vector<16x32xf32> to vector<16x32xbf16>
    %c0_1 = arith.constant 0 : index
    %c0_2 = arith.constant 0 : index
    %2 = vector.load %arg2[%c0_1, %c0_2] : memref<32x96xbf16, #tpu.memory_space<vmem>>, vector<32x96xbf16>
    %cst = arith.constant dense<0.000000e+00> : vector<16x96xf32>
    %3 = tpu.matmul %1, %2, %cst {dimension_numbers = #tpu.dot_dimension_numbers<[1], [0], [0], [1], [0, 0, 1, 1], [], []>} : vector<16x32xbf16>, vector<32x96xbf16>, vector<16x96xf32> -> vector<16x96xf32>
    %c0_3 = arith.constant 0 : index
    %c0_4 = arith.constant 0 : index
    %4 = vector.load %arg3[%c0_3, %c0_4] : memref<1x96xf32, #tpu.memory_space<vmem>>, vector<1x96xf32>
    %5 = vector.broadcast %4 : vector<1x96xf32> to vector<16x96xf32>
    %6 = arith.addf %3, %5 : vector<16x96xf32>
    %7 = vector.extract_strided_slice %6 {offsets = [0, 0], sizes = [16, 32], strides = [1, 1]} : vector<16x96xf32> to vector<16x32xf32>
    %cst_5 = arith.constant 0.353553385 : f32
    %8 = vector.broadcast %cst_5 : f32 to vector<16x32xf32>
    %9 = arith.mulf %7, %8 : vector<16x32xf32>
    %10 = vector.extract_strided_slice %6 {offsets = [0, 32], sizes = [16, 32], strides = [1, 1]} : vector<16x96xf32> to vector<16x32xf32>
    %11 = vector.extract_strided_slice %6 {offsets = [0, 64], sizes = [16, 32], strides = [1, 1]} : vector<16x96xf32> to vector<16x32xf32>
    %c0_6 = arith.constant 0 : index
    %c0_7 = arith.constant 0 : index
    %12 = vector.load %arg1[%c0_6, %c0_7] : memref<2x8xf32, #tpu.memory_space<vmem>>, vector<2x8xf32>
    %cst_8 = arith.constant 1.000000e+00 : f32
    %13 = vector.broadcast %cst_8 : f32 to vector<2x8xf32>
    %14 = arith.subf %13, %12 : vector<2x8xf32>
    %cst_9 = arith.constant -3.40282347E+38 : f32
    %15 = vector.broadcast %cst_9 : f32 to vector<2x8xf32>
    %16 = arith.mulf %14, %15 : vector<2x8xf32>
    %17 = vector.shape_cast %16 : vector<2x8xf32> to vector<2x1x8xf32>
    %c0_10 = arith.constant 0 : index
    %c0_11 = arith.constant 0 : index
    %18 = vector.load %arg4[%c0_10, %c0_11] : memref<32x32xf32, #tpu.memory_space<vmem>>, vector<32x32xf32>
    %cst_12 = arith.constant 0.000000e+00 : f32
    %19 = vector.broadcast %cst_12 : f32 to vector<16x32xf32>
    %20 = vector.extract_strided_slice %9 {offsets = [0, 0], sizes = [16, 8], strides = [1, 1]} : vector<16x32xf32> to vector<16x8xf32>
    %21 = vector.shape_cast %20 : vector<16x8xf32> to vector<2x8x8xf32>
    %22 = arith.truncf %21 : vector<2x8x8xf32> to vector<2x8x8xbf16>
    %23 = vector.extract_strided_slice %10 {offsets = [0, 0], sizes = [16, 8], strides = [1, 1]} : vector<16x32xf32> to vector<16x8xf32>
    %24 = vector.shape_cast %23 : vector<16x8xf32> to vector<2x8x8xf32>
    %25 = arith.truncf %24 : vector<2x8x8xf32> to vector<2x8x8xbf16>
    %26 = vector.extract_strided_slice %11 {offsets = [0, 0], sizes = [16, 8], strides = [1, 1]} : vector<16x32xf32> to vector<16x8xf32>
    %27 = vector.shape_cast %26 : vector<16x8xf32> to vector<2x8x8xf32>
    %28 = arith.truncf %27 : vector<2x8x8xf32> to vector<2x8x8xbf16>
    "tpu.trace_start"() <{level = 10 : i32, message = "bqd,bkd->bqk"}> : () -> ()
    %cst_13 = arith.constant dense<0.000000e+00> : vector<2x8x8xf32>
    %29 = tpu.matmul %22, %25, %cst_13 {dimension_numbers = #tpu.dot_dimension_numbers<[2], [2], [1], [1], [0, 0, 0, 1, 1, 1], [0], [0]>} : vector<2x8x8xbf16>, vector<2x8x8xbf16>, vector<2x8x8xf32> -> vector<2x8x8xf32>
    "tpu.trace_stop"() : () -> ()
    %30 = vector.broadcast %17 : vector<2x1x8xf32> to vector<2x8x8xf32>
    %31 = arith.addf %29, %30 : vector<2x8x8xf32>
    %cst_14 = arith.constant dense<0xFF800000> : vector<2x8xf32>
    %32 = vector.multi_reduction <maximumf>, %31, %cst_14 [2] : vector<2x8x8xf32> to vector<2x8xf32>
    %33 = vector.shape_cast %32 : vector<2x8xf32> to vector<2x8x1xf32>
    %34 = vector.broadcast %33 : vector<2x8x1xf32> to vector<2x8x8xf32>
    %35 = arith.subf %31, %34 : vector<2x8x8xf32>
    %36 = math.exp %35 : vector<2x8x8xf32>
    %cst_15 = arith.constant dense<0.000000e+00> : vector<2x8xf32>
    %37 = vector.multi_reduction <add>, %36, %cst_15 [2] : vector<2x8x8xf32> to vector<2x8xf32>
    %38 = vector.shape_cast %37 : vector<2x8xf32> to vector<2x8x1xf32>
    %39 = tpu.reciprocal %38 {approx = true} : vector<2x8x1xf32> -> vector<2x8x1xf32>
    %40 = vector.broadcast %39 : vector<2x8x1xf32> to vector<2x8x8xf32>
    %41 = arith.mulf %36, %40 : vector<2x8x8xf32>
    %42 = arith.truncf %41 : vector<2x8x8xf32> to vector<2x8x8xbf16>
    "tpu.trace_start"() <{level = 10 : i32, message = "bqk,bkd->bqd"}> : () -> ()
    %cst_16 = arith.constant dense<0.000000e+00> : vector<2x8x8xf32>
    %43 = tpu.matmul %42, %28, %cst_16 {dimension_numbers = #tpu.dot_dimension_numbers<[2], [1], [1], [2], [0, 0, 0, 1, 1, 2], [0], [0]>} : vector<2x8x8xbf16>, vector<2x8x8xbf16>, vector<2x8x8xf32> -> vector<2x8x8xf32>
    "tpu.trace_stop"() : () -> ()
    %44 = vector.shape_cast %43 : vector<2x8x8xf32> to vector<16x8xf32>
    %45 = arith.truncf %44 : vector<16x8xf32> to vector<16x8xbf16>
    %46 = vector.extract_strided_slice %18 {offsets = [0, 0], sizes = [8, 32], strides = [1, 1]} : vector<32x32xf32> to vector<8x32xf32>
    %47 = arith.truncf %46 : vector<8x32xf32> to vector<8x32xbf16>
    %cst_17 = arith.constant dense<0.000000e+00> : vector<16x32xf32>
    %48 = tpu.matmul %45, %47, %cst_17 {dimension_numbers = #tpu.dot_dimension_numbers<[1], [0], [0], [1], [0, 0, 1, 1], [], []>} : vector<16x8xbf16>, vector<8x32xbf16>, vector<16x32xf32> -> vector<16x32xf32>
    %49 = arith.addf %19, %48 : vector<16x32xf32>
    %50 = vector.extract_strided_slice %9 {offsets = [0, 8], sizes = [16, 8], strides = [1, 1]} : vector<16x32xf32> to vector<16x8xf32>
    %51 = vector.shape_cast %50 : vector<16x8xf32> to vector<2x8x8xf32>
    %52 = arith.truncf %51 : vector<2x8x8xf32> to vector<2x8x8xbf16>
    %53 = vector.extract_strided_slice %10 {offsets = [0, 8], sizes = [16, 8], strides = [1, 1]} : vector<16x32xf32> to vector<16x8xf32>
    %54 = vector.shape_cast %53 : vector<16x8xf32> to vector<2x8x8xf32>
    %55 = arith.truncf %54 : vector<2x8x8xf32> to vector<2x8x8xbf16>
    %56 = vector.extract_strided_slice %11 {offsets = [0, 8], sizes = [16, 8], strides = [1, 1]} : vector<16x32xf32> to vector<16x8xf32>
    %57 = vector.shape_cast %56 : vector<16x8xf32> to vector<2x8x8xf32>
    %58 = arith.truncf %57 : vector<2x8x8xf32> to vector<2x8x8xbf16>
    "tpu.trace_start"() <{level = 10 : i32, message = "bqd,bkd->bqk"}> : () -> ()
    %cst_18 = arith.constant dense<0.000000e+00> : vector<2x8x8xf32>
    %59 = tpu.matmul %52, %55, %cst_18 {dimension_numbers = #tpu.dot_dimension_numbers<[2], [2], [1], [1], [0, 0, 0, 1, 1, 1], [0], [0]>} : vector<2x8x8xbf16>, vector<2x8x8xbf16>, vector<2x8x8xf32> -> vector<2x8x8xf32>
    "tpu.trace_stop"() : () -> ()
    %60 = vector.broadcast %17 : vector<2x1x8xf32> to vector<2x8x8xf32>
    %61 = arith.addf %59, %60 : vector<2x8x8xf32>
    %cst_19 = arith.constant dense<0xFF800000> : vector<2x8xf32>
    %62 = vector.multi_reduction <maximumf>, %61, %cst_19 [2] : vector<2x8x8xf32> to vector<2x8xf32>
    %63 = vector.shape_cast %62 : vector<2x8xf32> to vector<2x8x1xf32>
    %64 = vector.broadcast %63 : vector<2x8x1xf32> to vector<2x8x8xf32>
    %65 = arith.subf %61, %64 : vector<2x8x8xf32>
    %66 = math.exp %65 : vector<2x8x8xf32>
    %cst_20 = arith.constant dense<0.000000e+00> : vector<2x8xf32>
    %67 = vector.multi_reduction <add>, %66, %cst_20 [2] : vector<2x8x8xf32> to vector<2x8xf32>
    %68 = vector.shape_cast %67 : vector<2x8xf32> to vector<2x8x1xf32>
    %69 = tpu.reciprocal %68 {approx = true} : vector<2x8x1xf32> -> vector<2x8x1xf32>
    %70 = vector.broadcast %69 : vector<2x8x1xf32> to vector<2x8x8xf32>
    %71 = arith.mulf %66, %70 : vector<2x8x8xf32>
    %72 = arith.truncf %71 : vector<2x8x8xf32> to vector<2x8x8xbf16>
    "tpu.trace_start"() <{level = 10 : i32, message = "bqk,bkd->bqd"}> : () -> ()
    %cst_21 = arith.constant dense<0.000000e+00> : vector<2x8x8xf32>
    %73 = tpu.matmul %72, %58, %cst_21 {dimension_numbers = #tpu.dot_dimension_numbers<[2], [1], [1], [2], [0, 0, 0, 1, 1, 2], [0], [0]>} : vector<2x8x8xbf16>, vector<2x8x8xbf16>, vector<2x8x8xf32> -> vector<2x8x8xf32>
    "tpu.trace_stop"() : () -> ()
    %74 = vector.shape_cast %73 : vector<2x8x8xf32> to vector<16x8xf32>
    %75 = arith.truncf %74 : vector<16x8xf32> to vector<16x8xbf16>
    %76 = vector.extract_strided_slice %18 {offsets = [8, 0], sizes = [8, 32], strides = [1, 1]} : vector<32x32xf32> to vector<8x32xf32>
    %77 = arith.truncf %76 : vector<8x32xf32> to vector<8x32xbf16>
    %cst_22 = arith.constant dense<0.000000e+00> : vector<16x32xf32>
    %78 = tpu.matmul %75, %77, %cst_22 {dimension_numbers = #tpu.dot_dimension_numbers<[1], [0], [0], [1], [0, 0, 1, 1], [], []>} : vector<16x8xbf16>, vector<8x32xbf16>, vector<16x32xf32> -> vector<16x32xf32>
    %79 = arith.addf %49, %78 : vector<16x32xf32>
    %80 = vector.extract_strided_slice %9 {offsets = [0, 16], sizes = [16, 8], strides = [1, 1]} : vector<16x32xf32> to vector<16x8xf32>
    %81 = vector.shape_cast %80 : vector<16x8xf32> to vector<2x8x8xf32>
    %82 = arith.truncf %81 : vector<2x8x8xf32> to vector<2x8x8xbf16>
    %83 = vector.extract_strided_slice %10 {offsets = [0, 16], sizes = [16, 8], strides = [1, 1]} : vector<16x32xf32> to vector<16x8xf32>
    %84 = vector.shape_cast %83 : vector<16x8xf32> to vector<2x8x8xf32>
    %85 = arith.truncf %84 : vector<2x8x8xf32> to vector<2x8x8xbf16>
    %86 = vector.extract_strided_slice %11 {offsets = [0, 16], sizes = [16, 8], strides = [1, 1]} : vector<16x32xf32> to vector<16x8xf32>
    %87 = vector.shape_cast %86 : vector<16x8xf32> to vector<2x8x8xf32>
    %88 = arith.truncf %87 : vector<2x8x8xf32> to vector<2x8x8xbf16>
    "tpu.trace_start"() <{level = 10 : i32, message = "bqd,bkd->bqk"}> : () -> ()
    %cst_23 = arith.constant dense<0.000000e+00> : vector<2x8x8xf32>
    %89 = tpu.matmul %82, %85, %cst_23 {dimension_numbers = #tpu.dot_dimension_numbers<[2], [2], [1], [1], [0, 0, 0, 1, 1, 1], [0], [0]>} : vector<2x8x8xbf16>, vector<2x8x8xbf16>, vector<2x8x8xf32> -> vector<2x8x8xf32>
    "tpu.trace_stop"() : () -> ()
    %90 = vector.broadcast %17 : vector<2x1x8xf32> to vector<2x8x8xf32>
    %91 = arith.addf %89, %90 : vector<2x8x8xf32>
    %cst_24 = arith.constant dense<0xFF800000> : vector<2x8xf32>
    %92 = vector.multi_reduction <maximumf>, %91, %cst_24 [2] : vector<2x8x8xf32> to vector<2x8xf32>
    %93 = vector.shape_cast %92 : vector<2x8xf32> to vector<2x8x1xf32>
    %94 = vector.broadcast %93 : vector<2x8x1xf32> to vector<2x8x8xf32>
    %95 = arith.subf %91, %94 : vector<2x8x8xf32>
    %96 = math.exp %95 : vector<2x8x8xf32>
    %cst_25 = arith.constant dense<0.000000e+00> : vector<2x8xf32>
    %97 = vector.multi_reduction <add>, %96, %cst_25 [2] : vector<2x8x8xf32> to vector<2x8xf32>
    %98 = vector.shape_cast %97 : vector<2x8xf32> to vector<2x8x1xf32>
    %99 = tpu.reciprocal %98 {approx = true} : vector<2x8x1xf32> -> vector<2x8x1xf32>
    %100 = vector.broadcast %99 : vector<2x8x1xf32> to vector<2x8x8xf32>
    %101 = arith.mulf %96, %100 : vector<2x8x8xf32>
    %102 = arith.truncf %101 : vector<2x8x8xf32> to vector<2x8x8xbf16>
    "tpu.trace_start"() <{level = 10 : i32, message = "bqk,bkd->bqd"}> : () -> ()
    %cst_26 = arith.constant dense<0.000000e+00> : vector<2x8x8xf32>
    %103 = tpu.matmul %102, %88, %cst_26 {dimension_numbers = #tpu.dot_dimension_numbers<[2], [1], [1], [2], [0, 0, 0, 1, 1, 2], [0], [0]>} : vector<2x8x8xbf16>, vector<2x8x8xbf16>, vector<2x8x8xf32> -> vector<2x8x8xf32>
    "tpu.trace_stop"() : () -> ()
    %104 = vector.shape_cast %103 : vector<2x8x8xf32> to vector<16x8xf32>
    %105 = arith.truncf %104 : vector<16x8xf32> to vector<16x8xbf16>
    %106 = vector.extract_strided_slice %18 {offsets = [16, 0], sizes = [8, 32], strides = [1, 1]} : vector<32x32xf32> to vector<8x32xf32>
    %107 = arith.truncf %106 : vector<8x32xf32> to vector<8x32xbf16>
    %cst_27 = arith.constant dense<0.000000e+00> : vector<16x32xf32>
    %108 = tpu.matmul %105, %107, %cst_27 {dimension_numbers = #tpu.dot_dimension_numbers<[1], [0], [0], [1], [0, 0, 1, 1], [], []>} : vector<16x8xbf16>, vector<8x32xbf16>, vector<16x32xf32> -> vector<16x32xf32>
    %109 = arith.addf %79, %108 : vector<16x32xf32>
    %110 = vector.extract_strided_slice %9 {offsets = [0, 24], sizes = [16, 8], strides = [1, 1]} : vector<16x32xf32> to vector<16x8xf32>
    %111 = vector.shape_cast %110 : vector<16x8xf32> to vector<2x8x8xf32>
    %112 = arith.truncf %111 : vector<2x8x8xf32> to vector<2x8x8xbf16>
    %113 = vector.extract_strided_slice %10 {offsets = [0, 24], sizes = [16, 8], strides = [1, 1]} : vector<16x32xf32> to vector<16x8xf32>
    %114 = vector.shape_cast %113 : vector<16x8xf32> to vector<2x8x8xf32>
    %115 = arith.truncf %114 : vector<2x8x8xf32> to vector<2x8x8xbf16>
    %116 = vector.extract_strided_slice %11 {offsets = [0, 24], sizes = [16, 8], strides = [1, 1]} : vector<16x32xf32> to vector<16x8xf32>
    %117 = vector.shape_cast %116 : vector<16x8xf32> to vector<2x8x8xf32>
    %118 = arith.truncf %117 : vector<2x8x8xf32> to vector<2x8x8xbf16>
    "tpu.trace_start"() <{level = 10 : i32, message = "bqd,bkd->bqk"}> : () -> ()
    %cst_28 = arith.constant dense<0.000000e+00> : vector<2x8x8xf32>
    %119 = tpu.matmul %112, %115, %cst_28 {dimension_numbers = #tpu.dot_dimension_numbers<[2], [2], [1], [1], [0, 0, 0, 1, 1, 1], [0], [0]>} : vector<2x8x8xbf16>, vector<2x8x8xbf16>, vector<2x8x8xf32> -> vector<2x8x8xf32>
    "tpu.trace_stop"() : () -> ()
    %120 = vector.broadcast %17 : vector<2x1x8xf32> to vector<2x8x8xf32>
    %121 = arith.addf %119, %120 : vector<2x8x8xf32>
    %cst_29 = arith.constant dense<0xFF800000> : vector<2x8xf32>
    %122 = vector.multi_reduction <maximumf>, %121, %cst_29 [2] : vector<2x8x8xf32> to vector<2x8xf32>
    %123 = vector.shape_cast %122 : vector<2x8xf32> to vector<2x8x1xf32>
    %124 = vector.broadcast %123 : vector<2x8x1xf32> to vector<2x8x8xf32>
    %125 = arith.subf %121, %124 : vector<2x8x8xf32>
    %126 = math.exp %125 : vector<2x8x8xf32>
    %cst_30 = arith.constant dense<0.000000e+00> : vector<2x8xf32>
    %127 = vector.multi_reduction <add>, %126, %cst_30 [2] : vector<2x8x8xf32> to vector<2x8xf32>
    %128 = vector.shape_cast %127 : vector<2x8xf32> to vector<2x8x1xf32>
    %129 = tpu.reciprocal %128 {approx = true} : vector<2x8x1xf32> -> vector<2x8x1xf32>
    %130 = vector.broadcast %129 : vector<2x8x1xf32> to vector<2x8x8xf32>
    %131 = arith.mulf %126, %130 : vector<2x8x8xf32>
    %132 = arith.truncf %131 : vector<2x8x8xf32> to vector<2x8x8xbf16>
    "tpu.trace_start"() <{level = 10 : i32, message = "bqk,bkd->bqd"}> : () -> ()
    %cst_31 = arith.constant dense<0.000000e+00> : vector<2x8x8xf32>
    %133 = tpu.matmul %132, %118, %cst_31 {dimension_numbers = #tpu.dot_dimension_numbers<[2], [1], [1], [2], [0, 0, 0, 1, 1, 2], [0], [0]>} : vector<2x8x8xbf16>, vector<2x8x8xbf16>, vector<2x8x8xf32> -> vector<2x8x8xf32>
    "tpu.trace_stop"() : () -> ()
    %134 = vector.shape_cast %133 : vector<2x8x8xf32> to vector<16x8xf32>
    %135 = arith.truncf %134 : vector<16x8xf32> to vector<16x8xbf16>
    %136 = vector.extract_strided_slice %18 {offsets = [24, 0], sizes = [8, 32], strides = [1, 1]} : vector<32x32xf32> to vector<8x32xf32>
    %137 = arith.truncf %136 : vector<8x32xf32> to vector<8x32xbf16>
    %cst_32 = arith.constant dense<0.000000e+00> : vector<16x32xf32>
    %138 = tpu.matmul %135, %137, %cst_32 {dimension_numbers = #tpu.dot_dimension_numbers<[1], [0], [0], [1], [0, 0, 1, 1], [], []>} : vector<16x8xbf16>, vector<8x32xbf16>, vector<16x32xf32> -> vector<16x32xf32>
    %139 = arith.addf %109, %138 : vector<16x32xf32>
    %c0_33 = arith.constant 0 : index
    %c0_34 = arith.constant 0 : index
    %140 = vector.load %arg5[%c0_33, %c0_34] : memref<1x32xf32, #tpu.memory_space<vmem>>, vector<1x32xf32>
    %141 = vector.broadcast %140 : vector<1x32xf32> to vector<16x32xf32>
    %142 = arith.addf %139, %141 : vector<16x32xf32>
    %143 = arith.addf %142, %0 : vector<16x32xf32>
    %c0_35 = arith.constant 0 : index
    %c0_36 = arith.constant 0 : index
    %144 = vector.load %arg6[%c0_35, %c0_36] : memref<1x32xf32, #tpu.memory_space<vmem>>, vector<1x32xf32>
    %c0_37 = arith.constant 0 : index
    %c0_38 = arith.constant 0 : index
    %145 = vector.load %arg7[%c0_37, %c0_38] : memref<1x32xf32, #tpu.memory_space<vmem>>, vector<1x32xf32>
    %cst_39 = arith.constant dense<0.000000e+00> : vector<16xf32>
    %146 = vector.multi_reduction <add>, %143, %cst_39 [1] : vector<16x32xf32> to vector<16xf32>
    %147 = vector.shape_cast %146 : vector<16xf32> to vector<16x1xf32>
    %cst_40 = arith.constant 3.200000e+01 : f32
    %148 = vector.broadcast %cst_40 : f32 to vector<16x1xf32>
    %149 = arith.divf %147, %148 : vector<16x1xf32>
    %150 = vector.broadcast %149 : vector<16x1xf32> to vector<16x32xf32>
    %151 = arith.subf %143, %150 : vector<16x32xf32>
    %152 = arith.mulf %151, %151 : vector<16x32xf32>
    %cst_41 = arith.constant dense<0.000000e+00> : vector<16xf32>
    %153 = vector.multi_reduction <add>, %152, %cst_41 [1] : vector<16x32xf32> to vector<16xf32>
    %154 = vector.shape_cast %153 : vector<16xf32> to vector<16x1xf32>
    %cst_42 = arith.constant 3.200000e+01 : f32
    %155 = vector.broadcast %cst_42 : f32 to vector<16x1xf32>
    %156 = arith.divf %154, %155 : vector<16x1xf32>
    %157 = vector.broadcast %149 : vector<16x1xf32> to vector<16x32xf32>
    %158 = arith.subf %143, %157 : vector<16x32xf32>
    %cst_43 = arith.constant 9.99999974E-6 : f32
    %159 = vector.broadcast %cst_43 : f32 to vector<16x1xf32>
    %160 = arith.addf %156, %159 : vector<16x1xf32>
    %161 = math.rsqrt %160 : vector<16x1xf32>
    %162 = vector.broadcast %161 : vector<16x1xf32> to vector<16x32xf32>
    %163 = arith.mulf %158, %162 : vector<16x32xf32>
    %164 = vector.broadcast %144 : vector<1x32xf32> to vector<16x32xf32>
    %165 = arith.mulf %163, %164 : vector<16x32xf32>
    %166 = vector.broadcast %145 : vector<1x32xf32> to vector<16x32xf32>
    %167 = arith.addf %165, %166 : vector<16x32xf32>
    %168 = arith.truncf %167 : vector<16x32xf32> to vector<16x32xbf16>
    %c0_44 = arith.constant 0 : index
    %c0_45 = arith.constant 0 : index
    %169 = vector.load %arg8[%c0_44, %c0_45] : memref<32x64xbf16, #tpu.memory_space<vmem>>, vector<32x64xbf16>
    %cst_46 = arith.constant dense<0.000000e+00> : vector<16x64xf32>
    %170 = tpu.matmul %168, %169, %cst_46 {dimension_numbers = #tpu.dot_dimension_numbers<[1], [0], [0], [1], [0, 0, 1, 1], [], []>} : vector<16x32xbf16>, vector<32x64xbf16>, vector<16x64xf32> -> vector<16x64xf32>
    %c0_47 = arith.constant 0 : index
    %c0_48 = arith.constant 0 : index
    %171 = vector.load %arg9[%c0_47, %c0_48] : memref<1x64xf32, #tpu.memory_space<vmem>>, vector<1x64xf32>
    %172 = vector.broadcast %171 : vector<1x64xf32> to vector<16x64xf32>
    %173 = arith.addf %170, %172 : vector<16x64xf32>
    %174 = arith.mulf %173, %173 : vector<16x64xf32>
    %175 = arith.mulf %173, %174 : vector<16x64xf32>
    %cst_49 = arith.constant 4.471500e-02 : f32
    %176 = vector.broadcast %cst_49 : f32 to vector<16x64xf32>
    %177 = arith.mulf %176, %175 : vector<16x64xf32>
    %178 = arith.addf %173, %177 : vector<16x64xf32>
    %cst_50 = arith.constant 0.797884583 : f32
    %179 = vector.broadcast %cst_50 : f32 to vector<16x64xf32>
    %180 = arith.mulf %179, %178 : vector<16x64xf32>
    %181 = math.tanh %180 : vector<16x64xf32>
    %cst_51 = arith.constant 1.000000e+00 : f32
    %182 = vector.broadcast %cst_51 : f32 to vector<16x64xf32>
    %183 = arith.addf %182, %181 : vector<16x64xf32>
    %cst_52 = arith.constant 5.000000e-01 : f32
    %184 = vector.broadcast %cst_52 : f32 to vector<16x64xf32>
    %185 = arith.mulf %184, %183 : vector<16x64xf32>
    %186 = arith.mulf %173, %185 : vector<16x64xf32>
    %187 = arith.truncf %186 : vector<16x64xf32> to vector<16x64xbf16>
    %c0_53 = arith.constant 0 : index
    %c0_54 = arith.constant 0 : index
    %188 = vector.load %arg10[%c0_53, %c0_54] : memref<64x32xbf16, #tpu.memory_space<vmem>>, vector<64x32xbf16>
    %cst_55 = arith.constant dense<0.000000e+00> : vector<16x32xf32>
    %189 = tpu.matmul %187, %188, %cst_55 {dimension_numbers = #tpu.dot_dimension_numbers<[1], [0], [0], [1], [0, 0, 1, 1], [], []>} : vector<16x64xbf16>, vector<64x32xbf16>, vector<16x32xf32> -> vector<16x32xf32>
    %c0_56 = arith.constant 0 : index
    %c0_57 = arith.constant 0 : index
    %190 = vector.load %arg11[%c0_56, %c0_57] : memref<1x32xf32, #tpu.memory_space<vmem>>, vector<1x32xf32>
    %191 = vector.broadcast %190 : vector<1x32xf32> to vector<16x32xf32>
    %192 = arith.addf %189, %191 : vector<16x32xf32>
    %193 = arith.addf %192, %167 : vector<16x32xf32>
    %c0_58 = arith.constant 0 : index
    %c0_59 = arith.constant 0 : index
    %194 = vector.load %arg12[%c0_58, %c0_59] : memref<1x32xf32, #tpu.memory_space<vmem>>, vector<1x32xf32>
    %c0_60 = arith.constant 0 : index
    %c0_61 = arith.constant 0 : index
    %195 = vector.load %arg13[%c0_60, %c0_61] : memref<1x32xf32, #tpu.memory_space<vmem>>, vector<1x32xf32>
    %cst_62 = arith.constant dense<0.000000e+00> : vector<16xf32>
    %196 = vector.multi_reduction <add>, %193, %cst_62 [1] : vector<16x32xf32> to vector<16xf32>
    %197 = vector.shape_cast %196 : vector<16xf32> to vector<16x1xf32>
    %cst_63 = arith.constant 3.200000e+01 : f32
    %198 = vector.broadcast %cst_63 : f32 to vector<16x1xf32>
    %199 = arith.divf %197, %198 : vector<16x1xf32>
    %200 = vector.broadcast %199 : vector<16x1xf32> to vector<16x32xf32>
    %201 = arith.subf %193, %200 : vector<16x32xf32>
    %202 = arith.mulf %201, %201 : vector<16x32xf32>
    %cst_64 = arith.constant dense<0.000000e+00> : vector<16xf32>
    %203 = vector.multi_reduction <add>, %202, %cst_64 [1] : vector<16x32xf32> to vector<16xf32>
    %204 = vector.shape_cast %203 : vector<16xf32> to vector<16x1xf32>
    %cst_65 = arith.constant 3.200000e+01 : f32
    %205 = vector.broadcast %cst_65 : f32 to vector<16x1xf32>
    %206 = arith.divf %204, %205 : vector<16x1xf32>
    %207 = vector.broadcast %199 : vector<16x1xf32> to vector<16x32xf32>
    %208 = arith.subf %193, %207 : vector<16x32xf32>
    %cst_66 = arith.constant 9.99999974E-6 : f32
    %209 = vector.broadcast %cst_66 : f32 to vector<16x1xf32>
    %210 = arith.addf %206, %209 : vector<16x1xf32>
    %211 = math.rsqrt %210 : vector<16x1xf32>
    %212 = vector.broadcast %211 : vector<16x1xf32> to vector<16x32xf32>
    %213 = arith.mulf %208, %212 : vector<16x32xf32>
    %214 = vector.broadcast %194 : vector<1x32xf32> to vector<16x32xf32>
    %215 = arith.mulf %213, %214 : vector<16x32xf32>
    %216 = vector.broadcast %195 : vector<1x32xf32> to vector<16x32xf32>
    %217 = arith.addf %215, %216 : vector<16x32xf32>
    %c0_67 = arith.constant 0 : index
    %c0_68 = arith.constant 0 : index
    %218 = vector.load %arg14[%c0_67, %c0_68] : memref<16x32xf32, #tpu.memory_space<vmem>>, vector<16x32xf32>
    tpu.vector_store %arg14[%c0_67, %c0_68], %217 {strides = array<i32>} : memref<16x32xf32, #tpu.memory_space<vmem>>, vector<16x32xf32>,
    %219 = vector.extract_strided_slice %217 {offsets = [0, 0], sizes = [1, 32], strides = [1, 1]} : vector<16x32xf32> to vector<1x32xf32>
    %cst_69 = arith.constant 0.000000e+00 : f32
    %220 = vector.broadcast %cst_69 : f32 to vector<1x32xf32>
    %221 = arith.cmpf oge, %219, %220 : vector<1x32xf32>
    %cst_70 = arith.constant 2.000000e-01 : f32
    %222 = vector.broadcast %cst_70 : f32 to vector<1x32xf32>
    %223 = arith.mulf %222, %219 : vector<1x32xf32>
    %224 = arith.select %221, %219, %223 : vector<1x32xi1>, vector<1x32xf32>
    %c0_71 = arith.constant 0 : index
    %c0_72 = arith.constant 0 : index
    %225 = vector.load %arg15[%c0_71, %c0_72] : memref<2x32xf32, #tpu.memory_space<vmem>>, vector<1x32xf32>
    tpu.vector_store %arg15[%c0_71, %c0_72], %224 {strides = array<i32>} : memref<2x32xf32, #tpu.memory_space<vmem>>, vector<1x32xf32>,
    %226 = vector.extract_strided_slice %217 {offsets = [8, 0], sizes = [1, 32], strides = [1, 1]} : vector<16x32xf32> to vector<1x32xf32>
    %cst_73 = arith.constant 0.000000e+00 : f32
    %227 = vector.broadcast %cst_73 : f32 to vector<1x32xf32>
    %228 = arith.cmpf oge, %226, %227 : vector<1x32xf32>
    %cst_74 = arith.constant 2.000000e-01 : f32
    %229 = vector.broadcast %cst_74 : f32 to vector<1x32xf32>
    %230 = arith.mulf %229, %226 : vector<1x32xf32>
    %231 = arith.select %228, %226, %230 : vector<1x32xi1>, vector<1x32xf32>
    %c1 = arith.constant 1 : index
    %c0_75 = arith.constant 0 : index
    %232 = vector.load %arg15[%c1, %c0_75] : memref<2x32xf32, #tpu.memory_space<vmem>>, vector<1x32xf32>
    tpu.vector_store %arg15[%c1, %c0_75], %231 {strides = array<i32>} : memref<2x32xf32, #tpu.memory_space<vmem>>, vector<1x32xf32>,
    return
  }
}

</mosaic_0001>

<llo_original>
// kernel: roberta_forward.3
$region0: #{roberta_forward.3}
  #allocation0 [shape = 'u32[]', space=smem, size = 0x4, offset = 0x4, fixed_abs, tag = 'smem constant byte address 0x4 - core index']
  #allocation1 [shape = 'u32[144,128]{1,0:T(1,128)}', space=vmem, size = 0x12000, scoped, tag = 'internal scratch']
  %s0 = inlined_call_operand.vmem [shape: f32[16,32], index: 0, kind: input, shape index: {}]
  %s1 = inlined_call_operand.vmem [shape: f32[1,32], index: 1, kind: input, shape index: {}]
  %s2 = inlined_call_operand.vmem [shape: f32[1,32], index: 2, kind: input, shape index: {}]
  %s3 = inlined_call_operand.vmem [shape: f32[16,32], index: 3, kind: output, shape index: {}]
  %s4 = sld [smem:[#allocation0]]
  $region22: #{roberta_forward.3} parent=0
    _
  %s6 = ssub.s32 1, %s4
  %s7 = scalar_select 0, %s6, %s4
  // Predicated region
  $region2: #{roberta_forward.3} parent=0 // pred_check
    _
  $region3: #{roberta_forward.3} parent=0 // pred_check_branch
    %9 = sbr.rel (0) target = $region5
  $region4: #{roberta_forward.3} parent=0 // pred_region
    _
  $region5: #{roberta_forward.3} parent=0 // pred_fallthru
    _
  // Predicated region
  $region6: #{roberta_forward.3} parent=0 // pred_check
    _
  $region7: #{roberta_forward.3} parent=0 // pred_check_branch
    %11 = sbr.rel (0) target = $region9
  $region8: #{roberta_forward.3} parent=0 // pred_region
    _
  $region9: #{roberta_forward.3} parent=0 // pred_fallthru
    _
  // Predicated region
  $region10: #{roberta_forward.3} parent=0 // pred_check
    _
  $region11: #{roberta_forward.3} parent=0 // pred_check_branch
    %13 = sbr.rel (0) target = $region13
  $region12: #{roberta_forward.3} parent=0 // pred_region
    _
  $region13: #{roberta_forward.3} parent=0 // pred_fallthru
    _
  %v14 = vld [vmem:[%s0] sm:$0xff]
  %v15 = vld [vmem:[%s0 + $0x8] sm:$0xff]
  %v16 = vld [vmem:[%s1] sm:$0x1]
  %v17 = vld [vmem:[%s2] sm:$0x1]
  %vm18 = vcmask 261120
  %v19 = vsel %vm18, %v14, 0.0
  %20 = vadd.xlane.f32.xlu0 %v19
  %v21 = vpop.xlane.xlu0 %20
  %v22 = vsel %vm18, %v15, 0.0
  %23 = vadd.xlane.f32.xlu0 %v22
  %v24 = vpop.xlane.xlu0 %23
  %v25 = vrcp.pop 32.0
  %v26 = vmul.f32 %v21, %v25
  %v27 = vmul.f32 %v24, %v25
  %v28 = vsub.f32 %v14, %v26
  %v29 = vsub.f32 %v15, %v27
  %v30 = vmul.f32 %v28, %v28
  %v31 = vmul.f32 %v29, %v29
  %v32 = vsel %vm18, %v30, 0.0
  %33 = vadd.xlane.f32.xlu0 %v32
  %v34 = vpop.xlane.xlu0 %33
  %v35 = vsel %vm18, %v31, 0.0
  %36 = vadd.xlane.f32.xlu0 %v35
  %v37 = vpop.xlane.xlu0 %36
  %v38 = vmul.f32 %v34, %v25
  %v39 = vmul.f32 %v37, %v25
  %v40 = vadd.f32 %v38, 1e-05
  %v41 = vadd.f32 %v39, 1e-05
  %v42 = vrsqrt.pop %v40
  %v43 = vrsqrt.pop %v41
  %v44 = vmul.f32 %v28, %v42
  %v45 = vmul.f32 %v29, %v43
  %v47 = vlaneseq
  %v48 = vshrl.u32 %v47, 7
  %v49 = vsub.s32 0, %v48
  %v50 = vrot.slane %v16, %v49
  %v52 = vmul.f32 %v44, %v50
  %v53 = vmul.f32 %v45, %v50
  %v55 = vlaneseq
  %v56 = vshrl.u32 %v55, 7
  %v57 = vsub.s32 0, %v56
  %v58 = vrot.slane %v17, %v57
  %v60 = vadd.f32 %v52, %v58
  %v61 = vadd.f32 %v53, %v58
  %62 = vst.msk [vmem:[%s3] sm:$0xff] %vm18, %v60
  %63 = vst.msk [vmem:[%s3 + $0x8] sm:$0xff] %vm18, %v61
  // Predicated region
  $region14: #{roberta_forward.3} parent=0 // pred_check
    _
  $region15: #{roberta_forward.3} parent=0 // pred_check_branch
    %65 = sbr.rel (0) target = $region17
  $region16: #{roberta_forward.3} parent=0 // pred_region
    _
  $region17: #{roberta_forward.3} parent=0 // pred_fallthru
    _
  // Predicated region
  $region18: #{roberta_forward.3} parent=0 // pred_check
    _
  $region19: #{roberta_forward.3} parent=0 // pred_check_branch
    %67 = sbr.rel (0) target = $region21
  $region20: #{roberta_forward.3} parent=0 // pred_region
    _
  $region21: #{roberta_forward.3} parent=0 // pred_fallthru
    _

// kernel: roberta_forward.4
$region0: #{roberta_forward.4}
  #allocation0 [shape = 'u32[]', space=smem, size = 0x4, offset = 0x4, fixed_abs, tag = 'smem constant byte address 0x4 - core index']
  #allocation1 [shape = 'u32[144,128]{1,0:T(1,128)}', space=vmem, size = 0x12000, scoped, tag = 'internal scratch']
  %s0 = inlined_call_operand.vmem [shape: f32[16,32], index: 0, kind: input, shape index: {}]
  %s1 = inlined_call_operand.vmem [shape: f32[2,8], index: 1, kind: input, shape index: {}]
  %s2 = inlined_call_operand.vmem [shape: bf16[32,96], index: 2, kind: input, shape index: {}]
  %s3 = inlined_call_operand.vmem [shape: f32[1,96], index: 3, kind: input, shape index: {}]
  %s4 = inlined_call_operand.vmem [shape: f32[32,32], index: 4, kind: input, shape index: {}]
  %s5 = inlined_call_operand.vmem [shape: f32[1,32], index: 5, kind: input, shape index: {}]
  %s6 = inlined_call_operand.vmem [shape: f32[1,32], index: 6, kind: input, shape index: {}]
  %s7 = inlined_call_operand.vmem [shape: f32[1,32], index: 7, kind: input, shape index: {}]
  %s8 = inlined_call_operand.vmem [shape: bf16[32,64], index: 8, kind: input, shape index: {}]
  %s9 = inlined_call_operand.vmem [shape: f32[1,64], index: 9, kind: input, shape index: {}]
  %s10 = inlined_call_operand.vmem [shape: bf16[64,32], index: 10, kind: input, shape index: {}]
  %s11 = inlined_call_operand.vmem [shape: f32[1,32], index: 11, kind: input, shape index: {}]
  %s12 = inlined_call_operand.vmem [shape: f32[1,32], index: 12, kind: input, shape index: {}]
  %s13 = inlined_call_operand.vmem [shape: f32[1,32], index: 13, kind: input, shape index: {}]
  %s14 = inlined_call_operand.vmem [shape: f32[16,32], index: 14, kind: output, shape index: {}]
  %s15 = sld [smem:[#allocation0]]
  $region66: #{roberta_forward.4} parent=0
    _
  %s17 = ssub.s32 1, %s15
  %s18 = scalar_select 0, %s17, %s15
  // Predicated region
  $region2: #{roberta_forward.4} parent=0 // pred_check
    _
  $region3: #{roberta_forward.4} parent=0 // pred_check_branch
    %20 = sbr.rel (0) target = $region5
  $region4: #{roberta_forward.4} parent=0 // pred_region
    _
  $region5: #{roberta_forward.4} parent=0 // pred_fallthru
    _
  // Predicated region
  $region6: #{roberta_forward.4} parent=0 // pred_check
    _
  $region7: #{roberta_forward.4} parent=0 // pred_check_branch
    %22 = sbr.rel (0) target = $region9
  $region8: #{roberta_forward.4} parent=0 // pred_region
    _
  $region9: #{roberta_forward.4} parent=0 // pred_fallthru
    _
  // Predicated region
  $region10: #{roberta_forward.4} parent=0 // pred_check
    _
  $region11: #{roberta_forward.4} parent=0 // pred_check_branch
    %24 = sbr.rel (0) target = $region13
  $region12: #{roberta_forward.4} parent=0 // pred_region
    _
  $region13: #{roberta_forward.4} parent=0 // pred_fallthru
    _
  // Predicated region
  $region14: #{roberta_forward.4} parent=0 // pred_check
    _
  $region15: #{roberta_forward.4} parent=0 // pred_check_branch
    %26 = sbr.rel (0) target = $region17
  $region16: #{roberta_forward.4} parent=0 // pred_region
    _
  $region17: #{roberta_forward.4} parent=0 // pred_fallthru
    _
  // Predicated region
  $region18: #{roberta_forward.4} parent=0 // pred_check
    _
  $region19: #{roberta_forward.4} parent=0 // pred_check_branch
    %28 = sbr.rel (0) target = $region21
  $region20: #{roberta_forward.4} parent=0 // pred_region
    _
  $region21: #{roberta_forward.4} parent=0 // pred_fallthru
    _
  // Predicated region
  $region22: #{roberta_forward.4} parent=0 // pred_check
    _
  $region23: #{roberta_forward.4} parent=0 // pred_check_branch
    %30 = sbr.rel (0) target = $region25
  $region24: #{roberta_forward.4} parent=0 // pred_region
    _
  $region25: #{roberta_forward.4} parent=0 // pred_fallthru
    _
  // Predicated region
  $region26: #{roberta_forward.4} parent=0 // pred_check
    _
  $region27: #{roberta_forward.4} parent=0 // pred_check_branch
    %32 = sbr.rel (0) target = $region29
  $region28: #{roberta_forward.4} parent=0 // pred_region
    _
  $region29: #{roberta_forward.4} parent=0 // pred_fallthru
    _
  // Predicated region
  $region30: #{roberta_forward.4} parent=0 // pred_check
    _
  $region31: #{roberta_forward.4} parent=0 // pred_check_branch
    %34 = sbr.rel (0) target = $region33
  $region32: #{roberta_forward.4} parent=0 // pred_region
    _
  $region33: #{roberta_forward.4} parent=0 // pred_fallthru
    _
  // Predicated region
  $region34: #{roberta_forward.4} parent=0 // pred_check
    _
  $region35: #{roberta_forward.4} parent=0 // pred_check_branch
    %36 = sbr.rel (0) target = $region37
  $region36: #{roberta_forward.4} parent=0 // pred_region
    _
  $region37: #{roberta_forward.4} parent=0 // pred_fallthru
    _
  // Predicated region
  $region38: #{roberta_forward.4} parent=0 // pred_check
    _
  $region39: #{roberta_forward.4} parent=0 // pred_check_branch
    %38 = sbr.rel (0) target = $region41
  $region40: #{roberta_forward.4} parent=0 // pred_region
    _
  $region41: #{roberta_forward.4} parent=0 // pred_fallthru
    _
  // Predicated region
  $region42: #{roberta_forward.4} parent=0 // pred_check
    _
  $region43: #{roberta_forward.4} parent=0 // pred_check_branch
    %40 = sbr.rel (0) target = $region45
  $region44: #{roberta_forward.4} parent=0 // pred_region
    _
  $region45: #{roberta_forward.4} parent=0 // pred_fallthru
    _
  // Predicated region
  $region46: #{roberta_forward.4} parent=0 // pred_check
    _
  $region47: #{roberta_forward.4} parent=0 // pred_check_branch
    %42 = sbr.rel (0) target = $region49
  $region48: #{roberta_forward.4} parent=0 // pred_region
    _
  $region49: #{roberta_forward.4} parent=0 // pred_fallthru
    _
  // Predicated region
  $region50: #{roberta_forward.4} parent=0 // pred_check
    _
  $region51: #{roberta_forward.4} parent=0 // pred_check_branch
    %44 = sbr.rel (0) target = $region53
  $region52: #{roberta_forward.4} parent=0 // pred_region
    _
  $region53: #{roberta_forward.4} parent=0 // pred_fallthru
    _
  // Predicated region
  $region54: #{roberta_forward.4} parent=0 // pred_check
    _
  $region55: #{roberta_forward.4} parent=0 // pred_check_branch
    %46 = sbr.rel (0) target = $region57
  $region56: #{roberta_forward.4} parent=0 // pred_region
    _
  $region57: #{roberta_forward.4} parent=0 // pred_fallthru
    _
  %v48 = vld [vmem:[%s0] sm:$0xff]
  %v49 = vld [vmem:[%s0 + $0x8] sm:$0xff]
  %v50 = vpack.c.bf16 %v49, %v48
  %v51 = vld [vmem:[%s2] sm:$0xf]
  %v52 = vld [vmem:[%s2 + $0x4] sm:$0xf]
  %v53 = vld [vmem:[%s2 + $0x8] sm:$0xf]
  %v54 = vld [vmem:[%s2 + $0xc] sm:$0xf]
  %v55 = vld [vmem:[%s3] sm:$0x1]
  %v57 = vlaneseq
  %v58 = vshrl.u32 %v57, 7
  %v59 = vsub.s32 0, %v58
  %v60 = vrot.slane %v55, %v59
  %v66 = vunpack.c.l.b16 %v51
  %v67 = vunpack.c.l.b16 %v52
  %v68 = vunpack.c.l.b16 %v53
  %v69 = vunpack.c.l.b16 %v54
  %v70 = vpack.c.b16 %v67, %v66
  %v71 = vpack.c.b16 %v69, %v68
  %vm74 = vcmask 261120
  %v76 = vsel %vm74, %v50, 0
  %78 = vmatprep.subr.bf16.mxu0 0
  %79 = vmatpush1.bf16.msra.mxu0 0
  %80 = vmatprep.subr.bf16.mxu0 0
  %81 = vmatpush1.bf16.msra.mxu0 0
  %82 = vmatprep.subr.bf16.mxu0 0
  %83 = vmatpush1.bf16.msra.mxu0 0
  %84 = vmatprep.subr.bf16.mxu0 0
  %85 = vmatpush1.bf16.msra.mxu0 0
  %86 = vmatprep.subr.bf16.mxu0 0
  %87 = vmatpush1.bf16.msra.mxu0 0
  %88 = vmatprep.subr.bf16.mxu0 0
  %89 = vmatpush1.bf16.msra.mxu0 0
  %90 = vmatprep.subr.bf16.mxu0 0
  %91 = vmatpush1.bf16.msra.mxu0 %v71
  %92 = vmatprep.subr.bf16.mxu0 0
  %93 = vmatpush1.bf16.msra.mxu0 %v70
  %94 = vmatprep.subr.bf16.mxu0 0
  %95 = vmatpush2.bf16.msra.mxu0 0
  %96 = vmatprep.subr.bf16.mxu0 0
  %97 = vmatpush2.bf16.msra.mxu0 0
  %98 = vmatprep.subr.bf16.mxu0 0
  %99 = vmatpush2.bf16.msra.mxu0 0
  %100 = vmatprep.subr.bf16.mxu0 0
  %101 = vmatpush2.bf16.msra.mxu0 0
  %102 = vmatprep.subr.bf16.mxu0 0
  %103 = vmatpush2.bf16.msra.mxu0 0
  %104 = vmatprep.subr.bf16.mxu0 0
  %105 = vmatpush2.bf16.msra.mxu0 0
  %106 = vmatprep.subr.bf16.mxu0 0
  %107 = vmatpush2.bf16.msra.mxu0 0
  %108 = vmatprep.subr.bf16.mxu0 0
  %109 = vmatpush2.bf16.msra.mxu0 0
  %110 = vmatprep.mubr.bf16.mxu0 0
  %111 = vmatmul.mubr.bf16.gmra.mxu0 %v76
  %v112 = vpop.f32.mrf.mxu0
  %v113 = vadd.f32 %v60, %v112
  %v114 = vpop.f32.mrf.mxu0
  %v115 = vpop.f32.mrf.mxu0
  %v116 = vadd.f32 %v60, %v115
  %v117 = vpop.f32.mrf.mxu0
  %118 = vdwg.mxu0
  %v119 = vmul.f32 %v113, 0.35355338
  %v120 = vmul.f32 %v116, 0.35355338
  %v121 = vld [vmem:[%s1] sm:$0x3]
  %v122 = vsub.f32 1.0, %v121
  %v123 = vmul.f32 %v122, -3.4028235e+38
  %v126 = vunpack.c.l.s4 1966171168
  %v127 = vunpack.c.0.s8 %v126
  %v128 = vlaneseq
  %v129 = vshrl.u32 %v128, 7
  %v130 = vsub.s32 %v127, %v129
  %v131 = vrot.slane %v123, %v130
  %v132 = vcombine.high %v131, %v131
  %v134 = vunpack.c.l.s4 1966171168
  %v135 = vunpack.c.0.s8 %v134
  %v136 = vlaneseq
  %v137 = vshrl.u32 %v136, 7
  %v138 = vsub.s32 %v135, %v137
  %v139 = vrot.slane %v131, %v138
  %v141 = vunpack.c.l.s4 1966171168
  %v142 = vunpack.c.0.s8 %v141
  %v143 = vlaneseq
  %v144 = vshrl.u32 %v143, 7
  %v145 = vsub.s32 %v142, %v144
  %v146 = vrot.slane %v132, %v145
  %v147 = vld [vmem:[%s4] sm:$0xff]
  %v148 = vld [vmem:[%s4 + $0x8] sm:$0xff]
  %v149 = vld [vmem:[%s4 + $0x10] sm:$0xff]
  %v150 = vld [vmem:[%s4 + $0x18] sm:$0xff]
  %v151 = vpack.c.bf16 %v119, %v119
  %v152 = vpack.c.bf16 %v120, %v120
  %v153 = vpack.c.bf16 %v113, %v113
  %v154 = vpack.c.bf16 %v116, %v116
  %v155 = vlaneseq
  %v156 = vshrl.u32 %v155, 7
  %v157 = vsub.s32 0, %v156
  %v158 = vrot.slane %v139, %v157
  %v159 = vlaneseq
  %v160 = vshrl.u32 %v159, 7
  %v161 = vsub.s32 0, %v160
  %v162 = vrot.slane %v146, %v161
  %166 = vrot.lane.b32.xlu0 %v153, 96
  %v167 = vpop.permute.xlu0 %166
  %vm168 = vcmask 64512
  %v170 = vsel %vm168, %v151, 0
  %v173 = vsel %vm168, %v167, 0
  %175 = vmatprep.subr.bf16.mxu0 0
  %176 = vmatpush1.bf16.xpose.msra.mxu0 0
  %177 = vmatprep.subr.bf16.mxu0 0
  %178 = vmatpush1.bf16.xpose.msra.mxu0 0
  %179 = vmatprep.subr.bf16.mxu0 0
  %180 = vmatpush1.bf16.xpose.msra.mxu0 0
  %181 = vmatprep.subr.bf16.mxu0 0
  %182 = vmatpush1.bf16.xpose.msra.mxu0 0
  %183 = vmatprep.subr.bf16.mxu0 0
  %184 = vmatpush1.bf16.xpose.msra.mxu0 0
  %185 = vmatprep.subr.bf16.mxu0 0
  %186 = vmatpush1.bf16.xpose.msra.mxu0 0
  %187 = vmatprep.subr.bf16.mxu0 0
  %188 = vmatpush1.bf16.xpose.msra.mxu0 0
  %189 = vmatprep.subr.bf16.mxu0 0
  %190 = vmatpush1.bf16.xpose.msra.mxu0 %v173
  %191 = vmatprep.subr.bf16.mxu0 0
  %192 = vmatpush2.bf16.xpose.msra.mxu0 0
  %193 = vmatprep.subr.bf16.mxu0 0
  %194 = vmatpush2.bf16.xpose.msra.mxu0 0
  %195 = vmatprep.subr.bf16.mxu0 0
  %196 = vmatpush2.bf16.xpose.msra.mxu0 0
  %197 = vmatprep.subr.bf16.mxu0 0
  %198 = vmatpush2.bf16.xpose.msra.mxu0 0
  %199 = vmatprep.subr.bf16.mxu0 0
  %200 = vmatpush2.bf16.xpose.msra.mxu0 0
  %201 = vmatprep.subr.bf16.mxu0 0
  %202 = vmatpush2.bf16.xpose.msra.mxu0 0
  %203 = vmatprep.subr.bf16.mxu0 0
  %204 = vmatpush2.bf16.xpose.msra.mxu0 0
  %205 = vmatprep.subr.bf16.mxu0 0
  %206 = vmatpush2.bf16.xpose.msra.mxu0 0
  %207 = vmatprep.mubr.bf16.mxu0 0
  %208 = vmatmul.mubr.bf16.gmra.mxu0 %v170
  %v209 = vpop.f32.mrf.mxu0
  %v210 = vadd.f32 %v158, %v209
  %v211 = vpop.f32.mrf.mxu0
  %v212 = vpop.f32.mrf.mxu0
  %v213 = vpop.f32.mrf.mxu0
  %214 = vdwg.mxu0
  %216 = vrot.lane.b32.xlu0 %v154, 96
  %v217 = vpop.permute.xlu0 %216
  %v219 = vsel %vm168, %v152, 0
  %v222 = vsel %vm168, %v217, 0
  %224 = vmatprep.subr.bf16.mxu0 0
  %225 = vmatpush1.bf16.xpose.msra.mxu0 0
  %226 = vmatprep.subr.bf16.mxu0 0
  %227 = vmatpush1.bf16.xpose.msra.mxu0 0
  %228 = vmatprep.subr.bf16.mxu0 0
  %229 = vmatpush1.bf16.xpose.msra.mxu0 0
  %230 = vmatprep.subr.bf16.mxu0 0
  %231 = vmatpush1.bf16.xpose.msra.mxu0 0
  %232 = vmatprep.subr.bf16.mxu0 0
  %233 = vmatpush1.bf16.xpose.msra.mxu0 0
  %234 = vmatprep.subr.bf16.mxu0 0
  %235 = vmatpush1.bf16.xpose.msra.mxu0 0
  %236 = vmatprep.subr.bf16.mxu0 0
  %237 = vmatpush1.bf16.xpose.msra.mxu0 0
  %238 = vmatprep.subr.bf16.mxu0 0
  %239 = vmatpush1.bf16.xpose.msra.mxu0 %v222
  %240 = vmatprep.subr.bf16.mxu0 0
  %241 = vmatpush2.bf16.xpose.msra.mxu0 0
  %242 = vmatprep.subr.bf16.mxu0 0
  %243 = vmatpush2.bf16.xpose.msra.mxu0 0
  %244 = vmatprep.subr.bf16.mxu0 0
  %245 = vmatpush2.bf16.xpose.msra.mxu0 0
  %246 = vmatprep.subr.bf16.mxu0 0
  %247 = vmatpush2.bf16.xpose.msra.mxu0 0
  %248 = vmatprep.subr.bf16.mxu0 0
  %249 = vmatpush2.bf16.xpose.msra.mxu0 0
  %250 = vmatprep.subr.bf16.mxu0 0
  %251 = vmatpush2.bf16.xpose.msra.mxu0 0
  %252 = vmatprep.subr.bf16.mxu0 0
  %253 = vmatpush2.bf16.xpose.msra.mxu0 0
  %254 = vmatprep.subr.bf16.mxu0 0
  %255 = vmatpush2.bf16.xpose.msra.mxu0 0
  %256 = vmatprep.mubr.bf16.mxu0 0
  %257 = vmatmul.mubr.bf16.gmra.mxu0 %v219
  %v258 = vpop.f32.mrf.mxu0
  %v259 = vadd.f32 %v162, %v258
  %v260 = vpop.f32.mrf.mxu0
  %v261 = vpop.f32.mrf.mxu0
  %v262 = vpop.f32.mrf.mxu0
  %263 = vdwg.mxu0
  %v264 = vsel %vm168, %v210, -inf
  %265 = vmax.xlane.f32.xlu0 %v264
  %v266 = vpop.xlane.xlu0 %265
  %v267 = vsel %vm168, %v259, -inf
  %268 = vmax.xlane.f32.xlu0 %v267
  %v269 = vpop.xlane.xlu0 %268
  %v270 = vsub.f32 %v210, %v266
  %v271 = vsub.f32 %v259, %v269
  %v272 = vmul.f32 %v270, 1.442695
  %v273 = vpow.pop %v272
  %v274 = vmul.f32 %v271, 1.442695
  %v275 = vpow.pop %v274
  %v276 = vsel %vm168, %v273, 0.0
  %277 = vadd.xlane.f32.xlu0 %v276
  %v278 = vpop.xlane.xlu0 %277
  %v279 = vsel %vm168, %v275, 0.0
  %280 = vadd.xlane.f32.xlu0 %v279
  %v281 = vpop.xlane.xlu0 %280
  %v282 = vrcp.pop %v278
  %v283 = vrcp.pop %v281
  %v284 = vmul.f32 %v273, %v282
  %v285 = vmul.f32 %v275, %v283
  %v286 = vpack.c.bf16 %v284, %v284
  %v287 = vpack.c.bf16 %v285, %v285
  %288 = vrot.lane.b32.xlu0 %v153, 64
  %v289 = vpop.permute.xlu0 %288
  %v291 = vsel %vm168, %v286, 0
  %vm293 = vcmask 1043456
  %v295 = vsel %vm293, %v289, 0
  %297 = vmatprep.subr.bf16.mxu0 0
  %298 = vmatpush1.bf16.msra.mxu0 0
  %299 = vmatprep.subr.bf16.mxu0 0
  %300 = vmatpush1.bf16.msra.mxu0 0
  %301 = vmatprep.subr.bf16.mxu0 0
  %302 = vmatpush1.bf16.msra.mxu0 0
  %303 = vmatprep.subr.bf16.mxu0 0
  %304 = vmatpush1.bf16.msra.mxu0 0
  %305 = vmatprep.subr.bf16.mxu0 0
  %306 = vmatpush1.bf16.msra.mxu0 0
  %307 = vmatprep.subr.bf16.mxu0 0
  %308 = vmatpush1.bf16.msra.mxu0 0
  %309 = vmatprep.subr.bf16.mxu0 0
  %310 = vmatpush1.bf16.msra.mxu0 0
  %311 = vmatprep.subr.bf16.mxu0 0
  %312 = vmatpush1.bf16.msra.mxu0 %v295
  %313 = vmatprep.subr.bf16.mxu0 0
  %314 = vmatpush2.bf16.msra.mxu0 0
  %315 = vmatprep.subr.bf16.mxu0 0
  %316 = vmatpush2.bf16.msra.mxu0 0
  %317 = vmatprep.subr.bf16.mxu0 0
  %318 = vmatpush2.bf16.msra.mxu0 0
  %319 = vmatprep.subr.bf16.mxu0 0
  %320 = vmatpush2.bf16.msra.mxu0 0
  %321 = vmatprep.subr.bf16.mxu0 0
  %322 = vmatpush2.bf16.msra.mxu0 0
  %323 = vmatprep.subr.bf16.mxu0 0
  %324 = vmatpush2.bf16.msra.mxu0 0
  %325 = vmatprep.subr.bf16.mxu0 0
  %326 = vmatpush2.bf16.msra.mxu0 0
  %327 = vmatprep.subr.bf16.mxu0 0
  %328 = vmatpush2.bf16.msra.mxu0 0
  %329 = vmatprep.mubr.bf16.mxu0 0
  %330 = vmatmul.mubr.bf16.gmra.mxu0 %v291
  %v331 = vpop.f32.mrf.mxu0
  %v332 = vadd.f32 0.0, %v331
  %v333 = vpop.f32.mrf.mxu0
  %v334 = vpop.f32.mrf.mxu0
  %v335 = vpop.f32.mrf.mxu0
  %336 = vdwg.mxu0
  %337 = vrot.lane.b32.xlu0 %v154, 64
  %v338 = vpop.permute.xlu0 %337
  %v340 = vsel %vm168, %v287, 0
  %v343 = vsel %vm293, %v338, 0
  %345 = vmatprep.subr.bf16.mxu0 0
  %346 = vmatpush1.bf16.msra.mxu0 0
  %347 = vmatprep.subr.bf16.mxu0 0
  %348 = vmatpush1.bf16.msra.mxu0 0
  %349 = vmatprep.subr.bf16.mxu0 0
  %350 = vmatpush1.bf16.msra.mxu0 0
  %351 = vmatprep.subr.bf16.mxu0 0
  %352 = vmatpush1.bf16.msra.mxu0 0
  %353 = vmatprep.subr.bf16.mxu0 0
  %354 = vmatpush1.bf16.msra.mxu0 0
  %355 = vmatprep.subr.bf16.mxu0 0
  %356 = vmatpush1.bf16.msra.mxu0 0
  %357 = vmatprep.subr.bf16.mxu0 0
  %358 = vmatpush1.bf16.msra.mxu0 0
  %359 = vmatprep.subr.bf16.mxu0 0
  %360 = vmatpush1.bf16.msra.mxu0 %v343
  %361 = vmatprep.subr.bf16.mxu0 0
  %362 = vmatpush2.bf16.msra.mxu0 0
  %363 = vmatprep.subr.bf16.mxu0 0
  %364 = vmatpush2.bf16.msra.mxu0 0
  %365 = vmatprep.subr.bf16.mxu0 0
  %366 = vmatpush2.bf16.msra.mxu0 0
  %367 = vmatprep.subr.bf16.mxu0 0
  %368 = vmatpush2.bf16.msra.mxu0 0
  %369 = vmatprep.subr.bf16.mxu0 0
  %370 = vmatpush2.bf16.msra.mxu0 0
  %371 = vmatprep.subr.bf16.mxu0 0
  %372 = vmatpush2.bf16.msra.mxu0 0
  %373 = vmatprep.subr.bf16.mxu0 0
  %374 = vmatpush2.bf16.msra.mxu0 0
  %375 = vmatprep.subr.bf16.mxu0 0
  %376 = vmatpush2.bf16.msra.mxu0 0
  %377 = vmatprep.mubr.bf16.mxu0 0
  %378 = vmatmul.mubr.bf16.gmra.mxu0 %v340
  %v379 = vpop.f32.mrf.mxu0
  %v380 = vadd.f32 0.0, %v379
  %v381 = vpop.f32.mrf.mxu0
  %v382 = vpop.f32.mrf.mxu0
  %v383 = vpop.f32.mrf.mxu0
  %384 = vdwg.mxu0
  %v385 = vpack.c.bf16 %v380, %v332
  %v386 = vpack.c.bf16 %v147, %v147
  %388 = vrot.lane.b32.xlu0 %v151, 120
  %v389 = vpop.permute.xlu0 %388
  %390 = vrot.lane.b32.xlu0 %v153, 88
  %v391 = vpop.permute.xlu0 %390
  %v393 = vsel %vm168, %v389, 0
  %v396 = vsel %vm168, %v391, 0
  %398 = vmatprep.subr.bf16.mxu0 0
  %399 = vmatpush1.bf16.xpose.msra.mxu0 0
  %400 = vmatprep.subr.bf16.mxu0 0
  %401 = vmatpush1.bf16.xpose.msra.mxu0 0
  %402 = vmatprep.subr.bf16.mxu0 0
  %403 = vmatpush1.bf16.xpose.msra.mxu0 0
  %404 = vmatprep.subr.bf16.mxu0 0
  %405 = vmatpush1.bf16.xpose.msra.mxu0 0
  %406 = vmatprep.subr.bf16.mxu0 0
  %407 = vmatpush1.bf16.xpose.msra.mxu0 0
  %408 = vmatprep.subr.bf16.mxu0 0
  %409 = vmatpush1.bf16.xpose.msra.mxu0 0
  %410 = vmatprep.subr.bf16.mxu0 0
  %411 = vmatpush1.bf16.xpose.msra.mxu0 0
  %412 = vmatprep.subr.bf16.mxu0 0
  %413 = vmatpush1.bf16.xpose.msra.mxu0 %v396
  %414 = vmatprep.subr.bf16.mxu0 0
  %415 = vmatpush2.bf16.xpose.msra.mxu0 0
  %416 = vmatprep.subr.bf16.mxu0 0
  %417 = vmatpush2.bf16.xpose.msra.mxu0 0
  %418 = vmatprep.subr.bf16.mxu0 0
  %419 = vmatpush2.bf16.xpose.msra.mxu0 0
  %420 = vmatprep.subr.bf16.mxu0 0
  %421 = vmatpush2.bf16.xpose.msra.mxu0 0
  %422 = vmatprep.subr.bf16.mxu0 0
  %423 = vmatpush2.bf16.xpose.msra.mxu0 0
  %424 = vmatprep.subr.bf16.mxu0 0
  %425 = vmatpush2.bf16.xpose.msra.mxu0 0
  %426 = vmatprep.subr.bf16.mxu0 0
  %427 = vmatpush2.bf16.xpose.msra.mxu0 0
  %428 = vmatprep.subr.bf16.mxu0 0
  %429 = vmatpush2.bf16.xpose.msra.mxu0 0
  %430 = vmatprep.mubr.bf16.mxu0 0
  %431 = vmatmul.mubr.bf16.gmra.mxu0 %v393
  %v432 = vpop.f32.mrf.mxu0
  %v433 = vadd.f32 %v158, %v432
  %v434 = vpop.f32.mrf.mxu0
  %v435 = vpop.f32.mrf.mxu0
  %v436 = vpop.f32.mrf.mxu0
  %437 = vdwg.mxu0
  %439 = vrot.lane.b32.xlu0 %v152, 120
  %v440 = vpop.permute.xlu0 %439
  %441 = vrot.lane.b32.xlu0 %v154, 88
  %v442 = vpop.permute.xlu0 %441
  %v444 = vsel %vm168, %v440, 0
  %v447 = vsel %vm168, %v442, 0
  %449 = vmatprep.subr.bf16.mxu0 0
  %450 = vmatpush1.bf16.xpose.msra.mxu0 0
  %451 = vmatprep.subr.bf16.mxu0 0
  %452 = vmatpush1.bf16.xpose.msra.mxu0 0
  %453 = vmatprep.subr.bf16.mxu0 0
  %454 = vmatpush1.bf16.xpose.msra.mxu0 0
  %455 = vmatprep.subr.bf16.mxu0 0
  %456 = vmatpush1.bf16.xpose.msra.mxu0 0
  %457 = vmatprep.subr.bf16.mxu0 0
  %458 = vmatpush1.bf16.xpose.msra.mxu0 0
  %459 = vmatprep.subr.bf16.mxu0 0
  %460 = vmatpush1.bf16.xpose.msra.mxu0 0
  %461 = vmatprep.subr.bf16.mxu0 0
  %462 = vmatpush1.bf16.xpose.msra.mxu0 0
  %463 = vmatprep.subr.bf16.mxu0 0
  %464 = vmatpush1.bf16.xpose.msra.mxu0 %v447
  %465 = vmatprep.subr.bf16.mxu0 0
  %466 = vmatpush2.bf16.xpose.msra.mxu0 0
  %467 = vmatprep.subr.bf16.mxu0 0
  %468 = vmatpush2.bf16.xpose.msra.mxu0 0
  %469 = vmatprep.subr.bf16.mxu0 0
  %470 = vmatpush2.bf16.xpose.msra.mxu0 0
  %471 = vmatprep.subr.bf16.mxu0 0
  %472 = vmatpush2.bf16.xpose.msra.mxu0 0
  %473 = vmatprep.subr.bf16.mxu0 0
  %474 = vmatpush2.bf16.xpose.msra.mxu0 0
  %475 = vmatprep.subr.bf16.mxu0 0
  %476 = vmatpush2.bf16.xpose.msra.mxu0 0
  %477 = vmatprep.subr.bf16.mxu0 0
  %478 = vmatpush2.bf16.xpose.msra.mxu0 0
  %479 = vmatprep.subr.bf16.mxu0 0
  %480 = vmatpush2.bf16.xpose.msra.mxu0 0
  %481 = vmatprep.mubr.bf16.mxu0 0
  %482 = vmatmul.mubr.bf16.gmra.mxu0 %v444
  %v483 = vpop.f32.mrf.mxu0
  %v484 = vadd.f32 %v162, %v483
  %v485 = vpop.f32.mrf.mxu0
  %v486 = vpop.f32.mrf.mxu0
  %v487 = vpop.f32.mrf.mxu0
  %488 = vdwg.mxu0
  %v489 = vsel %vm168, %v433, -inf
  %490 = vmax.xlane.f32.xlu0 %v489
  %v491 = vpop.xlane.xlu0 %490
  %v492 = vsel %vm168, %v484, -inf
  %493 = vmax.xlane.f32.xlu0 %v492
  %v494 = vpop.xlane.xlu0 %493
  %v495 = vsub.f32 %v433, %v491
  %v496 = vsub.f32 %v484, %v494
  %v497 = vmul.f32 %v495, 1.442695
  %v498 = vpow.pop %v497
  %v499 = vmul.f32 %v496, 1.442695
  %v500 = vpow.pop %v499
  %v501 = vsel %vm168, %v498, 0.0
  %502 = vadd.xlane.f32.xlu0 %v501
  %v503 = vpop.xlane.xlu0 %502
  %v504 = vsel %vm168, %v500, 0.0
  %505 = vadd.xlane.f32.xlu0 %v504
  %v506 = vpop.xlane.xlu0 %505
  %v507 = vrcp.pop %v503
  %v508 = vrcp.pop %v506
  %v509 = vmul.f32 %v498, %v507
  %v510 = vmul.f32 %v500, %v508
  %v511 = vpack.c.bf16 %v509, %v509
  %v512 = vpack.c.bf16 %v510, %v510
  %513 = vrot.lane.b32.xlu0 %v153, 56
  %v514 = vpop.permute.xlu0 %513
  %v516 = vsel %vm168, %v511, 0
  %v519 = vsel %vm293, %v514, 0
  %521 = vmatprep.subr.bf16.mxu0 0
  %522 = vmatpush1.bf16.msra.mxu0 0
  %523 = vmatprep.subr.bf16.mxu0 0
  %524 = vmatpush1.bf16.msra.mxu0 0
  %525 = vmatprep.subr.bf16.mxu0 0
  %526 = vmatpush1.bf16.msra.mxu0 0
  %527 = vmatprep.subr.bf16.mxu0 0
  %528 = vmatpush1.bf16.msra.mxu0 0
  %529 = vmatprep.subr.bf16.mxu0 0
  %530 = vmatpush1.bf16.msra.mxu0 0
  %531 = vmatprep.subr.bf16.mxu0 0
  %532 = vmatpush1.bf16.msra.mxu0 0
  %533 = vmatprep.subr.bf16.mxu0 0
  %534 = vmatpush1.bf16.msra.mxu0 0
  %535 = vmatprep.subr.bf16.mxu0 0
  %536 = vmatpush1.bf16.msra.mxu0 %v519
  %537 = vmatprep.subr.bf16.mxu0 0
  %538 = vmatpush2.bf16.msra.mxu0 0
  %539 = vmatprep.subr.bf16.mxu0 0
  %540 = vmatpush2.bf16.msra.mxu0 0
  %541 = vmatprep.subr.bf16.mxu0 0
  %542 = vmatpush2.bf16.msra.mxu0 0
  %543 = vmatprep.subr.bf16.mxu0 0
  %544 = vmatpush2.bf16.msra.mxu0 0
  %545 = vmatprep.subr.bf16.mxu0 0
  %546 = vmatpush2.bf16.msra.mxu0 0
  %547 = vmatprep.subr.bf16.mxu0 0
  %548 = vmatpush2.bf16.msra.mxu0 0
  %549 = vmatprep.subr.bf16.mxu0 0
  %550 = vmatpush2.bf16.msra.mxu0 0
  %551 = vmatprep.subr.bf16.mxu0 0
  %552 = vmatpush2.bf16.msra.mxu0 0
  %553 = vmatprep.mubr.bf16.mxu0 0
  %554 = vmatmul.mubr.bf16.gmra.mxu0 %v516
  %v555 = vpop.f32.mrf.mxu0
  %v556 = vadd.f32 0.0, %v555
  %v557 = vpop.f32.mrf.mxu0
  %v558 = vpop.f32.mrf.mxu0
  %v559 = vpop.f32.mrf.mxu0
  %560 = vdwg.mxu0
  %561 = vrot.lane.b32.xlu0 %v154, 56
  %v562 = vpop.permute.xlu0 %561
  %v564 = vsel %vm168, %v512, 0
  %v567 = vsel %vm293, %v562, 0
  %569 = vmatprep.subr.bf16.mxu0 0
  %570 = vmatpush1.bf16.msra.mxu0 0
  %571 = vmatprep.subr.bf16.mxu0 0
  %572 = vmatpush1.bf16.msra.mxu0 0
  %573 = vmatprep.subr.bf16.mxu0 0
  %574 = vmatpush1.bf16.msra.mxu0 0
  %575 = vmatprep.subr.bf16.mxu0 0
  %576 = vmatpush1.bf16.msra.mxu0 0
  %577 = vmatprep.subr.bf16.mxu0 0
  %578 = vmatpush1.bf16.msra.mxu0 0
  %579 = vmatprep.subr.bf16.mxu0 0
  %580 = vmatpush1.bf16.msra.mxu0 0
  %581 = vmatprep.subr.bf16.mxu0 0
  %582 = vmatpush1.bf16.msra.mxu0 0
  %583 = vmatprep.subr.bf16.mxu0 0
  %584 = vmatpush1.bf16.msra.mxu0 %v567
  %585 = vmatprep.subr.bf16.mxu0 0
  %586 = vmatpush2.bf16.msra.mxu0 0
  %587 = vmatprep.subr.bf16.mxu0 0
  %588 = vmatpush2.bf16.msra.mxu0 0
  %589 = vmatprep.subr.bf16.mxu0 0
  %590 = vmatpush2.bf16.msra.mxu0 0
  %591 = vmatprep.subr.bf16.mxu0 0
  %592 = vmatpush2.bf16.msra.mxu0 0
  %593 = vmatprep.subr.bf16.mxu0 0
  %594 = vmatpush2.bf16.msra.mxu0 0
  %595 = vmatprep.subr.bf16.mxu0 0
  %596 = vmatpush2.bf16.msra.mxu0 0
  %597 = vmatprep.subr.bf16.mxu0 0
  %598 = vmatpush2.bf16.msra.mxu0 0
  %599 = vmatprep.subr.bf16.mxu0 0
  %600 = vmatpush2.bf16.msra.mxu0 0
  %601 = vmatprep.mubr.bf16.mxu0 0
  %602 = vmatmul.mubr.bf16.gmra.mxu0 %v564
  %v603 = vpop.f32.mrf.mxu0
  %v604 = vadd.f32 0.0, %v603
  %v605 = vpop.f32.mrf.mxu0
  %v606 = vpop.f32.mrf.mxu0
  %v607 = vpop.f32.mrf.mxu0
  %608 = vdwg.mxu0
  %v609 = vpack.c.bf16 %v604, %v556
  %v610 = vpack.c.bf16 %v148, %v148
  %v612 = vsel %vm168, %v609, 0
  %v615 = vsel %vm293, %v610, 0
  %617 = vmatprep.subr.bf16.mxu0 0
  %618 = vmatpush1.bf16.msra.mxu0 0
  %619 = vmatprep.subr.bf16.mxu0 0
  %620 = vmatpush1.bf16.msra.mxu0 0
  %621 = vmatprep.subr.bf16.mxu0 0
  %622 = vmatpush1.bf16.msra.mxu0 0
  %623 = vmatprep.subr.bf16.mxu0 0
  %624 = vmatpush1.bf16.msra.mxu0 0
  %625 = vmatprep.subr.bf16.mxu0 0
  %626 = vmatpush1.bf16.msra.mxu0 0
  %627 = vmatprep.subr.bf16.mxu0 0
  %628 = vmatpush1.bf16.msra.mxu0 0
  %629 = vmatprep.subr.bf16.mxu0 0
  %630 = vmatpush1.bf16.msra.mxu0 0
  %631 = vmatprep.subr.bf16.mxu0 0
  %632 = vmatpush1.bf16.msra.mxu0 %v615
  %633 = vmatprep.subr.bf16.mxu0 0
  %634 = vmatpush2.bf16.msra.mxu0 0
  %635 = vmatprep.subr.bf16.mxu0 0
  %636 = vmatpush2.bf16.msra.mxu0 0
  %637 = vmatprep.subr.bf16.mxu0 0
  %638 = vmatpush2.bf16.msra.mxu0 0
  %639 = vmatprep.subr.bf16.mxu0 0
  %640 = vmatpush2.bf16.msra.mxu0 0
  %641 = vmatprep.subr.bf16.mxu0 0
  %642 = vmatpush2.bf16.msra.mxu0 0
  %643 = vmatprep.subr.bf16.mxu0 0
  %644 = vmatpush2.bf16.msra.mxu0 0
  %645 = vmatprep.subr.bf16.mxu0 0
  %646 = vmatpush2.bf16.msra.mxu0 0
  %647 = vmatprep.subr.bf16.mxu0 0
  %648 = vmatpush2.bf16.msra.mxu0 0
  %649 = vmatprep.mubr.bf16.mxu0 0
  %650 = vmatmul.mubr.bf16.gmra.mxu0 %v612
  %v651 = vpop.f32.mrf.mxu0
  %v652 = vadd.f32 0.0, %v651
  %v653 = vpop.f32.mrf.mxu0
  %v654 = vpop.f32.mrf.mxu0
  %v655 = vadd.f32 0.0, %v654
  %v656 = vpop.f32.mrf.mxu0
  %657 = vdwg.mxu0
  %v659 = vsel %vm168, %v385, 0
  %v662 = vsel %vm293, %v386, 0
  %664 = vmatprep.subr.bf16.mxu0 0
  %665 = vmatpush1.bf16.msra.mxu0 0
  %666 = vmatprep.subr.bf16.mxu0 0
  %667 = vmatpush1.bf16.msra.mxu0 0
  %668 = vmatprep.subr.bf16.mxu0 0
  %669 = vmatpush1.bf16.msra.mxu0 0
  %670 = vmatprep.subr.bf16.mxu0 0
  %671 = vmatpush1.bf16.msra.mxu0 0
  %672 = vmatprep.subr.bf16.mxu0 0
  %673 = vmatpush1.bf16.msra.mxu0 0
  %674 = vmatprep.subr.bf16.mxu0 0
  %675 = vmatpush1.bf16.msra.mxu0 0
  %676 = vmatprep.subr.bf16.mxu0 0
  %677 = vmatpush1.bf16.msra.mxu0 0
  %678 = vmatprep.subr.bf16.mxu0 0
  %679 = vmatpush1.bf16.msra.mxu0 %v662
  %680 = vmatprep.subr.bf16.mxu0 0
  %681 = vmatpush2.bf16.msra.mxu0 0
  %682 = vmatprep.subr.bf16.mxu0 0
  %683 = vmatpush2.bf16.msra.mxu0 0
  %684 = vmatprep.subr.bf16.mxu0 0
  %685 = vmatpush2.bf16.msra.mxu0 0
  %686 = vmatprep.subr.bf16.mxu0 0
  %687 = vmatpush2.bf16.msra.mxu0 0
  %688 = vmatprep.subr.bf16.mxu0 0
  %689 = vmatpush2.bf16.msra.mxu0 0
  %690 = vmatprep.subr.bf16.mxu0 0
  %691 = vmatpush2.bf16.msra.mxu0 0
  %692 = vmatprep.subr.bf16.mxu0 0
  %693 = vmatpush2.bf16.msra.mxu0 0
  %694 = vmatprep.subr.bf16.mxu0 0
  %695 = vmatpush2.bf16.msra.mxu0 0
  %696 = vmatprep.mubr.bf16.mxu0 0
  %697 = vmatmul.mubr.bf16.gmra.mxu0 %v659
  %v698 = vpop.f32.mrf.mxu0
  %v699 = vadd.f32 %v652, %v698
  %v700 = vpop.f32.mrf.mxu0
  %v701 = vpop.f32.mrf.mxu0
  %v702 = vadd.f32 %v655, %v701
  %v703 = vpop.f32.mrf.mxu0
  %704 = vdwg.mxu0
  %705 = vrot.lane.b32.xlu0 %v151, 112
  %v706 = vpop.permute.xlu0 %705
  %707 = vrot.lane.b32.xlu0 %v153, 80
  %v708 = vpop.permute.xlu0 %707
  %v710 = vsel %vm168, %v706, 0
  %v713 = vsel %vm168, %v708, 0
  %715 = vmatprep.subr.bf16.mxu0 0
  %716 = vmatpush1.bf16.xpose.msra.mxu0 0
  %717 = vmatprep.subr.bf16.mxu0 0
  %718 = vmatpush1.bf16.xpose.msra.mxu0 0
  %719 = vmatprep.subr.bf16.mxu0 0
  %720 = vmatpush1.bf16.xpose.msra.mxu0 0
  %721 = vmatprep.subr.bf16.mxu0 0
  %722 = vmatpush1.bf16.xpose.msra.mxu0 0
  %723 = vmatprep.subr.bf16.mxu0 0
  %724 = vmatpush1.bf16.xpose.msra.mxu0 0
  %725 = vmatprep.subr.bf16.mxu0 0
  %726 = vmatpush1.bf16.xpose.msra.mxu0 0
  %727 = vmatprep.subr.bf16.mxu0 0
  %728 = vmatpush1.bf16.xpose.msra.mxu0 0
  %729 = vmatprep.subr.bf16.mxu0 0
  %730 = vmatpush1.bf16.xpose.msra.mxu0 %v713
  %731 = vmatprep.subr.bf16.mxu0 0
  %732 = vmatpush2.bf16.xpose.msra.mxu0 0
  %733 = vmatprep.subr.bf16.mxu0 0
  %734 = vmatpush2.bf16.xpose.msra.mxu0 0
  %735 = vmatprep.subr.bf16.mxu0 0
  %736 = vmatpush2.bf16.xpose.msra.mxu0 0
  %737 = vmatprep.subr.bf16.mxu0 0
  %738 = vmatpush2.bf16.xpose.msra.mxu0 0
  %739 = vmatprep.subr.bf16.mxu0 0
  %740 = vmatpush2.bf16.xpose.msra.mxu0 0
  %741 = vmatprep.subr.bf16.mxu0 0
  %742 = vmatpush2.bf16.xpose.msra.mxu0 0
  %743 = vmatprep.subr.bf16.mxu0 0
  %744 = vmatpush2.bf16.xpose.msra.mxu0 0
  %745 = vmatprep.subr.bf16.mxu0 0
  %746 = vmatpush2.bf16.xpose.msra.mxu0 0
  %747 = vmatprep.mubr.bf16.mxu0 0
  %748 = vmatmul.mubr.bf16.gmra.mxu0 %v710
  %v749 = vpop.f32.mrf.mxu0
  %v750 = vadd.f32 %v158, %v749
  %v751 = vpop.f32.mrf.mxu0
  %v752 = vpop.f32.mrf.mxu0
  %v753 = vpop.f32.mrf.mxu0
  %754 = vdwg.mxu0
  %755 = vrot.lane.b32.xlu0 %v152, 112
  %v756 = vpop.permute.xlu0 %755
  %757 = vrot.lane.b32.xlu0 %v154, 80
  %v758 = vpop.permute.xlu0 %757
  %v760 = vsel %vm168, %v756, 0
  %v763 = vsel %vm168, %v758, 0
  %765 = vmatprep.subr.bf16.mxu0 0
  %766 = vmatpush1.bf16.xpose.msra.mxu0 0
  %767 = vmatprep.subr.bf16.mxu0 0
  %768 = vmatpush1.bf16.xpose.msra.mxu0 0
  %769 = vmatprep.subr.bf16.mxu0 0
  %770 = vmatpush1.bf16.xpose.msra.mxu0 0
  %771 = vmatprep.subr.bf16.mxu0 0
  %772 = vmatpush1.bf16.xpose.msra.mxu0 0
  %773 = vmatprep.subr.bf16.mxu0 0
  %774 = vmatpush1.bf16.xpose.msra.mxu0 0
  %775 = vmatprep.subr.bf16.mxu0 0
  %776 = vmatpush1.bf16.xpose.msra.mxu0 0
  %777 = vmatprep.subr.bf16.mxu0 0
  %778 = vmatpush1.bf16.xpose.msra.mxu0 0
  %779 = vmatprep.subr.bf16.mxu0 0
  %780 = vmatpush1.bf16.xpose.msra.mxu0 %v763
  %781 = vmatprep.subr.bf16.mxu0 0
  %782 = vmatpush2.bf16.xpose.msra.mxu0 0
  %783 = vmatprep.subr.bf16.mxu0 0
  %784 = vmatpush2.bf16.xpose.msra.mxu0 0
  %785 = vmatprep.subr.bf16.mxu0 0
  %786 = vmatpush2.bf16.xpose.msra.mxu0 0
  %787 = vmatprep.subr.bf16.mxu0 0
  %788 = vmatpush2.bf16.xpose.msra.mxu0 0
  %789 = vmatprep.subr.bf16.mxu0 0
  %790 = vmatpush2.bf16.xpose.msra.mxu0 0
  %791 = vmatprep.subr.bf16.mxu0 0
  %792 = vmatpush2.bf16.xpose.msra.mxu0 0
  %793 = vmatprep.subr.bf16.mxu0 0
  %794 = vmatpush2.bf16.xpose.msra.mxu0 0
  %795 = vmatprep.subr.bf16.mxu0 0
  %796 = vmatpush2.bf16.xpose.msra.mxu0 0
  %797 = vmatprep.mubr.bf16.mxu0 0
  %798 = vmatmul.mubr.bf16.gmra.mxu0 %v760
  %v799 = vpop.f32.mrf.mxu0
  %v800 = vadd.f32 %v162, %v799
  %v801 = vpop.f32.mrf.mxu0
  %v802 = vpop.f32.mrf.mxu0
  %v803 = vpop.f32.mrf.mxu0
  %804 = vdwg.mxu0
  %v805 = vsel %vm168, %v750, -inf
  %806 = vmax.xlane.f32.xlu0 %v805
  %v807 = vpop.xlane.xlu0 %806
  %v808 = vsel %vm168, %v800, -inf
  %809 = vmax.xlane.f32.xlu0 %v808
  %v810 = vpop.xlane.xlu0 %809
  %v811 = vsub.f32 %v750, %v807
  %v812 = vsub.f32 %v800, %v810
  %v813 = vmul.f32 %v811, 1.442695
  %v814 = vpow.pop %v813
  %v815 = vmul.f32 %v812, 1.442695
  %v816 = vpow.pop %v815
  %v817 = vsel %vm168, %v814, 0.0
  %818 = vadd.xlane.f32.xlu0 %v817
  %v819 = vpop.xlane.xlu0 %818
  %v820 = vsel %vm168, %v816, 0.0
  %821 = vadd.xlane.f32.xlu0 %v820
  %v822 = vpop.xlane.xlu0 %821
  %v823 = vrcp.pop %v819
  %v824 = vrcp.pop %v822
  %v825 = vmul.f32 %v814, %v823
  %v826 = vmul.f32 %v816, %v824
  %v827 = vpack.c.bf16 %v825, %v825
  %v828 = vpack.c.bf16 %v826, %v826
  %829 = vrot.lane.b32.xlu0 %v153, 48
  %v830 = vpop.permute.xlu0 %829
  %v832 = vsel %vm168, %v827, 0
  %v835 = vsel %vm293, %v830, 0
  %837 = vmatprep.subr.bf16.mxu0 0
  %838 = vmatpush1.bf16.msra.mxu0 0
  %839 = vmatprep.subr.bf16.mxu0 0
  %840 = vmatpush1.bf16.msra.mxu0 0
  %841 = vmatprep.subr.bf16.mxu0 0
  %842 = vmatpush1.bf16.msra.mxu0 0
  %843 = vmatprep.subr.bf16.mxu0 0
  %844 = vmatpush1.bf16.msra.mxu0 0
  %845 = vmatprep.subr.bf16.mxu0 0
  %846 = vmatpush1.bf16.msra.mxu0 0
  %847 = vmatprep.subr.bf16.mxu0 0
  %848 = vmatpush1.bf16.msra.mxu0 0
  %849 = vmatprep.subr.bf16.mxu0 0
  %850 = vmatpush1.bf16.msra.mxu0 0
  %851 = vmatprep.subr.bf16.mxu0 0
  %852 = vmatpush1.bf16.msra.mxu0 %v835
  %853 = vmatprep.subr.bf16.mxu0 0
  %854 = vmatpush2.bf16.msra.mxu0 0
  %855 = vmatprep.subr.bf16.mxu0 0
  %856 = vmatpush2.bf16.msra.mxu0 0
  %857 = vmatprep.subr.bf16.mxu0 0
  %858 = vmatpush2.bf16.msra.mxu0 0
  %859 = vmatprep.subr.bf16.mxu0 0
  %860 = vmatpush2.bf16.msra.mxu0 0
  %861 = vmatprep.subr.bf16.mxu0 0
  %862 = vmatpush2.bf16.msra.mxu0 0
  %863 = vmatprep.subr.bf16.mxu0 0
  %864 = vmatpush2.bf16.msra.mxu0 0
  %865 = vmatprep.subr.bf16.mxu0 0
  %866 = vmatpush2.bf16.msra.mxu0 0
  %867 = vmatprep.subr.bf16.mxu0 0
  %868 = vmatpush2.bf16.msra.mxu0 0
  %869 = vmatprep.mubr.bf16.mxu0 0
  %870 = vmatmul.mubr.bf16.gmra.mxu0 %v832
  %v871 = vpop.f32.mrf.mxu0
  %v872 = vadd.f32 0.0, %v871
  %v873 = vpop.f32.mrf.mxu0
  %v874 = vpop.f32.mrf.mxu0
  %v875 = vpop.f32.mrf.mxu0
  %876 = vdwg.mxu0
  %877 = vrot.lane.b32.xlu0 %v154, 48
  %v878 = vpop.permute.xlu0 %877
  %v880 = vsel %vm168, %v828, 0
  %v883 = vsel %vm293, %v878, 0
  %885 = vmatprep.subr.bf16.mxu0 0
  %886 = vmatpush1.bf16.msra.mxu0 0
  %887 = vmatprep.subr.bf16.mxu0 0
  %888 = vmatpush1.bf16.msra.mxu0 0
  %889 = vmatprep.subr.bf16.mxu0 0
  %890 = vmatpush1.bf16.msra.mxu0 0
  %891 = vmatprep.subr.bf16.mxu0 0
  %892 = vmatpush1.bf16.msra.mxu0 0
  %893 = vmatprep.subr.bf16.mxu0 0
  %894 = vmatpush1.bf16.msra.mxu0 0
  %895 = vmatprep.subr.bf16.mxu0 0
  %896 = vmatpush1.bf16.msra.mxu0 0
  %897 = vmatprep.subr.bf16.mxu0 0
  %898 = vmatpush1.bf16.msra.mxu0 0
  %899 = vmatprep.subr.bf16.mxu0 0
  %900 = vmatpush1.bf16.msra.mxu0 %v883
  %901 = vmatprep.subr.bf16.mxu0 0
  %902 = vmatpush2.bf16.msra.mxu0 0
  %903 = vmatprep.subr.bf16.mxu0 0
  %904 = vmatpush2.bf16.msra.mxu0 0
  %905 = vmatprep.subr.bf16.mxu0 0
  %906 = vmatpush2.bf16.msra.mxu0 0
  %907 = vmatprep.subr.bf16.mxu0 0
  %908 = vmatpush2.bf16.msra.mxu0 0
  %909 = vmatprep.subr.bf16.mxu0 0
  %910 = vmatpush2.bf16.msra.mxu0 0
  %911 = vmatprep.subr.bf16.mxu0 0
  %912 = vmatpush2.bf16.msra.mxu0 0
  %913 = vmatprep.subr.bf16.mxu0 0
  %914 = vmatpush2.bf16.msra.mxu0 0
  %915 = vmatprep.subr.bf16.mxu0 0
  %916 = vmatpush2.bf16.msra.mxu0 0
  %917 = vmatprep.mubr.bf16.mxu0 0
  %918 = vmatmul.mubr.bf16.gmra.mxu0 %v880
  %v919 = vpop.f32.mrf.mxu0
  %v920 = vadd.f32 0.0, %v919
  %v921 = vpop.f32.mrf.mxu0
  %v922 = vpop.f32.mrf.mxu0
  %v923 = vpop.f32.mrf.mxu0
  %924 = vdwg.mxu0
  %v925 = vpack.c.bf16 %v920, %v872
  %v926 = vpack.c.bf16 %v149, %v149
  %v928 = vsel %vm168, %v925, 0
  %v931 = vsel %vm293, %v926, 0
  %933 = vmatprep.subr.bf16.mxu0 0
  %934 = vmatpush1.bf16.msra.mxu0 0
  %935 = vmatprep.subr.bf16.mxu0 0
  %936 = vmatpush1.bf16.msra.mxu0 0
  %937 = vmatprep.subr.bf16.mxu0 0
  %938 = vmatpush1.bf16.msra.mxu0 0
  %939 = vmatprep.subr.bf16.mxu0 0
  %940 = vmatpush1.bf16.msra.mxu0 0
  %941 = vmatprep.subr.bf16.mxu0 0
  %942 = vmatpush1.bf16.msra.mxu0 0
  %943 = vmatprep.subr.bf16.mxu0 0
  %944 = vmatpush1.bf16.msra.mxu0 0
  %945 = vmatprep.subr.bf16.mxu0 0
  %946 = vmatpush1.bf16.msra.mxu0 0
  %947 = vmatprep.subr.bf16.mxu0 0
  %948 = vmatpush1.bf16.msra.mxu0 %v931
  %949 = vmatprep.subr.bf16.mxu0 0
  %950 = vmatpush2.bf16.msra.mxu0 0
  %951 = vmatprep.subr.bf16.mxu0 0
  %952 = vmatpush2.bf16.msra.mxu0 0
  %953 = vmatprep.subr.bf16.mxu0 0
  %954 = vmatpush2.bf16.msra.mxu0 0
  %955 = vmatprep.subr.bf16.mxu0 0
  %956 = vmatpush2.bf16.msra.mxu0 0
  %957 = vmatprep.subr.bf16.mxu0 0
  %958 = vmatpush2.bf16.msra.mxu0 0
  %959 = vmatprep.subr.bf16.mxu0 0
  %960 = vmatpush2.bf16.msra.mxu0 0
  %961 = vmatprep.subr.bf16.mxu0 0
  %962 = vmatpush2.bf16.msra.mxu0 0
  %963 = vmatprep.subr.bf16.mxu0 0
  %964 = vmatpush2.bf16.msra.mxu0 0
  %965 = vmatprep.mubr.bf16.mxu0 0
  %966 = vmatmul.mubr.bf16.gmra.mxu0 %v928
  %v967 = vpop.f32.mrf.mxu0
  %v968 = vadd.f32 0.0, %v967
  %v969 = vpop.f32.mrf.mxu0
  %v970 = vpop.f32.mrf.mxu0
  %v971 = vadd.f32 0.0, %v970
  %v972 = vpop.f32.mrf.mxu0
  %973 = vdwg.mxu0
  %v974 = vadd.f32 %v699, %v968
  %v975 = vadd.f32 %v702, %v971
  %976 = vrot.lane.b32.xlu0 %v151, 104
  %v977 = vpop.permute.xlu0 %976
  %978 = vrot.lane.b32.xlu0 %v153, 72
  %v979 = vpop.permute.xlu0 %978
  %v981 = vsel %vm168, %v977, 0
  %v984 = vsel %vm168, %v979, 0
  %986 = vmatprep.subr.bf16.mxu0 0
  %987 = vmatpush1.bf16.xpose.msra.mxu0 0
  %988 = vmatprep.subr.bf16.mxu0 0
  %989 = vmatpush1.bf16.xpose.msra.mxu0 0
  %990 = vmatprep.subr.bf16.mxu0 0
  %991 = vmatpush1.bf16.xpose.msra.mxu0 0
  %992 = vmatprep.subr.bf16.mxu0 0
  %993 = vmatpush1.bf16.xpose.msra.mxu0 0
  %994 = vmatprep.subr.bf16.mxu0 0
  %995 = vmatpush1.bf16.xpose.msra.mxu0 0
  %996 = vmatprep.subr.bf16.mxu0 0
  %997 = vmatpush1.bf16.xpose.msra.mxu0 0
  %998 = vmatprep.subr.bf16.mxu0 0
  %999 = vmatpush1.bf16.xpose.msra.mxu0 0
  %1000 = vmatprep.subr.bf16.mxu0 0
  %1001 = vmatpush1.bf16.xpose.msra.mxu0 %v984
  %1002 = vmatprep.subr.bf16.mxu0 0
  %1003 = vmatpush2.bf16.xpose.msra.mxu0 0
  %1004 = vmatprep.subr.bf16.mxu0 0
  %1005 = vmatpush2.bf16.xpose.msra.mxu0 0
  %1006 = vmatprep.subr.bf16.mxu0 0
  %1007 = vmatpush2.bf16.xpose.msra.mxu0 0
  %1008 = vmatprep.subr.bf16.mxu0 0
  %1009 = vmatpush2.bf16.xpose.msra.mxu0 0
  %1010 = vmatprep.subr.bf16.mxu0 0
  %1011 = vmatpush2.bf16.xpose.msra.mxu0 0
  %1012 = vmatprep.subr.bf16.mxu0 0
  %1013 = vmatpush2.bf16.xpose.msra.mxu0 0
  %1014 = vmatprep.subr.bf16.mxu0 0
  %1015 = vmatpush2.bf16.xpose.msra.mxu0 0
  %1016 = vmatprep.subr.bf16.mxu0 0
  %1017 = vmatpush2.bf16.xpose.msra.mxu0 0
  %1018 = vmatprep.mubr.bf16.mxu0 0
  %1019 = vmatmul.mubr.bf16.gmra.mxu0 %v981
  %v1020 = vpop.f32.mrf.mxu0
  %v1021 = vadd.f32 %v158, %v1020
  %v1022 = vpop.f32.mrf.mxu0
  %v1023 = vpop.f32.mrf.mxu0
  %v1024 = vpop.f32.mrf.mxu0
  %1025 = vdwg.mxu0
  %1026 = vrot.lane.b32.xlu0 %v152, 104
  %v1027 = vpop.permute.xlu0 %1026
  %1028 = vrot.lane.b32.xlu0 %v154, 72
  %v1029 = vpop.permute.xlu0 %1028
  %v1031 = vsel %vm168, %v1027, 0
  %v1034 = vsel %vm168, %v1029, 0
  %1036 = vmatprep.subr.bf16.mxu0 0
  %1037 = vmatpush1.bf16.xpose.msra.mxu0 0
  %1038 = vmatprep.subr.bf16.mxu0 0
  %1039 = vmatpush1.bf16.xpose.msra.mxu0 0
  %1040 = vmatprep.subr.bf16.mxu0 0
  %1041 = vmatpush1.bf16.xpose.msra.mxu0 0
  %1042 = vmatprep.subr.bf16.mxu0 0
  %1043 = vmatpush1.bf16.xpose.msra.mxu0 0
  %1044 = vmatprep.subr.bf16.mxu0 0
  %1045 = vmatpush1.bf16.xpose.msra.mxu0 0
  %1046 = vmatprep.subr.bf16.mxu0 0
  %1047 = vmatpush1.bf16.xpose.msra.mxu0 0
  %1048 = vmatprep.subr.bf16.mxu0 0
  %1049 = vmatpush1.bf16.xpose.msra.mxu0 0
  %1050 = vmatprep.subr.bf16.mxu0 0
  %1051 = vmatpush1.bf16.xpose.msra.mxu0 %v1034
  %1052 = vmatprep.subr.bf16.mxu0 0
  %1053 = vmatpush2.bf16.xpose.msra.mxu0 0
  %1054 = vmatprep.subr.bf16.mxu0 0
  %1055 = vmatpush2.bf16.xpose.msra.mxu0 0
  %1056 = vmatprep.subr.bf16.mxu0 0
  %1057 = vmatpush2.bf16.xpose.msra.mxu0 0
  %1058 = vmatprep.subr.bf16.mxu0 0
  %1059 = vmatpush2.bf16.xpose.msra.mxu0 0
  %1060 = vmatprep.subr.bf16.mxu0 0
  %1061 = vmatpush2.bf16.xpose.msra.mxu0 0
  %1062 = vmatprep.subr.bf16.mxu0 0
  %1063 = vmatpush2.bf16.xpose.msra.mxu0 0
  %1064 = vmatprep.subr.bf16.mxu0 0
  %1065 = vmatpush2.bf16.xpose.msra.mxu0 0
  %1066 = vmatprep.subr.bf16.mxu0 0
  %1067 = vmatpush2.bf16.xpose.msra.mxu0 0
  %1068 = vmatprep.mubr.bf16.mxu0 0
  %1069 = vmatmul.mubr.bf16.gmra.mxu0 %v1031
  %v1070 = vpop.f32.mrf.mxu0
  %v1071 = vadd.f32 %v162, %v1070
  %v1072 = vpop.f32.mrf.mxu0
  %v1073 = vpop.f32.mrf.mxu0
  %v1074 = vpop.f32.mrf.mxu0
  %1075 = vdwg.mxu0
  %v1076 = vsel %vm168, %v1021, -inf
  %1077 = vmax.xlane.f32.xlu0 %v1076
  %v1078 = vpop.xlane.xlu0 %1077
  %v1079 = vsel %vm168, %v1071, -inf
  %1080 = vmax.xlane.f32.xlu0 %v1079
  %v1081 = vpop.xlane.xlu0 %1080
  %v1082 = vsub.f32 %v1021, %v1078
  %v1083 = vsub.f32 %v1071, %v1081
  %v1084 = vmul.f32 %v1082, 1.442695
  %v1085 = vpow.pop %v1084
  %v1086 = vmul.f32 %v1083, 1.442695
  %v1087 = vpow.pop %v1086
  %v1088 = vsel %vm168, %v1085, 0.0
  %1089 = vadd.xlane.f32.xlu0 %v1088
  %v1090 = vpop.xlane.xlu0 %1089
  %v1091 = vsel %vm168, %v1087, 0.0
  %1092 = vadd.xlane.f32.xlu0 %v1091
  %v1093 = vpop.xlane.xlu0 %1092
  %v1094 = vrcp.pop %v1090
  %v1095 = vrcp.pop %v1093
  %v1096 = vmul.f32 %v1085, %v1094
  %v1097 = vmul.f32 %v1087, %v1095
  %v1098 = vpack.c.bf16 %v1096, %v1096
  %v1099 = vpack.c.bf16 %v1097, %v1097
  %1100 = vrot.lane.b32.xlu0 %v153, 40
  %v1101 = vpop.permute.xlu0 %1100
  %v1103 = vsel %vm168, %v1098, 0
  %v1106 = vsel %vm293, %v1101, 0
  %1108 = vmatprep.subr.bf16.mxu0 0
  %1109 = vmatpush1.bf16.msra.mxu0 0
  %1110 = vmatprep.subr.bf16.mxu0 0
  %1111 = vmatpush1.bf16.msra.mxu0 0
  %1112 = vmatprep.subr.bf16.mxu0 0
  %1113 = vmatpush1.bf16.msra.mxu0 0
  %1114 = vmatprep.subr.bf16.mxu0 0
  %1115 = vmatpush1.bf16.msra.mxu0 0
  %1116 = vmatprep.subr.bf16.mxu0 0
  %1117 = vmatpush1.bf16.msra.mxu0 0
  %1118 = vmatprep.subr.bf16.mxu0 0
  %1119 = vmatpush1.bf16.msra.mxu0 0
  %1120 = vmatprep.subr.bf16.mxu0 0
  %1121 = vmatpush1.bf16.msra.mxu0 0
  %1122 = vmatprep.subr.bf16.mxu0 0
  %1123 = vmatpush1.bf16.msra.mxu0 %v1106
  %1124 = vmatprep.subr.bf16.mxu0 0
  %1125 = vmatpush2.bf16.msra.mxu0 0
  %1126 = vmatprep.subr.bf16.mxu0 0
  %1127 = vmatpush2.bf16.msra.mxu0 0
  %1128 = vmatprep.subr.bf16.mxu0 0
  %1129 = vmatpush2.bf16.msra.mxu0 0
  %1130 = vmatprep.subr.bf16.mxu0 0
  %1131 = vmatpush2.bf16.msra.mxu0 0
  %1132 = vmatprep.subr.bf16.mxu0 0
  %1133 = vmatpush2.bf16.msra.mxu0 0
  %1134 = vmatprep.subr.bf16.mxu0 0
  %1135 = vmatpush2.bf16.msra.mxu0 0
  %1136 = vmatprep.subr.bf16.mxu0 0
  %1137 = vmatpush2.bf16.msra.mxu0 0
  %1138 = vmatprep.subr.bf16.mxu0 0
  %1139 = vmatpush2.bf16.msra.mxu0 0
  %1140 = vmatprep.mubr.bf16.mxu0 0
  %1141 = vmatmul.mubr.bf16.gmra.mxu0 %v1103
  %v1142 = vpop.f32.mrf.mxu0
  %v1143 = vadd.f32 0.0, %v1142
  %v1144 = vpop.f32.mrf.mxu0
  %v1145 = vpop.f32.mrf.mxu0
  %v1146 = vpop.f32.mrf.mxu0
  %1147 = vdwg.mxu0
  %1148 = vrot.lane.b32.xlu0 %v154, 40
  %v1149 = vpop.permute.xlu0 %1148
  %v1151 = vsel %vm168, %v1099, 0
  %v1154 = vsel %vm293, %v1149, 0
  %1156 = vmatprep.subr.bf16.mxu0 0
  %1157 = vmatpush1.bf16.msra.mxu0 0
  %1158 = vmatprep.subr.bf16.mxu0 0
  %1159 = vmatpush1.bf16.msra.mxu0 0
  %1160 = vmatprep.subr.bf16.mxu0 0
  %1161 = vmatpush1.bf16.msra.mxu0 0
  %1162 = vmatprep.subr.bf16.mxu0 0
  %1163 = vmatpush1.bf16.msra.mxu0 0
  %1164 = vmatprep.subr.bf16.mxu0 0
  %1165 = vmatpush1.bf16.msra.mxu0 0
  %1166 = vmatprep.subr.bf16.mxu0 0
  %1167 = vmatpush1.bf16.msra.mxu0 0
  %1168 = vmatprep.subr.bf16.mxu0 0
  %1169 = vmatpush1.bf16.msra.mxu0 0
  %1170 = vmatprep.subr.bf16.mxu0 0
  %1171 = vmatpush1.bf16.msra.mxu0 %v1154
  %1172 = vmatprep.subr.bf16.mxu0 0
  %1173 = vmatpush2.bf16.msra.mxu0 0
  %1174 = vmatprep.subr.bf16.mxu0 0
  %1175 = vmatpush2.bf16.msra.mxu0 0
  %1176 = vmatprep.subr.bf16.mxu0 0
  %1177 = vmatpush2.bf16.msra.mxu0 0
  %1178 = vmatprep.subr.bf16.mxu0 0
  %1179 = vmatpush2.bf16.msra.mxu0 0
  %1180 = vmatprep.subr.bf16.mxu0 0
  %1181 = vmatpush2.bf16.msra.mxu0 0
  %1182 = vmatprep.subr.bf16.mxu0 0
  %1183 = vmatpush2.bf16.msra.mxu0 0
  %1184 = vmatprep.subr.bf16.mxu0 0
  %1185 = vmatpush2.bf16.msra.mxu0 0
  %1186 = vmatprep.subr.bf16.mxu0 0
  %1187 = vmatpush2.bf16.msra.mxu0 0
  %1188 = vmatprep.mubr.bf16.mxu0 0
  %1189 = vmatmul.mubr.bf16.gmra.mxu0 %v1151
  %v1190 = vpop.f32.mrf.mxu0
  %v1191 = vadd.f32 0.0, %v1190
  %v1192 = vpop.f32.mrf.mxu0
  %v1193 = vpop.f32.mrf.mxu0
  %v1194 = vpop.f32.mrf.mxu0
  %1195 = vdwg.mxu0
  %v1196 = vpack.c.bf16 %v1191, %v1143
  %v1197 = vpack.c.bf16 %v150, %v150
  %v1199 = vsel %vm168, %v1196, 0
  %v1202 = vsel %vm293, %v1197, 0
  %1204 = vmatprep.subr.bf16.mxu0 0
  %1205 = vmatpush1.bf16.msra.mxu0 0
  %1206 = vmatprep.subr.bf16.mxu0 0
  %1207 = vmatpush1.bf16.msra.mxu0 0
  %1208 = vmatprep.subr.bf16.mxu0 0
  %1209 = vmatpush1.bf16.msra.mxu0 0
  %1210 = vmatprep.subr.bf16.mxu0 0
  %1211 = vmatpush1.bf16.msra.mxu0 0
  %1212 = vmatprep.subr.bf16.mxu0 0
  %1213 = vmatpush1.bf16.msra.mxu0 0
  %1214 = vmatprep.subr.bf16.mxu0 0
  %1215 = vmatpush1.bf16.msra.mxu0 0
  %1216 = vmatprep.subr.bf16.mxu0 0
  %1217 = vmatpush1.bf16.msra.mxu0 0
  %1218 = vmatprep.subr.bf16.mxu0 0
  %1219 = vmatpush1.bf16.msra.mxu0 %v1202
  %1220 = vmatprep.subr.bf16.mxu0 0
  %1221 = vmatpush2.bf16.msra.mxu0 0
  %1222 = vmatprep.subr.bf16.mxu0 0
  %1223 = vmatpush2.bf16.msra.mxu0 0
  %1224 = vmatprep.subr.bf16.mxu0 0
  %1225 = vmatpush2.bf16.msra.mxu0 0
  %1226 = vmatprep.subr.bf16.mxu0 0
  %1227 = vmatpush2.bf16.msra.mxu0 0
  %1228 = vmatprep.subr.bf16.mxu0 0
  %1229 = vmatpush2.bf16.msra.mxu0 0
  %1230 = vmatprep.subr.bf16.mxu0 0
  %1231 = vmatpush2.bf16.msra.mxu0 0
  %1232 = vmatprep.subr.bf16.mxu0 0
  %1233 = vmatpush2.bf16.msra.mxu0 0
  %1234 = vmatprep.subr.bf16.mxu0 0
  %1235 = vmatpush2.bf16.msra.mxu0 0
  %1236 = vmatprep.mubr.bf16.mxu0 0
  %1237 = vmatmul.mubr.bf16.gmra.mxu0 %v1199
  %v1238 = vpop.f32.mrf.mxu0
  %v1239 = vadd.f32 0.0, %v1238
  %v1240 = vpop.f32.mrf.mxu0
  %v1241 = vpop.f32.mrf.mxu0
  %v1242 = vadd.f32 0.0, %v1241
  %v1243 = vpop.f32.mrf.mxu0
  %1244 = vdwg.mxu0
  %v1245 = vadd.f32 %v974, %v1239
  %v1246 = vadd.f32 %v975, %v1242
  %v1247 = vld [vmem:[%s5] sm:$0x1]
  %v1249 = vlaneseq
  %v1250 = vshrl.u32 %v1249, 7
  %v1251 = vsub.s32 0, %v1250
  %v1252 = vrot.slane %v1247, %v1251
  %v1254 = vadd.f32 %v1245, %v1252
  %v1255 = vadd.f32 %v1246, %v1252
  %v1256 = vadd.f32 %v1254, %v48
  %v1257 = vadd.f32 %v1255, %v49
  %v1258 = vld [vmem:[%s6] sm:$0x1]
  %v1259 = vld [vmem:[%s7] sm:$0x1]
  %v1260 = vsel %vm74, %v1256, 0.0
  %1261 = vadd.xlane.f32.xlu0 %v1260
  %v1262 = vpop.xlane.xlu0 %1261
  %v1263 = vsel %vm74, %v1257, 0.0
  %1264 = vadd.xlane.f32.xlu0 %v1263
  %v1265 = vpop.xlane.xlu0 %1264
  %v1266 = vrcp.pop 32.0
  %v1267 = vmul.f32 %v1262, %v1266
  %v1268 = vmul.f32 %v1265, %v1266
  %v1269 = vsub.f32 %v1256, %v1267
  %v1270 = vsub.f32 %v1257, %v1268
  %v1271 = vmul.f32 %v1269, %v1269
  %v1272 = vmul.f32 %v1270, %v1270
  %v1273 = vsel %vm74, %v1271, 0.0
  %1274 = vadd.xlane.f32.xlu0 %v1273
  %v1275 = vpop.xlane.xlu0 %1274
  %v1276 = vsel %vm74, %v1272, 0.0
  %1277 = vadd.xlane.f32.xlu0 %v1276
  %v1278 = vpop.xlane.xlu0 %1277
  %v1279 = vmul.f32 %v1275, %v1266
  %v1280 = vmul.f32 %v1278, %v1266
  %v1281 = vadd.f32 %v1279, 1e-05
  %v1282 = vadd.f32 %v1280, 1e-05
  %v1283 = vrsqrt.pop %v1281
  %v1284 = vrsqrt.pop %v1282
  %v1285 = vmul.f32 %v1269, %v1283
  %v1286 = vmul.f32 %v1270, %v1284
  %v1288 = vlaneseq
  %v1289 = vshrl.u32 %v1288, 7
  %v1290 = vsub.s32 0, %v1289
  %v1291 = vrot.slane %v1258, %v1290
  %v1293 = vmul.f32 %v1285, %v1291
  %v1294 = vmul.f32 %v1286, %v1291
  %v1296 = vlaneseq
  %v1297 = vshrl.u32 %v1296, 7
  %v1298 = vsub.s32 0, %v1297
  %v1299 = vrot.slane %v1259, %v1298
  %v1301 = vadd.f32 %v1293, %v1299
  %v1302 = vadd.f32 %v1294, %v1299
  %v1303 = vpack.c.bf16 %v1302, %v1301
  %v1304 = vld [vmem:[%s8] sm:$0xf]
  %v1305 = vld [vmem:[%s8 + $0x4] sm:$0xf]
  %v1306 = vld [vmem:[%s8 + $0x8] sm:$0xf]
  %v1307 = vld [vmem:[%s8 + $0xc] sm:$0xf]
  %v1308 = vld [vmem:[%s9] sm:$0x1]
  %v1310 = vlaneseq
  %v1311 = vshrl.u32 %v1310, 7
  %v1312 = vsub.s32 0, %v1311
  %v1313 = vrot.slane %v1308, %v1312
  %v1319 = vunpack.c.l.b16 %v1304
  %v1320 = vunpack.c.l.b16 %v1305
  %v1321 = vunpack.c.l.b16 %v1306
  %v1322 = vunpack.c.l.b16 %v1307
  %v1323 = vpack.c.b16 %v1320, %v1319
  %v1324 = vpack.c.b16 %v1322, %v1321
  %v1328 = vsel %vm74, %v1303, 0
  %1330 = vmatprep.subr.bf16.mxu0 0
  %1331 = vmatpush1.bf16.msra.mxu0 0
  %1332 = vmatprep.subr.bf16.mxu0 0
  %1333 = vmatpush1.bf16.msra.mxu0 0
  %1334 = vmatprep.subr.bf16.mxu0 0
  %1335 = vmatpush1.bf16.msra.mxu0 0
  %1336 = vmatprep.subr.bf16.mxu0 0
  %1337 = vmatpush1.bf16.msra.mxu0 0
  %1338 = vmatprep.subr.bf16.mxu0 0
  %1339 = vmatpush1.bf16.msra.mxu0 0
  %1340 = vmatprep.subr.bf16.mxu0 0
  %1341 = vmatpush1.bf16.msra.mxu0 0
  %1342 = vmatprep.subr.bf16.mxu0 0
  %1343 = vmatpush1.bf16.msra.mxu0 %v1324
  %1344 = vmatprep.subr.bf16.mxu0 0
  %1345 = vmatpush1.bf16.msra.mxu0 %v1323
  %1346 = vmatprep.subr.bf16.mxu0 0
  %1347 = vmatpush2.bf16.msra.mxu0 0
  %1348 = vmatprep.subr.bf16.mxu0 0
  %1349 = vmatpush2.bf16.msra.mxu0 0
  %1350 = vmatprep.subr.bf16.mxu0 0
  %1351 = vmatpush2.bf16.msra.mxu0 0
  %1352 = vmatprep.subr.bf16.mxu0 0
  %1353 = vmatpush2.bf16.msra.mxu0 0
  %1354 = vmatprep.subr.bf16.mxu0 0
  %1355 = vmatpush2.bf16.msra.mxu0 0
  %1356 = vmatprep.subr.bf16.mxu0 0
  %1357 = vmatpush2.bf16.msra.mxu0 0
  %1358 = vmatprep.subr.bf16.mxu0 0
  %1359 = vmatpush2.bf16.msra.mxu0 0
  %1360 = vmatprep.subr.bf16.mxu0 0
  %1361 = vmatpush2.bf16.msra.mxu0 0
  %1362 = vmatprep.mubr.bf16.mxu0 0
  %1363 = vmatmul.mubr.bf16.gmra.mxu0 %v1328
  %v1364 = vpop.f32.mrf.mxu0
  %v1365 = vadd.f32 %v1313, %v1364
  %v1366 = vpop.f32.mrf.mxu0
  %v1367 = vpop.f32.mrf.mxu0
  %v1368 = vadd.f32 %v1313, %v1367
  %v1369 = vpop.f32.mrf.mxu0
  %1370 = vdwg.mxu0
  %v1371 = vmul.f32 %v1365, %v1365
  %v1372 = vmul.f32 %v1368, %v1368
  %v1373 = vmul.f32 %v1365, %v1371
  %v1374 = vmul.f32 %v1368, %v1372
  %v1375 = vmul.f32 %v1373, 0.044715
  %v1376 = vmul.f32 %v1374, 0.044715
  %v1377 = vadd.f32 %v1365, %v1375
  %v1378 = vadd.f32 %v1368, %v1376
  %v1379 = vmul.f32 %v1377, 0.7978846
  %v1380 = vmul.f32 %v1378, 0.7978846
  %v1381 = vtanh.pop %v1379
  %v1382 = vtanh.pop %v1380
  %v1383 = vadd.f32 %v1381, 1.0
  %v1384 = vadd.f32 %v1382, 1.0
  %v1385 = vmul.f32 %v1383, 0.5
  %v1386 = vmul.f32 %v1384, 0.5
  %v1387 = vmul.f32 %v1365, %v1385
  %v1388 = vmul.f32 %v1368, %v1386
  %v1389 = vpack.c.bf16 %v1388, %v1387
  %v1390 = vld [vmem:[%s10] sm:$0xf]
  %v1391 = vld [vmem:[%s10 + $0x4] sm:$0xf]
  %v1392 = vld [vmem:[%s10 + $0x8] sm:$0xf]
  %v1393 = vld [vmem:[%s10 + $0xc] sm:$0xf]
  %v1394 = vld [vmem:[%s10 + $0x10] sm:$0xf]
  %v1395 = vld [vmem:[%s10 + $0x14] sm:$0xf]
  %v1396 = vld [vmem:[%s10 + $0x18] sm:$0xf]
  %v1397 = vld [vmem:[%s10 + $0x1c] sm:$0xf]
  %v1398 = vld [vmem:[%s11] sm:$0x1]
  %v1400 = vlaneseq
  %v1401 = vshrl.u32 %v1400, 7
  %v1402 = vsub.s32 0, %v1401
  %v1403 = vrot.slane %v1398, %v1402
  %v1413 = vunpack.c.l.b16 %v1390
  %v1414 = vunpack.c.l.b16 %v1391
  %v1415 = vunpack.c.l.b16 %v1392
  %v1416 = vunpack.c.l.b16 %v1393
  %v1417 = vunpack.c.l.b16 %v1394
  %v1418 = vunpack.c.l.b16 %v1395
  %v1419 = vunpack.c.l.b16 %v1396
  %v1420 = vunpack.c.l.b16 %v1397
  %v1421 = vpack.c.b16 %v1414, %v1413
  %v1422 = vpack.c.b16 %v1416, %v1415
  %v1423 = vpack.c.b16 %v1418, %v1417
  %v1424 = vpack.c.b16 %v1420, %v1419
  %vm1429 = vcmask 523264
  %v1431 = vsel %vm1429, %v1389, 0
  %1433 = vmatprep.subr.bf16.mxu0 0
  %1434 = vmatpush1.bf16.msra.mxu0 0
  %1435 = vmatprep.subr.bf16.mxu0 0
  %1436 = vmatpush1.bf16.msra.mxu0 0
  %1437 = vmatprep.subr.bf16.mxu0 0
  %1438 = vmatpush1.bf16.msra.mxu0 0
  %1439 = vmatprep.subr.bf16.mxu0 0
  %1440 = vmatpush1.bf16.msra.mxu0 0
  %1441 = vmatprep.subr.bf16.mxu0 0
  %1442 = vmatpush1.bf16.msra.mxu0 %v1424
  %1443 = vmatprep.subr.bf16.mxu0 0
  %1444 = vmatpush1.bf16.msra.mxu0 %v1423
  %1445 = vmatprep.subr.bf16.mxu0 0
  %1446 = vmatpush1.bf16.msra.mxu0 %v1422
  %1447 = vmatprep.subr.bf16.mxu0 0
  %1448 = vmatpush1.bf16.msra.mxu0 %v1421
  %1449 = vmatprep.subr.bf16.mxu0 0
  %1450 = vmatpush2.bf16.msra.mxu0 0
  %1451 = vmatprep.subr.bf16.mxu0 0
  %1452 = vmatpush2.bf16.msra.mxu0 0
  %1453 = vmatprep.subr.bf16.mxu0 0
  %1454 = vmatpush2.bf16.msra.mxu0 0
  %1455 = vmatprep.subr.bf16.mxu0 0
  %1456 = vmatpush2.bf16.msra.mxu0 0
  %1457 = vmatprep.subr.bf16.mxu0 0
  %1458 = vmatpush2.bf16.msra.mxu0 0
  %1459 = vmatprep.subr.bf16.mxu0 0
  %1460 = vmatpush2.bf16.msra.mxu0 0
  %1461 = vmatprep.subr.bf16.mxu0 0
  %1462 = vmatpush2.bf16.msra.mxu0 0
  %1463 = vmatprep.subr.bf16.mxu0 0
  %1464 = vmatpush2.bf16.msra.mxu0 0
  %1465 = vmatprep.mubr.bf16.mxu0 0
  %1466 = vmatmul.mubr.bf16.gmra.mxu0 %v1431
  %v1467 = vpop.f32.mrf.mxu0
  %v1468 = vadd.f32 %v1403, %v1467
  %v1469 = vpop.f32.mrf.mxu0
  %v1470 = vpop.f32.mrf.mxu0
  %v1471 = vadd.f32 %v1403, %v1470
  %v1472 = vpop.f32.mrf.mxu0
  %1473 = vdwg.mxu0
  %v1474 = vadd.f32 %v1468, %v1301
  %v1475 = vadd.f32 %v1471, %v1302
  %v1476 = vld [vmem:[%s12] sm:$0x1]
  %v1477 = vld [vmem:[%s13] sm:$0x1]
  %v1478 = vsel %vm74, %v1474, 0.0
  %1479 = vadd.xlane.f32.xlu0 %v1478
  %v1480 = vpop.xlane.xlu0 %1479
  %v1481 = vsel %vm74, %v1475, 0.0
  %1482 = vadd.xlane.f32.xlu0 %v1481
  %v1483 = vpop.xlane.xlu0 %1482
  %v1484 = vmul.f32 %v1480, %v1266
  %v1485 = vmul.f32 %v1483, %v1266
  %v1486 = vsub.f32 %v1474, %v1484
  %v1487 = vsub.f32 %v1475, %v1485
  %v1488 = vmul.f32 %v1486, %v1486
  %v1489 = vmul.f32 %v1487, %v1487
  %v1490 = vsel %vm74, %v1488, 0.0
  %1491 = vadd.xlane.f32.xlu0 %v1490
  %v1492 = vpop.xlane.xlu0 %1491
  %v1493 = vsel %vm74, %v1489, 0.0
  %1494 = vadd.xlane.f32.xlu0 %v1493
  %v1495 = vpop.xlane.xlu0 %1494
  %v1496 = vmul.f32 %v1492, %v1266
  %v1497 = vmul.f32 %v1495, %v1266
  %v1498 = vadd.f32 %v1496, 1e-05
  %v1499 = vadd.f32 %v1497, 1e-05
  %v1500 = vrsqrt.pop %v1498
  %v1501 = vrsqrt.pop %v1499
  %v1502 = vmul.f32 %v1486, %v1500
  %v1503 = vmul.f32 %v1487, %v1501
  %v1505 = vlaneseq
  %v1506 = vshrl.u32 %v1505, 7
  %v1507 = vsub.s32 0, %v1506
  %v1508 = vrot.slane %v1476, %v1507
  %v1510 = vmul.f32 %v1502, %v1508
  %v1511 = vmul.f32 %v1503, %v1508
  %v1513 = vlaneseq
  %v1514 = vshrl.u32 %v1513, 7
  %v1515 = vsub.s32 0, %v1514
  %v1516 = vrot.slane %v1477, %v1515
  %v1518 = vadd.f32 %v1510, %v1516
  %v1519 = vadd.f32 %v1511, %v1516
  %1520 = vst.msk [vmem:[%s14] sm:$0xff] %vm74, %v1518
  %1521 = vst.msk [vmem:[%s14 + $0x8] sm:$0xff] %vm74, %v1519
  // Predicated region
  $region58: #{roberta_forward.4} parent=0 // pred_check
    _
  $region59: #{roberta_forward.4} parent=0 // pred_check_branch
    %1523 = sbr.rel (0) target = $region61
  $region60: #{roberta_forward.4} parent=0 // pred_region
    _
  $region61: #{roberta_forward.4} parent=0 // pred_fallthru
    _
  // Predicated region
  $region62: #{roberta_forward.4} parent=0 // pred_check
    _
  $region63: #{roberta_forward.4} parent=0 // pred_check_branch
    %1525 = sbr.rel (0) target = $region65
  $region64: #{roberta_forward.4} parent=0 // pred_region
    _
  $region65: #{roberta_forward.4} parent=0 // pred_fallthru
    _

// kernel: roberta_forward.5
$region0: #{roberta_forward.5}
  #allocation0 [shape = 'u32[]', space=smem, size = 0x4, offset = 0x4, fixed_abs, tag = 'smem constant byte address 0x4 - core index']
  #allocation1 [shape = 'u32[144,128]{1,0:T(1,128)}', space=vmem, size = 0x12000, scoped, tag = 'internal scratch']
  %s0 = inlined_call_operand.vmem [shape: f32[16,32], index: 0, kind: input, shape index: {}]
  %s1 = inlined_call_operand.vmem [shape: f32[2,8], index: 1, kind: input, shape index: {}]
  %s2 = inlined_call_operand.vmem [shape: bf16[32,96], index: 2, kind: input, shape index: {}]
  %s3 = inlined_call_operand.vmem [shape: f32[1,96], index: 3, kind: input, shape index: {}]
  %s4 = inlined_call_operand.vmem [shape: f32[32,32], index: 4, kind: input, shape index: {}]
  %s5 = inlined_call_operand.vmem [shape: f32[1,32], index: 5, kind: input, shape index: {}]
  %s6 = inlined_call_operand.vmem [shape: f32[1,32], index: 6, kind: input, shape index: {}]
  %s7 = inlined_call_operand.vmem [shape: f32[1,32], index: 7, kind: input, shape index: {}]
  %s8 = inlined_call_operand.vmem [shape: bf16[32,64], index: 8, kind: input, shape index: {}]
  %s9 = inlined_call_operand.vmem [shape: f32[1,64], index: 9, kind: input, shape index: {}]
  %s10 = inlined_call_operand.vmem [shape: bf16[64,32], index: 10, kind: input, shape index: {}]
  %s11 = inlined_call_operand.vmem [shape: f32[1,32], index: 11, kind: input, shape index: {}]
  %s12 = inlined_call_operand.vmem [shape: f32[1,32], index: 12, kind: input, shape index: {}]
  %s13 = inlined_call_operand.vmem [shape: f32[1,32], index: 13, kind: input, shape index: {}]
  %s14 = inlined_call_operand.hbm [shape: f32[16,32], index: 14, kind: output, shape index: {0}]
  %s15 = inlined_call_operand.hbm [shape: f32[2,32], index: 15, kind: output, shape index: {1}]
  %16 = xla_tuple %s14, %s15
  %s17 = sld [smem:[#allocation0]]
  $region74: #{roberta_forward.5} parent=0
    _
  %s19 = ssub.s32 1, %s17
  %s20 = scalar_select 0, %s19, %s17
  $region1: #{roberta_forward.5} parent=0
    #allocation2 [shape = 'u8[8192]{0}', space=vmem, size = 0x2000, scoped, tag = 'output window, operand 0, single buffered']
    #allocation3 [shape = 's32[1]{0}', space=sflag, size = 0x4, scoped, tag = 'scoped memory for roberta_forward.5']
    #allocation4 [shape = 'u8[1024]{0}', space=vmem, size = 0x400, scoped, tag = 'output window, operand 1, single buffered']
    #allocation5 [shape = 's32[1]{0}', space=sflag, size = 0x4, scoped, tag = 'scoped memory for roberta_forward.5']
    %21 = vsyncpa [#allocation3], 0
    %22 = vsyncpa [#allocation5], 0
    // Predicated region
    $region2: #{roberta_forward.5} parent=1 // pred_check
      _
    $region3: #{roberta_forward.5} parent=1 // pred_check_branch
      %24 = sbr.rel (0) target = $region5
    $region4: #{roberta_forward.5} parent=1 // pred_region
      _
    $region5: #{roberta_forward.5} parent=1 // pred_fallthru
      _
    // Predicated region
    $region6: #{roberta_forward.5} parent=1 // pred_check
      _
    $region7: #{roberta_forward.5} parent=1 // pred_check_branch
      %26 = sbr.rel (0) target = $region9
    $region8: #{roberta_forward.5} parent=1 // pred_region
      _
    $region9: #{roberta_forward.5} parent=1 // pred_fallthru
      _
    // Predicated region
    $region10: #{roberta_forward.5} parent=1 // pred_check
      _
    $region11: #{roberta_forward.5} parent=1 // pred_check_branch
      %28 = sbr.rel (0) target = $region13
    $region12: #{roberta_forward.5} parent=1 // pred_region
      _
    $region13: #{roberta_forward.5} parent=1 // pred_fallthru
      _
    // Predicated region
    $region14: #{roberta_forward.5} parent=1 // pred_check
      _
    $region15: #{roberta_forward.5} parent=1 // pred_check_branch
      %30 = sbr.rel (0) target = $region17
    $region16: #{roberta_forward.5} parent=1 // pred_region
      _
    $region17: #{roberta_forward.5} parent=1 // pred_fallthru
      _
    // Predicated region
    $region18: #{roberta_forward.5} parent=1 // pred_check
      _
    $region19: #{roberta_forward.5} parent=1 // pred_check_branch
      %32 = sbr.rel (0) target = $region21
    $region20: #{roberta_forward.5} parent=1 // pred_region
      _
    $region21: #{roberta_forward.5} parent=1 // pred_fallthru
      _
    // Predicated region
    $region22: #{roberta_forward.5} parent=1 // pred_check
      _
    $region23: #{roberta_forward.5} parent=1 // pred_check_branch
      %34 = sbr.rel (0) target = $region25
    $region24: #{roberta_forward.5} parent=1 // pred_region
      _
    $region25: #{roberta_forward.5} parent=1 // pred_fallthru
      _
    // Predicated region
    $region26: #{roberta_forward.5} parent=1 // pred_check
      _
    $region27: #{roberta_forward.5} parent=1 // pred_check_branch
      %36 = sbr.rel (0) target = $region29
    $region28: #{roberta_forward.5} parent=1 // pred_region
      _
    $region29: #{roberta_forward.5} parent=1 // pred_fallthru
      _
    // Predicated region
    $region30: #{roberta_forward.5} parent=1 // pred_check
      _
    $region31: #{roberta_forward.5} parent=1 // pred_check_branch
      %38 = sbr.rel (0) target = $region33
    $region32: #{roberta_forward.5} parent=1 // pred_region
      _
    $region33: #{roberta_forward.5} parent=1 // pred_fallthru
      _
    // Predicated region
    $region34: #{roberta_forward.5} parent=1 // pred_check
      _
    $region35: #{roberta_forward.5} parent=1 // pred_check_branch
      %40 = sbr.rel (0) target = $region37
    $region36: #{roberta_forward.5} parent=1 // pred_region
      _
    $region37: #{roberta_forward.5} parent=1 // pred_fallthru
      _
    // Predicated region
    $region38: #{roberta_forward.5} parent=1 // pred_check
      _
    $region39: #{roberta_forward.5} parent=1 // pred_check_branch
      %42 = sbr.rel (0) target = $region41
    $region40: #{roberta_forward.5} parent=1 // pred_region
      _
    $region41: #{roberta_forward.5} parent=1 // pred_fallthru
      _
    // Predicated region
    $region42: #{roberta_forward.5} parent=1 // pred_check
      _
    $region43: #{roberta_forward.5} parent=1 // pred_check_branch
      %44 = sbr.rel (0) target = $region45
    $region44: #{roberta_forward.5} parent=1 // pred_region
      _
    $region45: #{roberta_forward.5} parent=1 // pred_fallthru
      _
    // Predicated region
    $region46: #{roberta_forward.5} parent=1 // pred_check
      _
    $region47: #{roberta_forward.5} parent=1 // pred_check_branch
      %46 = sbr.rel (0) target = $region49
    $region48: #{roberta_forward.5} parent=1 // pred_region
      _
    $region49: #{roberta_forward.5} parent=1 // pred_fallthru
      _
    // Predicated region
    $region50: #{roberta_forward.5} parent=1 // pred_check
      _
    $region51: #{roberta_forward.5} parent=1 // pred_check_branch
      %48 = sbr.rel (0) target = $region53
    $region52: #{roberta_forward.5} parent=1 // pred_region
      _
    $region53: #{roberta_forward.5} parent=1 // pred_fallthru
      _
    // Predicated region
    $region54: #{roberta_forward.5} parent=1 // pred_check
      _
    $region55: #{roberta_forward.5} parent=1 // pred_check_branch
      %50 = sbr.rel (0) target = $region57
    $region56: #{roberta_forward.5} parent=1 // pred_region
      _
    $region57: #{roberta_forward.5} parent=1 // pred_fallthru
      _
    %v52 = vld [vmem:[%s0] sm:$0xff]
    %v53 = vld [vmem:[%s0 + $0x8] sm:$0xff]
    %v54 = vpack.c.bf16 %v53, %v52
    %v55 = vld [vmem:[%s2] sm:$0xf]
    %v56 = vld [vmem:[%s2 + $0x4] sm:$0xf]
    %v57 = vld [vmem:[%s2 + $0x8] sm:$0xf]
    %v58 = vld [vmem:[%s2 + $0xc] sm:$0xf]
    %v59 = vld [vmem:[%s3] sm:$0x1]
    %v61 = vlaneseq
    %v62 = vshrl.u32 %v61, 7
    %v63 = vsub.s32 0, %v62
    %v64 = vrot.slane %v59, %v63
    %v70 = vunpack.c.l.b16 %v55
    %v71 = vunpack.c.l.b16 %v56
    %v72 = vunpack.c.l.b16 %v57
    %v73 = vunpack.c.l.b16 %v58
    %v74 = vpack.c.b16 %v71, %v70
    %v75 = vpack.c.b16 %v73, %v72
    %vm78 = vcmask 261120
    %v80 = vsel %vm78, %v54, 0
    %82 = vmatprep.subr.bf16.mxu0 0
    %83 = vmatpush1.bf16.msra.mxu0 0
    %84 = vmatprep.subr.bf16.mxu0 0
    %85 = vmatpush1.bf16.msra.mxu0 0
    %86 = vmatprep.subr.bf16.mxu0 0
    %87 = vmatpush1.bf16.msra.mxu0 0
    %88 = vmatprep.subr.bf16.mxu0 0
    %89 = vmatpush1.bf16.msra.mxu0 0
    %90 = vmatprep.subr.bf16.mxu0 0
    %91 = vmatpush1.bf16.msra.mxu0 0
    %92 = vmatprep.subr.bf16.mxu0 0
    %93 = vmatpush1.bf16.msra.mxu0 0
    %94 = vmatprep.subr.bf16.mxu0 0
    %95 = vmatpush1.bf16.msra.mxu0 %v75
    %96 = vmatprep.subr.bf16.mxu0 0
    %97 = vmatpush1.bf16.msra.mxu0 %v74
    %98 = vmatprep.subr.bf16.mxu0 0
    %99 = vmatpush2.bf16.msra.mxu0 0
    %100 = vmatprep.subr.bf16.mxu0 0
    %101 = vmatpush2.bf16.msra.mxu0 0
    %102 = vmatprep.subr.bf16.mxu0 0
    %103 = vmatpush2.bf16.msra.mxu0 0
    %104 = vmatprep.subr.bf16.mxu0 0
    %105 = vmatpush2.bf16.msra.mxu0 0
    %106 = vmatprep.subr.bf16.mxu0 0
    %107 = vmatpush2.bf16.msra.mxu0 0
    %108 = vmatprep.subr.bf16.mxu0 0
    %109 = vmatpush2.bf16.msra.mxu0 0
    %110 = vmatprep.subr.bf16.mxu0 0
    %111 = vmatpush2.bf16.msra.mxu0 0
    %112 = vmatprep.subr.bf16.mxu0 0
    %113 = vmatpush2.bf16.msra.mxu0 0
    %114 = vmatprep.mubr.bf16.mxu0 0
    %115 = vmatmul.mubr.bf16.gmra.mxu0 %v80
    %v116 = vpop.f32.mrf.mxu0
    %v117 = vadd.f32 %v64, %v116
    %v118 = vpop.f32.mrf.mxu0
    %v119 = vpop.f32.mrf.mxu0
    %v120 = vadd.f32 %v64, %v119
    %v121 = vpop.f32.mrf.mxu0
    %122 = vdwg.mxu0
    %v123 = vmul.f32 %v117, 0.35355338
    %v124 = vmul.f32 %v120, 0.35355338
    %v125 = vld [vmem:[%s1] sm:$0x3]
    %v126 = vsub.f32 1.0, %v125
    %v127 = vmul.f32 %v126, -3.4028235e+38
    %v130 = vunpack.c.l.s4 1966171168
    %v131 = vunpack.c.0.s8 %v130
    %v132 = vlaneseq
    %v133 = vshrl.u32 %v132, 7
    %v134 = vsub.s32 %v131, %v133
    %v135 = vrot.slane %v127, %v134
    %v136 = vcombine.high %v135, %v135
    %v138 = vunpack.c.l.s4 1966171168
    %v139 = vunpack.c.0.s8 %v138
    %v140 = vlaneseq
    %v141 = vshrl.u32 %v140, 7
    %v142 = vsub.s32 %v139, %v141
    %v143 = vrot.slane %v135, %v142
    %v145 = vunpack.c.l.s4 1966171168
    %v146 = vunpack.c.0.s8 %v145
    %v147 = vlaneseq
    %v148 = vshrl.u32 %v147, 7
    %v149 = vsub.s32 %v146, %v148
    %v150 = vrot.slane %v136, %v149
    %v151 = vld [vmem:[%s4] sm:$0xff]
    %v152 = vld [vmem:[%s4 + $0x8] sm:$0xff]
    %v153 = vld [vmem:[%s4 + $0x10] sm:$0xff]
    %v154 = vld [vmem:[%s4 + $0x18] sm:$0xff]
    %v155 = vpack.c.bf16 %v123, %v123
    %v156 = vpack.c.bf16 %v124, %v124
    %v157 = vpack.c.bf16 %v117, %v117
    %v158 = vpack.c.bf16 %v120, %v120
    %v159 = vlaneseq
    %v160 = vshrl.u32 %v159, 7
    %v161 = vsub.s32 0, %v160
    %v162 = vrot.slane %v143, %v161
    %v163 = vlaneseq
    %v164 = vshrl.u32 %v163, 7
    %v165 = vsub.s32 0, %v164
    %v166 = vrot.slane %v150, %v165
    %170 = vrot.lane.b32.xlu0 %v157, 96
    %v171 = vpop.permute.xlu0 %170
    %vm172 = vcmask 64512
    %v174 = vsel %vm172, %v155, 0
    %v177 = vsel %vm172, %v171, 0
    %179 = vmatprep.subr.bf16.mxu0 0
    %180 = vmatpush1.bf16.xpose.msra.mxu0 0
    %181 = vmatprep.subr.bf16.mxu0 0
    %182 = vmatpush1.bf16.xpose.msra.mxu0 0
    %183 = vmatprep.subr.bf16.mxu0 0
    %184 = vmatpush1.bf16.xpose.msra.mxu0 0
    %185 = vmatprep.subr.bf16.mxu0 0
    %186 = vmatpush1.bf16.xpose.msra.mxu0 0
    %187 = vmatprep.subr.bf16.mxu0 0
    %188 = vmatpush1.bf16.xpose.msra.mxu0 0
    %189 = vmatprep.subr.bf16.mxu0 0
    %190 = vmatpush1.bf16.xpose.msra.mxu0 0
    %191 = vmatprep.subr.bf16.mxu0 0
    %192 = vmatpush1.bf16.xpose.msra.mxu0 0
    %193 = vmatprep.subr.bf16.mxu0 0
    %194 = vmatpush1.bf16.xpose.msra.mxu0 %v177
    %195 = vmatprep.subr.bf16.mxu0 0
    %196 = vmatpush2.bf16.xpose.msra.mxu0 0
    %197 = vmatprep.subr.bf16.mxu0 0
    %198 = vmatpush2.bf16.xpose.msra.mxu0 0
    %199 = vmatprep.subr.bf16.mxu0 0
    %200 = vmatpush2.bf16.xpose.msra.mxu0 0
    %201 = vmatprep.subr.bf16.mxu0 0
    %202 = vmatpush2.bf16.xpose.msra.mxu0 0
    %203 = vmatprep.subr.bf16.mxu0 0
    %204 = vmatpush2.bf16.xpose.msra.mxu0 0
    %205 = vmatprep.subr.bf16.mxu0 0
    %206 = vmatpush2.bf16.xpose.msra.mxu0 0
    %207 = vmatprep.subr.bf16.mxu0 0
    %208 = vmatpush2.bf16.xpose.msra.mxu0 0
    %209 = vmatprep.subr.bf16.mxu0 0
    %210 = vmatpush2.bf16.xpose.msra.mxu0 0
    %211 = vmatprep.mubr.bf16.mxu0 0
    %212 = vmatmul.mubr.bf16.gmra.mxu0 %v174
    %v213 = vpop.f32.mrf.mxu0
    %v214 = vadd.f32 %v162, %v213
    %v215 = vpop.f32.mrf.mxu0
    %v216 = vpop.f32.mrf.mxu0
    %v217 = vpop.f32.mrf.mxu0
    %218 = vdwg.mxu0
    %220 = vrot.lane.b32.xlu0 %v158, 96
    %v221 = vpop.permute.xlu0 %220
    %v223 = vsel %vm172, %v156, 0
    %v226 = vsel %vm172, %v221, 0
    %228 = vmatprep.subr.bf16.mxu0 0
    %229 = vmatpush1.bf16.xpose.msra.mxu0 0
    %230 = vmatprep.subr.bf16.mxu0 0
    %231 = vmatpush1.bf16.xpose.msra.mxu0 0
    %232 = vmatprep.subr.bf16.mxu0 0
    %233 = vmatpush1.bf16.xpose.msra.mxu0 0
    %234 = vmatprep.subr.bf16.mxu0 0
    %235 = vmatpush1.bf16.xpose.msra.mxu0 0
    %236 = vmatprep.subr.bf16.mxu0 0
    %237 = vmatpush1.bf16.xpose.msra.mxu0 0
    %238 = vmatprep.subr.bf16.mxu0 0
    %239 = vmatpush1.bf16.xpose.msra.mxu0 0
    %240 = vmatprep.subr.bf16.mxu0 0
    %241 = vmatpush1.bf16.xpose.msra.mxu0 0
    %242 = vmatprep.subr.bf16.mxu0 0
    %243 = vmatpush1.bf16.xpose.msra.mxu0 %v226
    %244 = vmatprep.subr.bf16.mxu0 0
    %245 = vmatpush2.bf16.xpose.msra.mxu0 0
    %246 = vmatprep.subr.bf16.mxu0 0
    %247 = vmatpush2.bf16.xpose.msra.mxu0 0
    %248 = vmatprep.subr.bf16.mxu0 0
    %249 = vmatpush2.bf16.xpose.msra.mxu0 0
    %250 = vmatprep.subr.bf16.mxu0 0
    %251 = vmatpush2.bf16.xpose.msra.mxu0 0
    %252 = vmatprep.subr.bf16.mxu0 0
    %253 = vmatpush2.bf16.xpose.msra.mxu0 0
    %254 = vmatprep.subr.bf16.mxu0 0
    %255 = vmatpush2.bf16.xpose.msra.mxu0 0
    %256 = vmatprep.subr.bf16.mxu0 0
    %257 = vmatpush2.bf16.xpose.msra.mxu0 0
    %258 = vmatprep.subr.bf16.mxu0 0
    %259 = vmatpush2.bf16.xpose.msra.mxu0 0
    %260 = vmatprep.mubr.bf16.mxu0 0
    %261 = vmatmul.mubr.bf16.gmra.mxu0 %v223
    %v262 = vpop.f32.mrf.mxu0
    %v263 = vadd.f32 %v166, %v262
    %v264 = vpop.f32.mrf.mxu0
    %v265 = vpop.f32.mrf.mxu0
    %v266 = vpop.f32.mrf.mxu0
    %267 = vdwg.mxu0
    %v268 = vsel %vm172, %v214, -inf
    %269 = vmax.xlane.f32.xlu0 %v268
    %v270 = vpop.xlane.xlu0 %269
    %v271 = vsel %vm172, %v263, -inf
    %272 = vmax.xlane.f32.xlu0 %v271
    %v273 = vpop.xlane.xlu0 %272
    %v274 = vsub.f32 %v214, %v270
    %v275 = vsub.f32 %v263, %v273
    %v276 = vmul.f32 %v274, 1.442695
    %v277 = vpow.pop %v276
    %v278 = vmul.f32 %v275, 1.442695
    %v279 = vpow.pop %v278
    %v280 = vsel %vm172, %v277, 0.0
    %281 = vadd.xlane.f32.xlu0 %v280
    %v282 = vpop.xlane.xlu0 %281
    %v283 = vsel %vm172, %v279, 0.0
    %284 = vadd.xlane.f32.xlu0 %v283
    %v285 = vpop.xlane.xlu0 %284
    %v286 = vrcp.pop %v282
    %v287 = vrcp.pop %v285
    %v288 = vmul.f32 %v277, %v286
    %v289 = vmul.f32 %v279, %v287
    %v290 = vpack.c.bf16 %v288, %v288
    %v291 = vpack.c.bf16 %v289, %v289
    %292 = vrot.lane.b32.xlu0 %v157, 64
    %v293 = vpop.permute.xlu0 %292
    %v295 = vsel %vm172, %v290, 0
    %vm297 = vcmask 1043456
    %v299 = vsel %vm297, %v293, 0
    %301 = vmatprep.subr.bf16.mxu0 0
    %302 = vmatpush1.bf16.msra.mxu0 0
    %303 = vmatprep.subr.bf16.mxu0 0
    %304 = vmatpush1.bf16.msra.mxu0 0
    %305 = vmatprep.subr.bf16.mxu0 0
    %306 = vmatpush1.bf16.msra.mxu0 0
    %307 = vmatprep.subr.bf16.mxu0 0
    %308 = vmatpush1.bf16.msra.mxu0 0
    %309 = vmatprep.subr.bf16.mxu0 0
    %310 = vmatpush1.bf16.msra.mxu0 0
    %311 = vmatprep.subr.bf16.mxu0 0
    %312 = vmatpush1.bf16.msra.mxu0 0
    %313 = vmatprep.subr.bf16.mxu0 0
    %314 = vmatpush1.bf16.msra.mxu0 0
    %315 = vmatprep.subr.bf16.mxu0 0
    %316 = vmatpush1.bf16.msra.mxu0 %v299
    %317 = vmatprep.subr.bf16.mxu0 0
    %318 = vmatpush2.bf16.msra.mxu0 0
    %319 = vmatprep.subr.bf16.mxu0 0
    %320 = vmatpush2.bf16.msra.mxu0 0
    %321 = vmatprep.subr.bf16.mxu0 0
    %322 = vmatpush2.bf16.msra.mxu0 0
    %323 = vmatprep.subr.bf16.mxu0 0
    %324 = vmatpush2.bf16.msra.mxu0 0
    %325 = vmatprep.subr.bf16.mxu0 0
    %326 = vmatpush2.bf16.msra.mxu0 0
    %327 = vmatprep.subr.bf16.mxu0 0
    %328 = vmatpush2.bf16.msra.mxu0 0
    %329 = vmatprep.subr.bf16.mxu0 0
    %330 = vmatpush2.bf16.msra.mxu0 0
    %331 = vmatprep.subr.bf16.mxu0 0
    %332 = vmatpush2.bf16.msra.mxu0 0
    %333 = vmatprep.mubr.bf16.mxu0 0
    %334 = vmatmul.mubr.bf16.gmra.mxu0 %v295
    %v335 = vpop.f32.mrf.mxu0
    %v336 = vadd.f32 0.0, %v335
    %v337 = vpop.f32.mrf.mxu0
    %v338 = vpop.f32.mrf.mxu0
    %v339 = vpop.f32.mrf.mxu0
    %340 = vdwg.mxu0
    %341 = vrot.lane.b32.xlu0 %v158, 64
    %v342 = vpop.permute.xlu0 %341
    %v344 = vsel %vm172, %v291, 0
    %v347 = vsel %vm297, %v342, 0
    %349 = vmatprep.subr.bf16.mxu0 0
    %350 = vmatpush1.bf16.msra.mxu0 0
    %351 = vmatprep.subr.bf16.mxu0 0
    %352 = vmatpush1.bf16.msra.mxu0 0
    %353 = vmatprep.subr.bf16.mxu0 0
    %354 = vmatpush1.bf16.msra.mxu0 0
    %355 = vmatprep.subr.bf16.mxu0 0
    %356 = vmatpush1.bf16.msra.mxu0 0
    %357 = vmatprep.subr.bf16.mxu0 0
    %358 = vmatpush1.bf16.msra.mxu0 0
    %359 = vmatprep.subr.bf16.mxu0 0
    %360 = vmatpush1.bf16.msra.mxu0 0
    %361 = vmatprep.subr.bf16.mxu0 0
    %362 = vmatpush1.bf16.msra.mxu0 0
    %363 = vmatprep.subr.bf16.mxu0 0
    %364 = vmatpush1.bf16.msra.mxu0 %v347
    %365 = vmatprep.subr.bf16.mxu0 0
    %366 = vmatpush2.bf16.msra.mxu0 0
    %367 = vmatprep.subr.bf16.mxu0 0
    %368 = vmatpush2.bf16.msra.mxu0 0
    %369 = vmatprep.subr.bf16.mxu0 0
    %370 = vmatpush2.bf16.msra.mxu0 0
    %371 = vmatprep.subr.bf16.mxu0 0
    %372 = vmatpush2.bf16.msra.mxu0 0
    %373 = vmatprep.subr.bf16.mxu0 0
    %374 = vmatpush2.bf16.msra.mxu0 0
    %375 = vmatprep.subr.bf16.mxu0 0
    %376 = vmatpush2.bf16.msra.mxu0 0
    %377 = vmatprep.subr.bf16.mxu0 0
    %378 = vmatpush2.bf16.msra.mxu0 0
    %379 = vmatprep.subr.bf16.mxu0 0
    %380 = vmatpush2.bf16.msra.mxu0 0
    %381 = vmatprep.mubr.bf16.mxu0 0
    %382 = vmatmul.mubr.bf16.gmra.mxu0 %v344
    %v383 = vpop.f32.mrf.mxu0
    %v384 = vadd.f32 0.0, %v383
    %v385 = vpop.f32.mrf.mxu0
    %v386 = vpop.f32.mrf.mxu0
    %v387 = vpop.f32.mrf.mxu0
    %388 = vdwg.mxu0
    %v389 = vpack.c.bf16 %v384, %v336
    %v390 = vpack.c.bf16 %v151, %v151
    %392 = vrot.lane.b32.xlu0 %v155, 120
    %v393 = vpop.permute.xlu0 %392
    %394 = vrot.lane.b32.xlu0 %v157, 88
    %v395 = vpop.permute.xlu0 %394
    %v397 = vsel %vm172, %v393, 0
    %v400 = vsel %vm172, %v395, 0
    %402 = vmatprep.subr.bf16.mxu0 0
    %403 = vmatpush1.bf16.xpose.msra.mxu0 0
    %404 = vmatprep.subr.bf16.mxu0 0
    %405 = vmatpush1.bf16.xpose.msra.mxu0 0
    %406 = vmatprep.subr.bf16.mxu0 0
    %407 = vmatpush1.bf16.xpose.msra.mxu0 0
    %408 = vmatprep.subr.bf16.mxu0 0
    %409 = vmatpush1.bf16.xpose.msra.mxu0 0
    %410 = vmatprep.subr.bf16.mxu0 0
    %411 = vmatpush1.bf16.xpose.msra.mxu0 0
    %412 = vmatprep.subr.bf16.mxu0 0
    %413 = vmatpush1.bf16.xpose.msra.mxu0 0
    %414 = vmatprep.subr.bf16.mxu0 0
    %415 = vmatpush1.bf16.xpose.msra.mxu0 0
    %416 = vmatprep.subr.bf16.mxu0 0
    %417 = vmatpush1.bf16.xpose.msra.mxu0 %v400
    %418 = vmatprep.subr.bf16.mxu0 0
    %419 = vmatpush2.bf16.xpose.msra.mxu0 0
    %420 = vmatprep.subr.bf16.mxu0 0
    %421 = vmatpush2.bf16.xpose.msra.mxu0 0
    %422 = vmatprep.subr.bf16.mxu0 0
    %423 = vmatpush2.bf16.xpose.msra.mxu0 0
    %424 = vmatprep.subr.bf16.mxu0 0
    %425 = vmatpush2.bf16.xpose.msra.mxu0 0
    %426 = vmatprep.subr.bf16.mxu0 0
    %427 = vmatpush2.bf16.xpose.msra.mxu0 0
    %428 = vmatprep.subr.bf16.mxu0 0
    %429 = vmatpush2.bf16.xpose.msra.mxu0 0
    %430 = vmatprep.subr.bf16.mxu0 0
    %431 = vmatpush2.bf16.xpose.msra.mxu0 0
    %432 = vmatprep.subr.bf16.mxu0 0
    %433 = vmatpush2.bf16.xpose.msra.mxu0 0
    %434 = vmatprep.mubr.bf16.mxu0 0
    %435 = vmatmul.mubr.bf16.gmra.mxu0 %v397
    %v436 = vpop.f32.mrf.mxu0
    %v437 = vadd.f32 %v162, %v436
    %v438 = vpop.f32.mrf.mxu0
    %v439 = vpop.f32.mrf.mxu0
    %v440 = vpop.f32.mrf.mxu0
    %441 = vdwg.mxu0
    %443 = vrot.lane.b32.xlu0 %v156, 120
    %v444 = vpop.permute.xlu0 %443
    %445 = vrot.lane.b32.xlu0 %v158, 88
    %v446 = vpop.permute.xlu0 %445
    %v448 = vsel %vm172, %v444, 0
    %v451 = vsel %vm172, %v446, 0
    %453 = vmatprep.subr.bf16.mxu0 0
    %454 = vmatpush1.bf16.xpose.msra.mxu0 0
    %455 = vmatprep.subr.bf16.mxu0 0
    %456 = vmatpush1.bf16.xpose.msra.mxu0 0
    %457 = vmatprep.subr.bf16.mxu0 0
    %458 = vmatpush1.bf16.xpose.msra.mxu0 0
    %459 = vmatprep.subr.bf16.mxu0 0
    %460 = vmatpush1.bf16.xpose.msra.mxu0 0
    %461 = vmatprep.subr.bf16.mxu0 0
    %462 = vmatpush1.bf16.xpose.msra.mxu0 0
    %463 = vmatprep.subr.bf16.mxu0 0
    %464 = vmatpush1.bf16.xpose.msra.mxu0 0
    %465 = vmatprep.subr.bf16.mxu0 0
    %466 = vmatpush1.bf16.xpose.msra.mxu0 0
    %467 = vmatprep.subr.bf16.mxu0 0
    %468 = vmatpush1.bf16.xpose.msra.mxu0 %v451
    %469 = vmatprep.subr.bf16.mxu0 0
    %470 = vmatpush2.bf16.xpose.msra.mxu0 0
    %471 = vmatprep.subr.bf16.mxu0 0
    %472 = vmatpush2.bf16.xpose.msra.mxu0 0
    %473 = vmatprep.subr.bf16.mxu0 0
    %474 = vmatpush2.bf16.xpose.msra.mxu0 0
    %475 = vmatprep.subr.bf16.mxu0 0
    %476 = vmatpush2.bf16.xpose.msra.mxu0 0
    %477 = vmatprep.subr.bf16.mxu0 0
    %478 = vmatpush2.bf16.xpose.msra.mxu0 0
    %479 = vmatprep.subr.bf16.mxu0 0
    %480 = vmatpush2.bf16.xpose.msra.mxu0 0
    %481 = vmatprep.subr.bf16.mxu0 0
    %482 = vmatpush2.bf16.xpose.msra.mxu0 0
    %483 = vmatprep.subr.bf16.mxu0 0
    %484 = vmatpush2.bf16.xpose.msra.mxu0 0
    %485 = vmatprep.mubr.bf16.mxu0 0
    %486 = vmatmul.mubr.bf16.gmra.mxu0 %v448
    %v487 = vpop.f32.mrf.mxu0
    %v488 = vadd.f32 %v166, %v487
    %v489 = vpop.f32.mrf.mxu0
    %v490 = vpop.f32.mrf.mxu0
    %v491 = vpop.f32.mrf.mxu0
    %492 = vdwg.mxu0
    %v493 = vsel %vm172, %v437, -inf
    %494 = vmax.xlane.f32.xlu0 %v493
    %v495 = vpop.xlane.xlu0 %494
    %v496 = vsel %vm172, %v488, -inf
    %497 = vmax.xlane.f32.xlu0 %v496
    %v498 = vpop.xlane.xlu0 %497
    %v499 = vsub.f32 %v437, %v495
    %v500 = vsub.f32 %v488, %v498
    %v501 = vmul.f32 %v499, 1.442695
    %v502 = vpow.pop %v501
    %v503 = vmul.f32 %v500, 1.442695
    %v504 = vpow.pop %v503
    %v505 = vsel %vm172, %v502, 0.0
    %506 = vadd.xlane.f32.xlu0 %v505
    %v507 = vpop.xlane.xlu0 %506
    %v508 = vsel %vm172, %v504, 0.0
    %509 = vadd.xlane.f32.xlu0 %v508
    %v510 = vpop.xlane.xlu0 %509
    %v511 = vrcp.pop %v507
    %v512 = vrcp.pop %v510
    %v513 = vmul.f32 %v502, %v511
    %v514 = vmul.f32 %v504, %v512
    %v515 = vpack.c.bf16 %v513, %v513
    %v516 = vpack.c.bf16 %v514, %v514
    %517 = vrot.lane.b32.xlu0 %v157, 56
    %v518 = vpop.permute.xlu0 %517
    %v520 = vsel %vm172, %v515, 0
    %v523 = vsel %vm297, %v518, 0
    %525 = vmatprep.subr.bf16.mxu0 0
    %526 = vmatpush1.bf16.msra.mxu0 0
    %527 = vmatprep.subr.bf16.mxu0 0
    %528 = vmatpush1.bf16.msra.mxu0 0
    %529 = vmatprep.subr.bf16.mxu0 0
    %530 = vmatpush1.bf16.msra.mxu0 0
    %531 = vmatprep.subr.bf16.mxu0 0
    %532 = vmatpush1.bf16.msra.mxu0 0
    %533 = vmatprep.subr.bf16.mxu0 0
    %534 = vmatpush1.bf16.msra.mxu0 0
    %535 = vmatprep.subr.bf16.mxu0 0
    %536 = vmatpush1.bf16.msra.mxu0 0
    %537 = vmatprep.subr.bf16.mxu0 0
    %538 = vmatpush1.bf16.msra.mxu0 0
    %539 = vmatprep.subr.bf16.mxu0 0
    %540 = vmatpush1.bf16.msra.mxu0 %v523
    %541 = vmatprep.subr.bf16.mxu0 0
    %542 = vmatpush2.bf16.msra.mxu0 0
    %543 = vmatprep.subr.bf16.mxu0 0
    %544 = vmatpush2.bf16.msra.mxu0 0
    %545 = vmatprep.subr.bf16.mxu0 0
    %546 = vmatpush2.bf16.msra.mxu0 0
    %547 = vmatprep.subr.bf16.mxu0 0
    %548 = vmatpush2.bf16.msra.mxu0 0
    %549 = vmatprep.subr.bf16.mxu0 0
    %550 = vmatpush2.bf16.msra.mxu0 0
    %551 = vmatprep.subr.bf16.mxu0 0
    %552 = vmatpush2.bf16.msra.mxu0 0
    %553 = vmatprep.subr.bf16.mxu0 0
    %554 = vmatpush2.bf16.msra.mxu0 0
    %555 = vmatprep.subr.bf16.mxu0 0
    %556 = vmatpush2.bf16.msra.mxu0 0
    %557 = vmatprep.mubr.bf16.mxu0 0
    %558 = vmatmul.mubr.bf16.gmra.mxu0 %v520
    %v559 = vpop.f32.mrf.mxu0
    %v560 = vadd.f32 0.0, %v559
    %v561 = vpop.f32.mrf.mxu0
    %v562 = vpop.f32.mrf.mxu0
    %v563 = vpop.f32.mrf.mxu0
    %564 = vdwg.mxu0
    %565 = vrot.lane.b32.xlu0 %v158, 56
    %v566 = vpop.permute.xlu0 %565
    %v568 = vsel %vm172, %v516, 0
    %v571 = vsel %vm297, %v566, 0
    %573 = vmatprep.subr.bf16.mxu0 0
    %574 = vmatpush1.bf16.msra.mxu0 0
    %575 = vmatprep.subr.bf16.mxu0 0
    %576 = vmatpush1.bf16.msra.mxu0 0
    %577 = vmatprep.subr.bf16.mxu0 0
    %578 = vmatpush1.bf16.msra.mxu0 0
    %579 = vmatprep.subr.bf16.mxu0 0
    %580 = vmatpush1.bf16.msra.mxu0 0
    %581 = vmatprep.subr.bf16.mxu0 0
    %582 = vmatpush1.bf16.msra.mxu0 0
    %583 = vmatprep.subr.bf16.mxu0 0
    %584 = vmatpush1.bf16.msra.mxu0 0
    %585 = vmatprep.subr.bf16.mxu0 0
    %586 = vmatpush1.bf16.msra.mxu0 0
    %587 = vmatprep.subr.bf16.mxu0 0
    %588 = vmatpush1.bf16.msra.mxu0 %v571
    %589 = vmatprep.subr.bf16.mxu0 0
    %590 = vmatpush2.bf16.msra.mxu0 0
    %591 = vmatprep.subr.bf16.mxu0 0
    %592 = vmatpush2.bf16.msra.mxu0 0
    %593 = vmatprep.subr.bf16.mxu0 0
    %594 = vmatpush2.bf16.msra.mxu0 0
    %595 = vmatprep.subr.bf16.mxu0 0
    %596 = vmatpush2.bf16.msra.mxu0 0
    %597 = vmatprep.subr.bf16.mxu0 0
    %598 = vmatpush2.bf16.msra.mxu0 0
    %599 = vmatprep.subr.bf16.mxu0 0
    %600 = vmatpush2.bf16.msra.mxu0 0
    %601 = vmatprep.subr.bf16.mxu0 0
    %602 = vmatpush2.bf16.msra.mxu0 0
    %603 = vmatprep.subr.bf16.mxu0 0
    %604 = vmatpush2.bf16.msra.mxu0 0
    %605 = vmatprep.mubr.bf16.mxu0 0
    %606 = vmatmul.mubr.bf16.gmra.mxu0 %v568
    %v607 = vpop.f32.mrf.mxu0
    %v608 = vadd.f32 0.0, %v607
    %v609 = vpop.f32.mrf.mxu0
    %v610 = vpop.f32.mrf.mxu0
    %v611 = vpop.f32.mrf.mxu0
    %612 = vdwg.mxu0
    %v613 = vpack.c.bf16 %v608, %v560
    %v614 = vpack.c.bf16 %v152, %v152
    %v616 = vsel %vm172, %v613, 0
    %v619 = vsel %vm297, %v614, 0
    %621 = vmatprep.subr.bf16.mxu0 0
    %622 = vmatpush1.bf16.msra.mxu0 0
    %623 = vmatprep.subr.bf16.mxu0 0
    %624 = vmatpush1.bf16.msra.mxu0 0
    %625 = vmatprep.subr.bf16.mxu0 0
    %626 = vmatpush1.bf16.msra.mxu0 0
    %627 = vmatprep.subr.bf16.mxu0 0
    %628 = vmatpush1.bf16.msra.mxu0 0
    %629 = vmatprep.subr.bf16.mxu0 0
    %630 = vmatpush1.bf16.msra.mxu0 0
    %631 = vmatprep.subr.bf16.mxu0 0
    %632 = vmatpush1.bf16.msra.mxu0 0
    %633 = vmatprep.subr.bf16.mxu0 0
    %634 = vmatpush1.bf16.msra.mxu0 0
    %635 = vmatprep.subr.bf16.mxu0 0
    %636 = vmatpush1.bf16.msra.mxu0 %v619
    %637 = vmatprep.subr.bf16.mxu0 0
    %638 = vmatpush2.bf16.msra.mxu0 0
    %639 = vmatprep.subr.bf16.mxu0 0
    %640 = vmatpush2.bf16.msra.mxu0 0
    %641 = vmatprep.subr.bf16.mxu0 0
    %642 = vmatpush2.bf16.msra.mxu0 0
    %643 = vmatprep.subr.bf16.mxu0 0
    %644 = vmatpush2.bf16.msra.mxu0 0
    %645 = vmatprep.subr.bf16.mxu0 0
    %646 = vmatpush2.bf16.msra.mxu0 0
    %647 = vmatprep.subr.bf16.mxu0 0
    %648 = vmatpush2.bf16.msra.mxu0 0
    %649 = vmatprep.subr.bf16.mxu0 0
    %650 = vmatpush2.bf16.msra.mxu0 0
    %651 = vmatprep.subr.bf16.mxu0 0
    %652 = vmatpush2.bf16.msra.mxu0 0
    %653 = vmatprep.mubr.bf16.mxu0 0
    %654 = vmatmul.mubr.bf16.gmra.mxu0 %v616
    %v655 = vpop.f32.mrf.mxu0
    %v656 = vadd.f32 0.0, %v655
    %v657 = vpop.f32.mrf.mxu0
    %v658 = vpop.f32.mrf.mxu0
    %v659 = vadd.f32 0.0, %v658
    %v660 = vpop.f32.mrf.mxu0
    %661 = vdwg.mxu0
    %v663 = vsel %vm172, %v389, 0
    %v666 = vsel %vm297, %v390, 0
    %668 = vmatprep.subr.bf16.mxu0 0
    %669 = vmatpush1.bf16.msra.mxu0 0
    %670 = vmatprep.subr.bf16.mxu0 0
    %671 = vmatpush1.bf16.msra.mxu0 0
    %672 = vmatprep.subr.bf16.mxu0 0
    %673 = vmatpush1.bf16.msra.mxu0 0
    %674 = vmatprep.subr.bf16.mxu0 0
    %675 = vmatpush1.bf16.msra.mxu0 0
    %676 = vmatprep.subr.bf16.mxu0 0
    %677 = vmatpush1.bf16.msra.mxu0 0
    %678 = vmatprep.subr.bf16.mxu0 0
    %679 = vmatpush1.bf16.msra.mxu0 0
    %680 = vmatprep.subr.bf16.mxu0 0
    %681 = vmatpush1.bf16.msra.mxu0 0
    %682 = vmatprep.subr.bf16.mxu0 0
    %683 = vmatpush1.bf16.msra.mxu0 %v666
    %684 = vmatprep.subr.bf16.mxu0 0
    %685 = vmatpush2.bf16.msra.mxu0 0
    %686 = vmatprep.subr.bf16.mxu0 0
    %687 = vmatpush2.bf16.msra.mxu0 0
    %688 = vmatprep.subr.bf16.mxu0 0
    %689 = vmatpush2.bf16.msra.mxu0 0
    %690 = vmatprep.subr.bf16.mxu0 0
    %691 = vmatpush2.bf16.msra.mxu0 0
    %692 = vmatprep.subr.bf16.mxu0 0
    %693 = vmatpush2.bf16.msra.mxu0 0
    %694 = vmatprep.subr.bf16.mxu0 0
    %695 = vmatpush2.bf16.msra.mxu0 0
    %696 = vmatprep.subr.bf16.mxu0 0
    %697 = vmatpush2.bf16.msra.mxu0 0
    %698 = vmatprep.subr.bf16.mxu0 0
    %699 = vmatpush2.bf16.msra.mxu0 0
    %700 = vmatprep.mubr.bf16.mxu0 0
    %701 = vmatmul.mubr.bf16.gmra.mxu0 %v663
    %v702 = vpop.f32.mrf.mxu0
    %v703 = vadd.f32 %v656, %v702
    %v704 = vpop.f32.mrf.mxu0
    %v705 = vpop.f32.mrf.mxu0
    %v706 = vadd.f32 %v659, %v705
    %v707 = vpop.f32.mrf.mxu0
    %708 = vdwg.mxu0
    %709 = vrot.lane.b32.xlu0 %v155, 112
    %v710 = vpop.permute.xlu0 %709
    %711 = vrot.lane.b32.xlu0 %v157, 80
    %v712 = vpop.permute.xlu0 %711
    %v714 = vsel %vm172, %v710, 0
    %v717 = vsel %vm172, %v712, 0
    %719 = vmatprep.subr.bf16.mxu0 0
    %720 = vmatpush1.bf16.xpose.msra.mxu0 0
    %721 = vmatprep.subr.bf16.mxu0 0
    %722 = vmatpush1.bf16.xpose.msra.mxu0 0
    %723 = vmatprep.subr.bf16.mxu0 0
    %724 = vmatpush1.bf16.xpose.msra.mxu0 0
    %725 = vmatprep.subr.bf16.mxu0 0
    %726 = vmatpush1.bf16.xpose.msra.mxu0 0
    %727 = vmatprep.subr.bf16.mxu0 0
    %728 = vmatpush1.bf16.xpose.msra.mxu0 0
    %729 = vmatprep.subr.bf16.mxu0 0
    %730 = vmatpush1.bf16.xpose.msra.mxu0 0
    %731 = vmatprep.subr.bf16.mxu0 0
    %732 = vmatpush1.bf16.xpose.msra.mxu0 0
    %733 = vmatprep.subr.bf16.mxu0 0
    %734 = vmatpush1.bf16.xpose.msra.mxu0 %v717
    %735 = vmatprep.subr.bf16.mxu0 0
    %736 = vmatpush2.bf16.xpose.msra.mxu0 0
    %737 = vmatprep.subr.bf16.mxu0 0
    %738 = vmatpush2.bf16.xpose.msra.mxu0 0
    %739 = vmatprep.subr.bf16.mxu0 0
    %740 = vmatpush2.bf16.xpose.msra.mxu0 0
    %741 = vmatprep.subr.bf16.mxu0 0
    %742 = vmatpush2.bf16.xpose.msra.mxu0 0
    %743 = vmatprep.subr.bf16.mxu0 0
    %744 = vmatpush2.bf16.xpose.msra.mxu0 0
    %745 = vmatprep.subr.bf16.mxu0 0
    %746 = vmatpush2.bf16.xpose.msra.mxu0 0
    %747 = vmatprep.subr.bf16.mxu0 0
    %748 = vmatpush2.bf16.xpose.msra.mxu0 0
    %749 = vmatprep.subr.bf16.mxu0 0
    %750 = vmatpush2.bf16.xpose.msra.mxu0 0
    %751 = vmatprep.mubr.bf16.mxu0 0
    %752 = vmatmul.mubr.bf16.gmra.mxu0 %v714
    %v753 = vpop.f32.mrf.mxu0
    %v754 = vadd.f32 %v162, %v753
    %v755 = vpop.f32.mrf.mxu0
    %v756 = vpop.f32.mrf.mxu0
    %v757 = vpop.f32.mrf.mxu0
    %758 = vdwg.mxu0
    %759 = vrot.lane.b32.xlu0 %v156, 112
    %v760 = vpop.permute.xlu0 %759
    %761 = vrot.lane.b32.xlu0 %v158, 80
    %v762 = vpop.permute.xlu0 %761
    %v764 = vsel %vm172, %v760, 0
    %v767 = vsel %vm172, %v762, 0
    %769 = vmatprep.subr.bf16.mxu0 0
    %770 = vmatpush1.bf16.xpose.msra.mxu0 0
    %771 = vmatprep.subr.bf16.mxu0 0
    %772 = vmatpush1.bf16.xpose.msra.mxu0 0
    %773 = vmatprep.subr.bf16.mxu0 0
    %774 = vmatpush1.bf16.xpose.msra.mxu0 0
    %775 = vmatprep.subr.bf16.mxu0 0
    %776 = vmatpush1.bf16.xpose.msra.mxu0 0
    %777 = vmatprep.subr.bf16.mxu0 0
    %778 = vmatpush1.bf16.xpose.msra.mxu0 0
    %779 = vmatprep.subr.bf16.mxu0 0
    %780 = vmatpush1.bf16.xpose.msra.mxu0 0
    %781 = vmatprep.subr.bf16.mxu0 0
    %782 = vmatpush1.bf16.xpose.msra.mxu0 0
    %783 = vmatprep.subr.bf16.mxu0 0
    %784 = vmatpush1.bf16.xpose.msra.mxu0 %v767
    %785 = vmatprep.subr.bf16.mxu0 0
    %786 = vmatpush2.bf16.xpose.msra.mxu0 0
    %787 = vmatprep.subr.bf16.mxu0 0
    %788 = vmatpush2.bf16.xpose.msra.mxu0 0
    %789 = vmatprep.subr.bf16.mxu0 0
    %790 = vmatpush2.bf16.xpose.msra.mxu0 0
    %791 = vmatprep.subr.bf16.mxu0 0
    %792 = vmatpush2.bf16.xpose.msra.mxu0 0
    %793 = vmatprep.subr.bf16.mxu0 0
    %794 = vmatpush2.bf16.xpose.msra.mxu0 0
    %795 = vmatprep.subr.bf16.mxu0 0
    %796 = vmatpush2.bf16.xpose.msra.mxu0 0
    %797 = vmatprep.subr.bf16.mxu0 0
    %798 = vmatpush2.bf16.xpose.msra.mxu0 0
    %799 = vmatprep.subr.bf16.mxu0 0
    %800 = vmatpush2.bf16.xpose.msra.mxu0 0
    %801 = vmatprep.mubr.bf16.mxu0 0
    %802 = vmatmul.mubr.bf16.gmra.mxu0 %v764
    %v803 = vpop.f32.mrf.mxu0
    %v804 = vadd.f32 %v166, %v803
    %v805 = vpop.f32.mrf.mxu0
    %v806 = vpop.f32.mrf.mxu0
    %v807 = vpop.f32.mrf.mxu0
    %808 = vdwg.mxu0
    %v809 = vsel %vm172, %v754, -inf
    %810 = vmax.xlane.f32.xlu0 %v809
    %v811 = vpop.xlane.xlu0 %810
    %v812 = vsel %vm172, %v804, -inf
    %813 = vmax.xlane.f32.xlu0 %v812
    %v814 = vpop.xlane.xlu0 %813
    %v815 = vsub.f32 %v754, %v811
    %v816 = vsub.f32 %v804, %v814
    %v817 = vmul.f32 %v815, 1.442695
    %v818 = vpow.pop %v817
    %v819 = vmul.f32 %v816, 1.442695
    %v820 = vpow.pop %v819
    %v821 = vsel %vm172, %v818, 0.0
    %822 = vadd.xlane.f32.xlu0 %v821
    %v823 = vpop.xlane.xlu0 %822
    %v824 = vsel %vm172, %v820, 0.0
    %825 = vadd.xlane.f32.xlu0 %v824
    %v826 = vpop.xlane.xlu0 %825
    %v827 = vrcp.pop %v823
    %v828 = vrcp.pop %v826
    %v829 = vmul.f32 %v818, %v827
    %v830 = vmul.f32 %v820, %v828
    %v831 = vpack.c.bf16 %v829, %v829
    %v832 = vpack.c.bf16 %v830, %v830
    %833 = vrot.lane.b32.xlu0 %v157, 48
    %v834 = vpop.permute.xlu0 %833
    %v836 = vsel %vm172, %v831, 0
    %v839 = vsel %vm297, %v834, 0
    %841 = vmatprep.subr.bf16.mxu0 0
    %842 = vmatpush1.bf16.msra.mxu0 0
    %843 = vmatprep.subr.bf16.mxu0 0
    %844 = vmatpush1.bf16.msra.mxu0 0
    %845 = vmatprep.subr.bf16.mxu0 0
    %846 = vmatpush1.bf16.msra.mxu0 0
    %847 = vmatprep.subr.bf16.mxu0 0
    %848 = vmatpush1.bf16.msra.mxu0 0
    %849 = vmatprep.subr.bf16.mxu0 0
    %850 = vmatpush1.bf16.msra.mxu0 0
    %851 = vmatprep.subr.bf16.mxu0 0
    %852 = vmatpush1.bf16.msra.mxu0 0
    %853 = vmatprep.subr.bf16.mxu0 0
    %854 = vmatpush1.bf16.msra.mxu0 0
    %855 = vmatprep.subr.bf16.mxu0 0
    %856 = vmatpush1.bf16.msra.mxu0 %v839
    %857 = vmatprep.subr.bf16.mxu0 0
    %858 = vmatpush2.bf16.msra.mxu0 0
    %859 = vmatprep.subr.bf16.mxu0 0
    %860 = vmatpush2.bf16.msra.mxu0 0
    %861 = vmatprep.subr.bf16.mxu0 0
    %862 = vmatpush2.bf16.msra.mxu0 0
    %863 = vmatprep.subr.bf16.mxu0 0
    %864 = vmatpush2.bf16.msra.mxu0 0
    %865 = vmatprep.subr.bf16.mxu0 0
    %866 = vmatpush2.bf16.msra.mxu0 0
    %867 = vmatprep.subr.bf16.mxu0 0
    %868 = vmatpush2.bf16.msra.mxu0 0
    %869 = vmatprep.subr.bf16.mxu0 0
    %870 = vmatpush2.bf16.msra.mxu0 0
    %871 = vmatprep.subr.bf16.mxu0 0
    %872 = vmatpush2.bf16.msra.mxu0 0
    %873 = vmatprep.mubr.bf16.mxu0 0
    %874 = vmatmul.mubr.bf16.gmra.mxu0 %v836
    %v875 = vpop.f32.mrf.mxu0
    %v876 = vadd.f32 0.0, %v875
    %v877 = vpop.f32.mrf.mxu0
    %v878 = vpop.f32.mrf.mxu0
    %v879 = vpop.f32.mrf.mxu0
    %880 = vdwg.mxu0
    %881 = vrot.lane.b32.xlu0 %v158, 48
    %v882 = vpop.permute.xlu0 %881
    %v884 = vsel %vm172, %v832, 0
    %v887 = vsel %vm297, %v882, 0
    %889 = vmatprep.subr.bf16.mxu0 0
    %890 = vmatpush1.bf16.msra.mxu0 0
    %891 = vmatprep.subr.bf16.mxu0 0
    %892 = vmatpush1.bf16.msra.mxu0 0
    %893 = vmatprep.subr.bf16.mxu0 0
    %894 = vmatpush1.bf16.msra.mxu0 0
    %895 = vmatprep.subr.bf16.mxu0 0
    %896 = vmatpush1.bf16.msra.mxu0 0
    %897 = vmatprep.subr.bf16.mxu0 0
    %898 = vmatpush1.bf16.msra.mxu0 0
    %899 = vmatprep.subr.bf16.mxu0 0
    %900 = vmatpush1.bf16.msra.mxu0 0
    %901 = vmatprep.subr.bf16.mxu0 0
    %902 = vmatpush1.bf16.msra.mxu0 0
    %903 = vmatprep.subr.bf16.mxu0 0
    %904 = vmatpush1.bf16.msra.mxu0 %v887
    %905 = vmatprep.subr.bf16.mxu0 0
    %906 = vmatpush2.bf16.msra.mxu0 0
    %907 = vmatprep.subr.bf16.mxu0 0
    %908 = vmatpush2.bf16.msra.mxu0 0
    %909 = vmatprep.subr.bf16.mxu0 0
    %910 = vmatpush2.bf16.msra.mxu0 0
    %911 = vmatprep.subr.bf16.mxu0 0
    %912 = vmatpush2.bf16.msra.mxu0 0
    %913 = vmatprep.subr.bf16.mxu0 0
    %914 = vmatpush2.bf16.msra.mxu0 0
    %915 = vmatprep.subr.bf16.mxu0 0
    %916 = vmatpush2.bf16.msra.mxu0 0
    %917 = vmatprep.subr.bf16.mxu0 0
    %918 = vmatpush2.bf16.msra.mxu0 0
    %919 = vmatprep.subr.bf16.mxu0 0
    %920 = vmatpush2.bf16.msra.mxu0 0
    %921 = vmatprep.mubr.bf16.mxu0 0
    %922 = vmatmul.mubr.bf16.gmra.mxu0 %v884
    %v923 = vpop.f32.mrf.mxu0
    %v924 = vadd.f32 0.0, %v923
    %v925 = vpop.f32.mrf.mxu0
    %v926 = vpop.f32.mrf.mxu0
    %v927 = vpop.f32.mrf.mxu0
    %928 = vdwg.mxu0
    %v929 = vpack.c.bf16 %v924, %v876
    %v930 = vpack.c.bf16 %v153, %v153
    %v932 = vsel %vm172, %v929, 0
    %v935 = vsel %vm297, %v930, 0
    %937 = vmatprep.subr.bf16.mxu0 0
    %938 = vmatpush1.bf16.msra.mxu0 0
    %939 = vmatprep.subr.bf16.mxu0 0
    %940 = vmatpush1.bf16.msra.mxu0 0
    %941 = vmatprep.subr.bf16.mxu0 0
    %942 = vmatpush1.bf16.msra.mxu0 0
    %943 = vmatprep.subr.bf16.mxu0 0
    %944 = vmatpush1.bf16.msra.mxu0 0
    %945 = vmatprep.subr.bf16.mxu0 0
    %946 = vmatpush1.bf16.msra.mxu0 0
    %947 = vmatprep.subr.bf16.mxu0 0
    %948 = vmatpush1.bf16.msra.mxu0 0
    %949 = vmatprep.subr.bf16.mxu0 0
    %950 = vmatpush1.bf16.msra.mxu0 0
    %951 = vmatprep.subr.bf16.mxu0 0
    %952 = vmatpush1.bf16.msra.mxu0 %v935
    %953 = vmatprep.subr.bf16.mxu0 0
    %954 = vmatpush2.bf16.msra.mxu0 0
    %955 = vmatprep.subr.bf16.mxu0 0
    %956 = vmatpush2.bf16.msra.mxu0 0
    %957 = vmatprep.subr.bf16.mxu0 0
    %958 = vmatpush2.bf16.msra.mxu0 0
    %959 = vmatprep.subr.bf16.mxu0 0
    %960 = vmatpush2.bf16.msra.mxu0 0
    %961 = vmatprep.subr.bf16.mxu0 0
    %962 = vmatpush2.bf16.msra.mxu0 0
    %963 = vmatprep.subr.bf16.mxu0 0
    %964 = vmatpush2.bf16.msra.mxu0 0
    %965 = vmatprep.subr.bf16.mxu0 0
    %966 = vmatpush2.bf16.msra.mxu0 0
    %967 = vmatprep.subr.bf16.mxu0 0
    %968 = vmatpush2.bf16.msra.mxu0 0
    %969 = vmatprep.mubr.bf16.mxu0 0
    %970 = vmatmul.mubr.bf16.gmra.mxu0 %v932
    %v971 = vpop.f32.mrf.mxu0
    %v972 = vadd.f32 0.0, %v971
    %v973 = vpop.f32.mrf.mxu0
    %v974 = vpop.f32.mrf.mxu0
    %v975 = vadd.f32 0.0, %v974
    %v976 = vpop.f32.mrf.mxu0
    %977 = vdwg.mxu0
    %v978 = vadd.f32 %v703, %v972
    %v979 = vadd.f32 %v706, %v975
    %980 = vrot.lane.b32.xlu0 %v155, 104
    %v981 = vpop.permute.xlu0 %980
    %982 = vrot.lane.b32.xlu0 %v157, 72
    %v983 = vpop.permute.xlu0 %982
    %v985 = vsel %vm172, %v981, 0
    %v988 = vsel %vm172, %v983, 0
    %990 = vmatprep.subr.bf16.mxu0 0
    %991 = vmatpush1.bf16.xpose.msra.mxu0 0
    %992 = vmatprep.subr.bf16.mxu0 0
    %993 = vmatpush1.bf16.xpose.msra.mxu0 0
    %994 = vmatprep.subr.bf16.mxu0 0
    %995 = vmatpush1.bf16.xpose.msra.mxu0 0
    %996 = vmatprep.subr.bf16.mxu0 0
    %997 = vmatpush1.bf16.xpose.msra.mxu0 0
    %998 = vmatprep.subr.bf16.mxu0 0
    %999 = vmatpush1.bf16.xpose.msra.mxu0 0
    %1000 = vmatprep.subr.bf16.mxu0 0
    %1001 = vmatpush1.bf16.xpose.msra.mxu0 0
    %1002 = vmatprep.subr.bf16.mxu0 0
    %1003 = vmatpush1.bf16.xpose.msra.mxu0 0
    %1004 = vmatprep.subr.bf16.mxu0 0
    %1005 = vmatpush1.bf16.xpose.msra.mxu0 %v988
    %1006 = vmatprep.subr.bf16.mxu0 0
    %1007 = vmatpush2.bf16.xpose.msra.mxu0 0
    %1008 = vmatprep.subr.bf16.mxu0 0
    %1009 = vmatpush2.bf16.xpose.msra.mxu0 0
    %1010 = vmatprep.subr.bf16.mxu0 0
    %1011 = vmatpush2.bf16.xpose.msra.mxu0 0
    %1012 = vmatprep.subr.bf16.mxu0 0
    %1013 = vmatpush2.bf16.xpose.msra.mxu0 0
    %1014 = vmatprep.subr.bf16.mxu0 0
    %1015 = vmatpush2.bf16.xpose.msra.mxu0 0
    %1016 = vmatprep.subr.bf16.mxu0 0
    %1017 = vmatpush2.bf16.xpose.msra.mxu0 0
    %1018 = vmatprep.subr.bf16.mxu0 0
    %1019 = vmatpush2.bf16.xpose.msra.mxu0 0
    %1020 = vmatprep.subr.bf16.mxu0 0
    %1021 = vmatpush2.bf16.xpose.msra.mxu0 0
    %1022 = vmatprep.mubr.bf16.mxu0 0
    %1023 = vmatmul.mubr.bf16.gmra.mxu0 %v985
    %v1024 = vpop.f32.mrf.mxu0
    %v1025 = vadd.f32 %v162, %v1024
    %v1026 = vpop.f32.mrf.mxu0
    %v1027 = vpop.f32.mrf.mxu0
    %v1028 = vpop.f32.mrf.mxu0
    %1029 = vdwg.mxu0
    %1030 = vrot.lane.b32.xlu0 %v156, 104
    %v1031 = vpop.permute.xlu0 %1030
    %1032 = vrot.lane.b32.xlu0 %v158, 72
    %v1033 = vpop.permute.xlu0 %1032
    %v1035 = vsel %vm172, %v1031, 0
    %v1038 = vsel %vm172, %v1033, 0
    %1040 = vmatprep.subr.bf16.mxu0 0
    %1041 = vmatpush1.bf16.xpose.msra.mxu0 0
    %1042 = vmatprep.subr.bf16.mxu0 0
    %1043 = vmatpush1.bf16.xpose.msra.mxu0 0
    %1044 = vmatprep.subr.bf16.mxu0 0
    %1045 = vmatpush1.bf16.xpose.msra.mxu0 0
    %1046 = vmatprep.subr.bf16.mxu0 0
    %1047 = vmatpush1.bf16.xpose.msra.mxu0 0
    %1048 = vmatprep.subr.bf16.mxu0 0
    %1049 = vmatpush1.bf16.xpose.msra.mxu0 0
    %1050 = vmatprep.subr.bf16.mxu0 0
    %1051 = vmatpush1.bf16.xpose.msra.mxu0 0
    %1052 = vmatprep.subr.bf16.mxu0 0
    %1053 = vmatpush1.bf16.xpose.msra.mxu0 0
    %1054 = vmatprep.subr.bf16.mxu0 0
    %1055 = vmatpush1.bf16.xpose.msra.mxu0 %v1038
    %1056 = vmatprep.subr.bf16.mxu0 0
    %1057 = vmatpush2.bf16.xpose.msra.mxu0 0
    %1058 = vmatprep.subr.bf16.mxu0 0
    %1059 = vmatpush2.bf16.xpose.msra.mxu0 0
    %1060 = vmatprep.subr.bf16.mxu0 0
    %1061 = vmatpush2.bf16.xpose.msra.mxu0 0
    %1062 = vmatprep.subr.bf16.mxu0 0
    %1063 = vmatpush2.bf16.xpose.msra.mxu0 0
    %1064 = vmatprep.subr.bf16.mxu0 0
    %1065 = vmatpush2.bf16.xpose.msra.mxu0 0
    %1066 = vmatprep.subr.bf16.mxu0 0
    %1067 = vmatpush2.bf16.xpose.msra.mxu0 0
    %1068 = vmatprep.subr.bf16.mxu0 0
    %1069 = vmatpush2.bf16.xpose.msra.mxu0 0
    %1070 = vmatprep.subr.bf16.mxu0 0
    %1071 = vmatpush2.bf16.xpose.msra.mxu0 0
    %1072 = vmatprep.mubr.bf16.mxu0 0
    %1073 = vmatmul.mubr.bf16.gmra.mxu0 %v1035
    %v1074 = vpop.f32.mrf.mxu0
    %v1075 = vadd.f32 %v166, %v1074
    %v1076 = vpop.f32.mrf.mxu0
    %v1077 = vpop.f32.mrf.mxu0
    %v1078 = vpop.f32.mrf.mxu0
    %1079 = vdwg.mxu0
    %v1080 = vsel %vm172, %v1025, -inf
    %1081 = vmax.xlane.f32.xlu0 %v1080
    %v1082 = vpop.xlane.xlu0 %1081
    %v1083 = vsel %vm172, %v1075, -inf
    %1084 = vmax.xlane.f32.xlu0 %v1083
    %v1085 = vpop.xlane.xlu0 %1084
    %v1086 = vsub.f32 %v1025, %v1082
    %v1087 = vsub.f32 %v1075, %v1085
    %v1088 = vmul.f32 %v1086, 1.442695
    %v1089 = vpow.pop %v1088
    %v1090 = vmul.f32 %v1087, 1.442695
    %v1091 = vpow.pop %v1090
    %v1092 = vsel %vm172, %v1089, 0.0
    %1093 = vadd.xlane.f32.xlu0 %v1092
    %v1094 = vpop.xlane.xlu0 %1093
    %v1095 = vsel %vm172, %v1091, 0.0
    %1096 = vadd.xlane.f32.xlu0 %v1095
    %v1097 = vpop.xlane.xlu0 %1096
    %v1098 = vrcp.pop %v1094
    %v1099 = vrcp.pop %v1097
    %v1100 = vmul.f32 %v1089, %v1098
    %v1101 = vmul.f32 %v1091, %v1099
    %v1102 = vpack.c.bf16 %v1100, %v1100
    %v1103 = vpack.c.bf16 %v1101, %v1101
    %1104 = vrot.lane.b32.xlu0 %v157, 40
    %v1105 = vpop.permute.xlu0 %1104
    %v1107 = vsel %vm172, %v1102, 0
    %v1110 = vsel %vm297, %v1105, 0
    %1112 = vmatprep.subr.bf16.mxu0 0
    %1113 = vmatpush1.bf16.msra.mxu0 0
    %1114 = vmatprep.subr.bf16.mxu0 0
    %1115 = vmatpush1.bf16.msra.mxu0 0
    %1116 = vmatprep.subr.bf16.mxu0 0
    %1117 = vmatpush1.bf16.msra.mxu0 0
    %1118 = vmatprep.subr.bf16.mxu0 0
    %1119 = vmatpush1.bf16.msra.mxu0 0
    %1120 = vmatprep.subr.bf16.mxu0 0
    %1121 = vmatpush1.bf16.msra.mxu0 0
    %1122 = vmatprep.subr.bf16.mxu0 0
    %1123 = vmatpush1.bf16.msra.mxu0 0
    %1124 = vmatprep.subr.bf16.mxu0 0
    %1125 = vmatpush1.bf16.msra.mxu0 0
    %1126 = vmatprep.subr.bf16.mxu0 0
    %1127 = vmatpush1.bf16.msra.mxu0 %v1110
    %1128 = vmatprep.subr.bf16.mxu0 0
    %1129 = vmatpush2.bf16.msra.mxu0 0
    %1130 = vmatprep.subr.bf16.mxu0 0
    %1131 = vmatpush2.bf16.msra.mxu0 0
    %1132 = vmatprep.subr.bf16.mxu0 0
    %1133 = vmatpush2.bf16.msra.mxu0 0
    %1134 = vmatprep.subr.bf16.mxu0 0
    %1135 = vmatpush2.bf16.msra.mxu0 0
    %1136 = vmatprep.subr.bf16.mxu0 0
    %1137 = vmatpush2.bf16.msra.mxu0 0
    %1138 = vmatprep.subr.bf16.mxu0 0
    %1139 = vmatpush2.bf16.msra.mxu0 0
    %1140 = vmatprep.subr.bf16.mxu0 0
    %1141 = vmatpush2.bf16.msra.mxu0 0
    %1142 = vmatprep.subr.bf16.mxu0 0
    %1143 = vmatpush2.bf16.msra.mxu0 0
    %1144 = vmatprep.mubr.bf16.mxu0 0
    %1145 = vmatmul.mubr.bf16.gmra.mxu0 %v1107
    %v1146 = vpop.f32.mrf.mxu0
    %v1147 = vadd.f32 0.0, %v1146
    %v1148 = vpop.f32.mrf.mxu0
    %v1149 = vpop.f32.mrf.mxu0
    %v1150 = vpop.f32.mrf.mxu0
    %1151 = vdwg.mxu0
    %1152 = vrot.lane.b32.xlu0 %v158, 40
    %v1153 = vpop.permute.xlu0 %1152
    %v1155 = vsel %vm172, %v1103, 0
    %v1158 = vsel %vm297, %v1153, 0
    %1160 = vmatprep.subr.bf16.mxu0 0
    %1161 = vmatpush1.bf16.msra.mxu0 0
    %1162 = vmatprep.subr.bf16.mxu0 0
    %1163 = vmatpush1.bf16.msra.mxu0 0
    %1164 = vmatprep.subr.bf16.mxu0 0
    %1165 = vmatpush1.bf16.msra.mxu0 0
    %1166 = vmatprep.subr.bf16.mxu0 0
    %1167 = vmatpush1.bf16.msra.mxu0 0
    %1168 = vmatprep.subr.bf16.mxu0 0
    %1169 = vmatpush1.bf16.msra.mxu0 0
    %1170 = vmatprep.subr.bf16.mxu0 0
    %1171 = vmatpush1.bf16.msra.mxu0 0
    %1172 = vmatprep.subr.bf16.mxu0 0
    %1173 = vmatpush1.bf16.msra.mxu0 0
    %1174 = vmatprep.subr.bf16.mxu0 0
    %1175 = vmatpush1.bf16.msra.mxu0 %v1158
    %1176 = vmatprep.subr.bf16.mxu0 0
    %1177 = vmatpush2.bf16.msra.mxu0 0
    %1178 = vmatprep.subr.bf16.mxu0 0
    %1179 = vmatpush2.bf16.msra.mxu0 0
    %1180 = vmatprep.subr.bf16.mxu0 0
    %1181 = vmatpush2.bf16.msra.mxu0 0
    %1182 = vmatprep.subr.bf16.mxu0 0
    %1183 = vmatpush2.bf16.msra.mxu0 0
    %1184 = vmatprep.subr.bf16.mxu0 0
    %1185 = vmatpush2.bf16.msra.mxu0 0
    %1186 = vmatprep.subr.bf16.mxu0 0
    %1187 = vmatpush2.bf16.msra.mxu0 0
    %1188 = vmatprep.subr.bf16.mxu0 0
    %1189 = vmatpush2.bf16.msra.mxu0 0
    %1190 = vmatprep.subr.bf16.mxu0 0
    %1191 = vmatpush2.bf16.msra.mxu0 0
    %1192 = vmatprep.mubr.bf16.mxu0 0
    %1193 = vmatmul.mubr.bf16.gmra.mxu0 %v1155
    %v1194 = vpop.f32.mrf.mxu0
    %v1195 = vadd.f32 0.0, %v1194
    %v1196 = vpop.f32.mrf.mxu0
    %v1197 = vpop.f32.mrf.mxu0
    %v1198 = vpop.f32.mrf.mxu0
    %1199 = vdwg.mxu0
    %v1200 = vpack.c.bf16 %v1195, %v1147
    %v1201 = vpack.c.bf16 %v154, %v154
    %v1203 = vsel %vm172, %v1200, 0
    %v1206 = vsel %vm297, %v1201, 0
    %1208 = vmatprep.subr.bf16.mxu0 0
    %1209 = vmatpush1.bf16.msra.mxu0 0
    %1210 = vmatprep.subr.bf16.mxu0 0
    %1211 = vmatpush1.bf16.msra.mxu0 0
    %1212 = vmatprep.subr.bf16.mxu0 0
    %1213 = vmatpush1.bf16.msra.mxu0 0
    %1214 = vmatprep.subr.bf16.mxu0 0
    %1215 = vmatpush1.bf16.msra.mxu0 0
    %1216 = vmatprep.subr.bf16.mxu0 0
    %1217 = vmatpush1.bf16.msra.mxu0 0
    %1218 = vmatprep.subr.bf16.mxu0 0
    %1219 = vmatpush1.bf16.msra.mxu0 0
    %1220 = vmatprep.subr.bf16.mxu0 0
    %1221 = vmatpush1.bf16.msra.mxu0 0
    %1222 = vmatprep.subr.bf16.mxu0 0
    %1223 = vmatpush1.bf16.msra.mxu0 %v1206
    %1224 = vmatprep.subr.bf16.mxu0 0
    %1225 = vmatpush2.bf16.msra.mxu0 0
    %1226 = vmatprep.subr.bf16.mxu0 0
    %1227 = vmatpush2.bf16.msra.mxu0 0
    %1228 = vmatprep.subr.bf16.mxu0 0
    %1229 = vmatpush2.bf16.msra.mxu0 0
    %1230 = vmatprep.subr.bf16.mxu0 0
    %1231 = vmatpush2.bf16.msra.mxu0 0
    %1232 = vmatprep.subr.bf16.mxu0 0
    %1233 = vmatpush2.bf16.msra.mxu0 0
    %1234 = vmatprep.subr.bf16.mxu0 0
    %1235 = vmatpush2.bf16.msra.mxu0 0
    %1236 = vmatprep.subr.bf16.mxu0 0
    %1237 = vmatpush2.bf16.msra.mxu0 0
    %1238 = vmatprep.subr.bf16.mxu0 0
    %1239 = vmatpush2.bf16.msra.mxu0 0
    %1240 = vmatprep.mubr.bf16.mxu0 0
    %1241 = vmatmul.mubr.bf16.gmra.mxu0 %v1203
    %v1242 = vpop.f32.mrf.mxu0
    %v1243 = vadd.f32 0.0, %v1242
    %v1244 = vpop.f32.mrf.mxu0
    %v1245 = vpop.f32.mrf.mxu0
    %v1246 = vadd.f32 0.0, %v1245
    %v1247 = vpop.f32.mrf.mxu0
    %1248 = vdwg.mxu0
    %v1249 = vadd.f32 %v978, %v1243
    %v1250 = vadd.f32 %v979, %v1246
    %v1251 = vld [vmem:[%s5] sm:$0x1]
    %v1253 = vlaneseq
    %v1254 = vshrl.u32 %v1253, 7
    %v1255 = vsub.s32 0, %v1254
    %v1256 = vrot.slane %v1251, %v1255
    %v1258 = vadd.f32 %v1249, %v1256
    %v1259 = vadd.f32 %v1250, %v1256
    %v1260 = vadd.f32 %v1258, %v52
    %v1261 = vadd.f32 %v1259, %v53
    %v1262 = vld [vmem:[%s6] sm:$0x1]
    %v1263 = vld [vmem:[%s7] sm:$0x1]
    %v1264 = vsel %vm78, %v1260, 0.0
    %1265 = vadd.xlane.f32.xlu0 %v1264
    %v1266 = vpop.xlane.xlu0 %1265
    %v1267 = vsel %vm78, %v1261, 0.0
    %1268 = vadd.xlane.f32.xlu0 %v1267
    %v1269 = vpop.xlane.xlu0 %1268
    %v1270 = vrcp.pop 32.0
    %v1271 = vmul.f32 %v1266, %v1270
    %v1272 = vmul.f32 %v1269, %v1270
    %v1273 = vsub.f32 %v1260, %v1271
    %v1274 = vsub.f32 %v1261, %v1272
    %v1275 = vmul.f32 %v1273, %v1273
    %v1276 = vmul.f32 %v1274, %v1274
    %v1277 = vsel %vm78, %v1275, 0.0
    %1278 = vadd.xlane.f32.xlu0 %v1277
    %v1279 = vpop.xlane.xlu0 %1278
    %v1280 = vsel %vm78, %v1276, 0.0
    %1281 = vadd.xlane.f32.xlu0 %v1280
    %v1282 = vpop.xlane.xlu0 %1281
    %v1283 = vmul.f32 %v1279, %v1270
    %v1284 = vmul.f32 %v1282, %v1270
    %v1285 = vadd.f32 %v1283, 1e-05
    %v1286 = vadd.f32 %v1284, 1e-05
    %v1287 = vrsqrt.pop %v1285
    %v1288 = vrsqrt.pop %v1286
    %v1289 = vmul.f32 %v1273, %v1287
    %v1290 = vmul.f32 %v1274, %v1288
    %v1292 = vlaneseq
    %v1293 = vshrl.u32 %v1292, 7
    %v1294 = vsub.s32 0, %v1293
    %v1295 = vrot.slane %v1262, %v1294
    %v1297 = vmul.f32 %v1289, %v1295
    %v1298 = vmul.f32 %v1290, %v1295
    %v1300 = vlaneseq
    %v1301 = vshrl.u32 %v1300, 7
    %v1302 = vsub.s32 0, %v1301
    %v1303 = vrot.slane %v1263, %v1302
    %v1305 = vadd.f32 %v1297, %v1303
    %v1306 = vadd.f32 %v1298, %v1303
    %v1307 = vpack.c.bf16 %v1306, %v1305
    %v1308 = vld [vmem:[%s8] sm:$0xf]
    %v1309 = vld [vmem:[%s8 + $0x4] sm:$0xf]
    %v1310 = vld [vmem:[%s8 + $0x8] sm:$0xf]
    %v1311 = vld [vmem:[%s8 + $0xc] sm:$0xf]
    %v1312 = vld [vmem:[%s9] sm:$0x1]
    %v1314 = vlaneseq
    %v1315 = vshrl.u32 %v1314, 7
    %v1316 = vsub.s32 0, %v1315
    %v1317 = vrot.slane %v1312, %v1316
    %v1323 = vunpack.c.l.b16 %v1308
    %v1324 = vunpack.c.l.b16 %v1309
    %v1325 = vunpack.c.l.b16 %v1310
    %v1326 = vunpack.c.l.b16 %v1311
    %v1327 = vpack.c.b16 %v1324, %v1323
    %v1328 = vpack.c.b16 %v1326, %v1325
    %v1332 = vsel %vm78, %v1307, 0
    %1334 = vmatprep.subr.bf16.mxu0 0
    %1335 = vmatpush1.bf16.msra.mxu0 0
    %1336 = vmatprep.subr.bf16.mxu0 0
    %1337 = vmatpush1.bf16.msra.mxu0 0
    %1338 = vmatprep.subr.bf16.mxu0 0
    %1339 = vmatpush1.bf16.msra.mxu0 0
    %1340 = vmatprep.subr.bf16.mxu0 0
    %1341 = vmatpush1.bf16.msra.mxu0 0
    %1342 = vmatprep.subr.bf16.mxu0 0
    %1343 = vmatpush1.bf16.msra.mxu0 0
    %1344 = vmatprep.subr.bf16.mxu0 0
    %1345 = vmatpush1.bf16.msra.mxu0 0
    %1346 = vmatprep.subr.bf16.mxu0 0
    %1347 = vmatpush1.bf16.msra.mxu0 %v1328
    %1348 = vmatprep.subr.bf16.mxu0 0
    %1349 = vmatpush1.bf16.msra.mxu0 %v1327
    %1350 = vmatprep.subr.bf16.mxu0 0
    %1351 = vmatpush2.bf16.msra.mxu0 0
    %1352 = vmatprep.subr.bf16.mxu0 0
    %1353 = vmatpush2.bf16.msra.mxu0 0
    %1354 = vmatprep.subr.bf16.mxu0 0
    %1355 = vmatpush2.bf16.msra.mxu0 0
    %1356 = vmatprep.subr.bf16.mxu0 0
    %1357 = vmatpush2.bf16.msra.mxu0 0
    %1358 = vmatprep.subr.bf16.mxu0 0
    %1359 = vmatpush2.bf16.msra.mxu0 0
    %1360 = vmatprep.subr.bf16.mxu0 0
    %1361 = vmatpush2.bf16.msra.mxu0 0
    %1362 = vmatprep.subr.bf16.mxu0 0
    %1363 = vmatpush2.bf16.msra.mxu0 0
    %1364 = vmatprep.subr.bf16.mxu0 0
    %1365 = vmatpush2.bf16.msra.mxu0 0
    %1366 = vmatprep.mubr.bf16.mxu0 0
    %1367 = vmatmul.mubr.bf16.gmra.mxu0 %v1332
    %v1368 = vpop.f32.mrf.mxu0
    %v1369 = vadd.f32 %v1317, %v1368
    %v1370 = vpop.f32.mrf.mxu0
    %v1371 = vpop.f32.mrf.mxu0
    %v1372 = vadd.f32 %v1317, %v1371
    %v1373 = vpop.f32.mrf.mxu0
    %1374 = vdwg.mxu0
    %v1375 = vmul.f32 %v1369, %v1369
    %v1376 = vmul.f32 %v1372, %v1372
    %v1377 = vmul.f32 %v1369, %v1375
    %v1378 = vmul.f32 %v1372, %v1376
    %v1379 = vmul.f32 %v1377, 0.044715
    %v1380 = vmul.f32 %v1378, 0.044715
    %v1381 = vadd.f32 %v1369, %v1379
    %v1382 = vadd.f32 %v1372, %v1380
    %v1383 = vmul.f32 %v1381, 0.7978846
    %v1384 = vmul.f32 %v1382, 0.7978846
    %v1385 = vtanh.pop %v1383
    %v1386 = vtanh.pop %v1384
    %v1387 = vadd.f32 %v1385, 1.0
    %v1388 = vadd.f32 %v1386, 1.0
    %v1389 = vmul.f32 %v1387, 0.5
    %v1390 = vmul.f32 %v1388, 0.5
    %v1391 = vmul.f32 %v1369, %v1389
    %v1392 = vmul.f32 %v1372, %v1390
    %v1393 = vpack.c.bf16 %v1392, %v1391
    %v1394 = vld [vmem:[%s10] sm:$0xf]
    %v1395 = vld [vmem:[%s10 + $0x4] sm:$0xf]
    %v1396 = vld [vmem:[%s10 + $0x8] sm:$0xf]
    %v1397 = vld [vmem:[%s10 + $0xc] sm:$0xf]
    %v1398 = vld [vmem:[%s10 + $0x10] sm:$0xf]
    %v1399 = vld [vmem:[%s10 + $0x14] sm:$0xf]
    %v1400 = vld [vmem:[%s10 + $0x18] sm:$0xf]
    %v1401 = vld [vmem:[%s10 + $0x1c] sm:$0xf]
    %v1402 = vld [vmem:[%s11] sm:$0x1]
    %v1404 = vlaneseq
    %v1405 = vshrl.u32 %v1404, 7
    %v1406 = vsub.s32 0, %v1405
    %v1407 = vrot.slane %v1402, %v1406
    %v1417 = vunpack.c.l.b16 %v1394
    %v1418 = vunpack.c.l.b16 %v1395
    %v1419 = vunpack.c.l.b16 %v1396
    %v1420 = vunpack.c.l.b16 %v1397
    %v1421 = vunpack.c.l.b16 %v1398
    %v1422 = vunpack.c.l.b16 %v1399
    %v1423 = vunpack.c.l.b16 %v1400
    %v1424 = vunpack.c.l.b16 %v1401
    %v1425 = vpack.c.b16 %v1418, %v1417
    %v1426 = vpack.c.b16 %v1420, %v1419
    %v1427 = vpack.c.b16 %v1422, %v1421
    %v1428 = vpack.c.b16 %v1424, %v1423
    %vm1433 = vcmask 523264
    %v1435 = vsel %vm1433, %v1393, 0
    %1437 = vmatprep.subr.bf16.mxu0 0
    %1438 = vmatpush1.bf16.msra.mxu0 0
    %1439 = vmatprep.subr.bf16.mxu0 0
    %1440 = vmatpush1.bf16.msra.mxu0 0
    %1441 = vmatprep.subr.bf16.mxu0 0
    %1442 = vmatpush1.bf16.msra.mxu0 0
    %1443 = vmatprep.subr.bf16.mxu0 0
    %1444 = vmatpush1.bf16.msra.mxu0 0
    %1445 = vmatprep.subr.bf16.mxu0 0
    %1446 = vmatpush1.bf16.msra.mxu0 %v1428
    %1447 = vmatprep.subr.bf16.mxu0 0
    %1448 = vmatpush1.bf16.msra.mxu0 %v1427
    %1449 = vmatprep.subr.bf16.mxu0 0
    %1450 = vmatpush1.bf16.msra.mxu0 %v1426
    %1451 = vmatprep.subr.bf16.mxu0 0
    %1452 = vmatpush1.bf16.msra.mxu0 %v1425
    %1453 = vmatprep.subr.bf16.mxu0 0
    %1454 = vmatpush2.bf16.msra.mxu0 0
    %1455 = vmatprep.subr.bf16.mxu0 0
    %1456 = vmatpush2.bf16.msra.mxu0 0
    %1457 = vmatprep.subr.bf16.mxu0 0
    %1458 = vmatpush2.bf16.msra.mxu0 0
    %1459 = vmatprep.subr.bf16.mxu0 0
    %1460 = vmatpush2.bf16.msra.mxu0 0
    %1461 = vmatprep.subr.bf16.mxu0 0
    %1462 = vmatpush2.bf16.msra.mxu0 0
    %1463 = vmatprep.subr.bf16.mxu0 0
    %1464 = vmatpush2.bf16.msra.mxu0 0
    %1465 = vmatprep.subr.bf16.mxu0 0
    %1466 = vmatpush2.bf16.msra.mxu0 0
    %1467 = vmatprep.subr.bf16.mxu0 0
    %1468 = vmatpush2.bf16.msra.mxu0 0
    %1469 = vmatprep.mubr.bf16.mxu0 0
    %1470 = vmatmul.mubr.bf16.gmra.mxu0 %v1435
    %v1471 = vpop.f32.mrf.mxu0
    %v1472 = vadd.f32 %v1407, %v1471
    %v1473 = vpop.f32.mrf.mxu0
    %v1474 = vpop.f32.mrf.mxu0
    %v1475 = vadd.f32 %v1407, %v1474
    %v1476 = vpop.f32.mrf.mxu0
    %1477 = vdwg.mxu0
    %v1478 = vadd.f32 %v1472, %v1305
    %v1479 = vadd.f32 %v1475, %v1306
    %v1480 = vld [vmem:[%s12] sm:$0x1]
    %v1481 = vld [vmem:[%s13] sm:$0x1]
    %v1482 = vsel %vm78, %v1478, 0.0
    %1483 = vadd.xlane.f32.xlu0 %v1482
    %v1484 = vpop.xlane.xlu0 %1483
    %v1485 = vsel %vm78, %v1479, 0.0
    %1486 = vadd.xlane.f32.xlu0 %v1485
    %v1487 = vpop.xlane.xlu0 %1486
    %v1488 = vmul.f32 %v1484, %v1270
    %v1489 = vmul.f32 %v1487, %v1270
    %v1490 = vsub.f32 %v1478, %v1488
    %v1491 = vsub.f32 %v1479, %v1489
    %v1492 = vmul.f32 %v1490, %v1490
    %v1493 = vmul.f32 %v1491, %v1491
    %v1494 = vsel %vm78, %v1492, 0.0
    %1495 = vadd.xlane.f32.xlu0 %v1494
    %v1496 = vpop.xlane.xlu0 %1495
    %v1497 = vsel %vm78, %v1493, 0.0
    %1498 = vadd.xlane.f32.xlu0 %v1497
    %v1499 = vpop.xlane.xlu0 %1498
    %v1500 = vmul.f32 %v1496, %v1270
    %v1501 = vmul.f32 %v1499, %v1270
    %v1502 = vadd.f32 %v1500, 1e-05
    %v1503 = vadd.f32 %v1501, 1e-05
    %v1504 = vrsqrt.pop %v1502
    %v1505 = vrsqrt.pop %v1503
    %v1506 = vmul.f32 %v1490, %v1504
    %v1507 = vmul.f32 %v1491, %v1505
    %v1509 = vlaneseq
    %v1510 = vshrl.u32 %v1509, 7
    %v1511 = vsub.s32 0, %v1510
    %v1512 = vrot.slane %v1480, %v1511
    %v1514 = vmul.f32 %v1506, %v1512
    %v1515 = vmul.f32 %v1507, %v1512
    %v1517 = vlaneseq
    %v1518 = vshrl.u32 %v1517, 7
    %v1519 = vsub.s32 0, %v1518
    %v1520 = vrot.slane %v1481, %v1519
    %v1522 = vadd.f32 %v1514, %v1520
    %v1523 = vadd.f32 %v1515, %v1520
    %1524 = vst.msk [vmem:[#allocation2] sm:$0xff] %vm78, %v1522
    %1525 = vst.msk [vmem:[#allocation2 + $0x8] sm:$0xff] %vm78, %v1523
    %vm1526 = vcmp.ge.f32.partialorder %v1522, 0.0
    %v1527 = vmul.f32 %v1522, 0.2
    %v1528 = vsel %vm1526, %v1522, %v1527
    %vm1529 = vcmask 253952
    %1530 = vst.msk [vmem:[#allocation4] sm:$0x1] %vm1529, %v1528
    %vm1531 = vcmp.ge.f32.partialorder %v1523, 0.0
    %v1532 = vmul.f32 %v1523, 0.2
    %v1533 = vsel %vm1531, %v1523, %v1532
    %1534 = vst.msk [vmem:[#allocation4 + $0x1] sm:$0x1] %vm1529, %v1533
    // Predicated region
    $region58: #{roberta_forward.5} parent=1 // pred_check
      _
    $region59: #{roberta_forward.5} parent=1 // pred_check_branch
      %1536 = sbr.rel (0) target = $region61
    $region60: #{roberta_forward.5} parent=1 // pred_region
      %s1538 = ssub.s32 256, 256
      %1539 = vsyncadd [#allocation3], %s1538
      %s1540 = sshll.u32 [#allocation2], 4
      %s1541 = int_to_ptr.vmem [resolvable:$true] %s1540
      %1546 = dma.vmem_to_hbm [thread:$0]  %s1541, 256, %s14, [#allocation3], 128, 128, 8
    $region61: #{roberta_forward.5} parent=1 // pred_fallthru
      _
    // Predicated region
    $region62: #{roberta_forward.5} parent=1 // pred_check
      _
    $region63: #{roberta_forward.5} parent=1 // pred_check_branch
      %1548 = sbr.rel (0) target = $region65
    $region64: #{roberta_forward.5} parent=1 // pred_region
      %s1550 = ssub.s32 32, 32
      %1551 = vsyncadd [#allocation5], %s1550
      %s1553 = sshll.u32 [#allocation4], 4
      %s1554 = int_to_ptr.vmem [resolvable:$true] %s1553
      %1556 = dma.vmem_to_hbm [thread:$0]  %s1554, 32, %s15, [#allocation5]
    $region65: #{roberta_forward.5} parent=1 // pred_fallthru
      _
    // Predicated region
    $region66: #{roberta_forward.5} parent=1 // pred_check
      _
    $region67: #{roberta_forward.5} parent=1 // pred_check_branch
      %1558 = sbr.rel (0) target = $region69
    $region68: #{roberta_forward.5} parent=1 // pred_region
      %1559 = dma.done [#allocation3], 256
    $region69: #{roberta_forward.5} parent=1 // pred_fallthru
      _
    // Predicated region
    $region70: #{roberta_forward.5} parent=1 // pred_check
      _
    $region71: #{roberta_forward.5} parent=1 // pred_check_branch
      %1561 = sbr.rel (0) target = $region73
    $region72: #{roberta_forward.5} parent=1 // pred_region
      %1562 = dma.done [#allocation5], 32
    $region73: #{roberta_forward.5} parent=1 // pred_fallthru
      _
    %1563 = vsyncpa [#allocation3], 1
    %1564 = vsyncpa [#allocation5], 1

</llo_original>
